<compile_context>
chip_gen: v5e
topology: v5e:2x2
jax: 0.10.0
libtpu: 0.0.40
codegen_flags: <defaults>
</compile_context>

<pallas_src>
import math
import functools

import jax
import jax.numpy as jnp
import numpy as np
from jax.experimental import pallas as pl
from jax.experimental.pallas import tpu as pltpu


# ----------------------------------------------------------------------------
# Helpers
# ----------------------------------------------------------------------------
def _elu(h):
    # F.elu (alpha=1): x if x > 0 else exp(x) - 1
    return jnp.where(h > 0, h, jnp.exp(jnp.minimum(h, 0.0)) - 1.0)


def _batch_grid_default():
    """Shard the batch over grid steps only when >1 TensorCore can take them."""
    try:
        kind = jax.devices()[0].device_kind.lower()
    except Exception:
        return False
    single_tc = any(t in kind for t in ("lite", "v5e", "v6e", "v6"))
    multi_tc = any(t in kind for t in ("v4", "v5p", "v7"))
    # Mis-detection only affects perf, never correctness.
    return multi_tc and not single_tc


# ----------------------------------------------------------------------------
# Fused AttentionLayer kernel (one grid step == `bpb` batch elements)
# ----------------------------------------------------------------------------
def _attention_layer_kernel(x_ref, adj_ref, frow_ref, wqkv_ref, mc_ref, mlp_ref,
                            xout_ref, aout_ref, *,
                            bpb, num_heads, n_channels, din, attn_dim, v_dim,
                            hidden_dim, hidden_pad, adj_out_dim, scale,
                            mc_b1_row, mc_w2_row, mc_b2_row):
    f32 = jnp.float32
    N = adj_ref.shape[-1]
    dqkv = 2 * attn_dim + v_dim
    ds_ = attn_dim // num_heads
    HN = num_heads * N

    # ---- constants (VPU, once per grid step) -------------------------------
    rows = jax.lax.broadcasted_iota(jnp.int32, (N, N), 0)
    cols = jax.lax.broadcasted_iota(jnp.int32, (N, N), 1)
    eye_b = rows == cols
    eye = eye_b.astype(f32)

    # P (HN, N): stacked identities, P[h*N + j, j] = 1  (built without integer
    # div/mod: H unrolled equality compares).
    pr = jax.lax.broadcasted_iota(jnp.int32, (HN, N), 0)
    pc = jax.lax.broadcasted_iota(jnp.int32, (HN, N), 1)
    p_sel = None
    for h in range(num_heads):
        eq = pr == (pc + h * N)
        p_sel = eq if p_sel is None else (p_sel | eq)
    p_sel = p_sel.astype(f32)

    # block-diagonal head mask (HN, Da): row block h keeps head-h feature lanes.
    mr = jax.lax.broadcasted_iota(jnp.int32, (HN, attn_dim), 0)
    mcol = jax.lax.broadcasted_iota(jnp.int32, (HN, attn_dim), 1)
    head_mask = None
    for h in range(num_heads):
        blk = ((mr >= h * N) & (mr < (h + 1) * N) &
               (mcol >= h * ds_) & (mcol < (h + 1) * ds_))
        head_mask = blk if head_mask is None else (head_mask | blk)
    head_mask = head_mask.astype(f32)

    def _t(m):  # transpose via identity matmul (exact for bf16-representable data)
        return jax.lax.dot_general(eye, m, (((1,), (1,)), ((), ())),
                                   preferred_element_type=f32)

    def _t_f32(m):
        # ~f32-accurate transpose: bf16 hi/lo split so the DEFAULT-precision MXU
        # pass does not truncate the data (review correctness note).
        hi = m.astype(jnp.bfloat16).astype(f32)
        return _t(hi) + _t(m - hi)

    # packed multi_channel MLP weights (lane width = hidden_pad)
    mc_b1 = mc_ref[mc_b1_row:mc_b1_row + 1, :]
    mc_w2 = mc_ref[mc_w2_row:mc_w2_row + hidden_pad, :]
    mc_b2 = mc_ref[mc_b2_row:mc_b2_row + 1, :]

    # adjacency-MLP scalar offsets in the flat SMEM buffer
    n_feat = 2 * n_channels
    off_b1 = n_feat * hidden_dim
    off_w2 = off_b1 + hidden_dim
    off_b2 = off_w2 + hidden_dim * adj_out_dim

    for b in range(bpb):
        frow = frow_ref[b]                                   # (1, N)
        # column form of the flags without a dedicated input stream
        fcol = jnp.sum(eye * frow, axis=-1, keepdims=True)   # (N, 1)
        x_b = x_ref[b]                                       # (N, Din)

        a_feats, adj_feats = [], []
        h1_acc = None
        for c in range(n_channels):
            adj_c = adj_ref[b, c]                            # raw adjacency
            adj_feats.append(adj_c)

            # --- DenseGCNConv: self loops + symmetric normalization, fused ----
            adj_loop = jnp.where(eye_b, 1.0, adj_c)
            deg = jnp.sum(adj_loop, axis=-1, keepdims=True)  # XLU lane reduce
            dinv = jax.lax.rsqrt(jnp.maximum(deg, 1.0))      # EUP, (N,1)
            wb = wqkv_ref[c]                                 # (Din+1, dqkv)
            xw = jnp.dot(x_b, wb[:din, :], preferred_element_type=f32)
            qkv = dinv * jnp.dot(adj_loop, dinv * xw,
                                 preferred_element_type=f32) + wb[din:din + 1, :]

            # --- all head scores in ONE matmul, ONE tanh per channel ---------
            q = qkv[:, :attn_dim]                            # prefix slice (free)
            k = qkv[:, attn_dim:2 * attn_dim]
            k_tiled = jnp.dot(p_sel, k, preferred_element_type=f32) * head_mask
            s = jax.lax.dot_general(q, k_tiled, (((1,), (1,)), ((), ())),
                                    preferred_element_type=f32)
            s = jnp.tanh(s * scale)                          # (N, H*N)
            acc = jnp.dot(s, p_sel, preferred_element_type=f32)   # head sum
            a_feats.append((acc + _t_f32(acc)) * (0.5 / num_heads))

            # --- multi_channel layer-1: zero rows in the packed weight pick the
            #     V columns of qkv, so V is never lane-sliced out --------------
            w1_c = mc_ref[c * dqkv:(c + 1) * dqkv, :]        # (dqkv, hidden_pad)
            contrib = jnp.dot(qkv, w1_c, preferred_element_type=f32)
            h1_acc = contrib if h1_acc is None else h1_acc + contrib

        # ---- node output: multi_channel MLP -> flag mask -> tanh ------------
        h1 = _elu(h1_acc + mc_b1)
        mc_out = jnp.dot(h1, mc_w2, preferred_element_type=f32) + mc_b2
        xout_ref[b] = jnp.tanh(mc_out[:, :v_dim] * fcol)

        # ---- adjacency MLP (2C -> hidden -> Do), streamed over hidden units,
        #      fused with output permute, symmetrization and flag masking -----
        feats = a_feats + adj_feats                          # [A_c..., adj_c...]
        mo = [jnp.zeros((N, N), f32) for _ in range(adj_out_dim)]
        for j in range(hidden_dim):
            hj = feats[0] * mlp_ref[0 * hidden_dim + j]
            for i in range(1, n_feat):
                hj = hj + feats[i] * mlp_ref[i * hidden_dim + j]
            hj = _elu(hj + mlp_ref[off_b1 + j])
            for o in range(adj_out_dim):
                mo[o] = mo[o] + hj * mlp_ref[off_w2 + j * adj_out_dim + o]
        mask2d = fcol * frow                                 # flag outer product
        for o in range(adj_out_dim):
            m = mo[o] + mlp_ref[off_b2 + o]
            aout_ref[b, o] = (m + _t_f32(m)) * mask2d


# ----------------------------------------------------------------------------
# One-time parameter packing (NOT per forward call)
# ----------------------------------------------------------------------------
def prepare_params(params, num_heads=4):
    C, Din, Da = params['wq'].shape
    Dv = params['wv'].shape[-1]
    assert Da % num_heads == 0
    dqkv = 2 * Da + Dv
    hidden = params['mc_w1'].shape[-1]
    Do = params['mlp_w2'].shape[-1]
    LW = max(hidden, Dv)                       # lane width of the mc buffer

    # (C, Din+1, dqkv): rows 0..Din-1 = [Wq|Wk|Wv], row Din = [bq|bk|bv]
    w = jnp.concatenate([params['wq'], params['wk'], params['wv']], axis=-1)
    b = jnp.concatenate([params['bq'], params['bk'], params['bv']], axis=-1)
    wqkv = jnp.concatenate([w, b], axis=1).astype(jnp.float32)

    # multi_channel MLP packed into one (rows, LW) buffer.  Layer-1 weight is
    # lifted from (C*Dv, hidden) to (C*dqkv, LW): rows for the Q/K part of qkv
    # and lanes beyond `hidden` are zero, so the kernel feeds qkv straight in.
    w1 = jnp.zeros((C, dqkv, LW), jnp.float32)
    w1 = w1.at[:, 2 * Da:2 * Da + Dv, :hidden].set(
        params['mc_w1'].reshape(C, Dv, hidden))
    w1 = w1.reshape(C * dqkv, LW)
    b1 = jnp.zeros((1, LW), jnp.float32).at[:, :hidden].set(params['mc_b1'])
    w2 = jnp.zeros((LW, LW), jnp.float32).at[:hidden, :Dv].set(params['mc_w2'])
    b2 = jnp.zeros((1, LW), jnp.float32).at[:, :Dv].set(params['mc_b2'])
    mc_b1_row = C * dqkv
    mc_w2_row = mc_b1_row + 8                  # keep w2 sublane-tile aligned
    mc_b2_row = mc_w2_row + LW
    mc = jnp.concatenate(
        [w1, b1, jnp.zeros((mc_w2_row - mc_b1_row - 1, LW), jnp.float32),
         w2, b2], axis=0)

    # adjacency MLP: 48-ish scalars, flat 1-D SMEM buffer (avoids 2-D padding).
    mlp = jnp.concatenate([params['mlp_w1'].reshape(-1),
                           params['mlp_b1'].reshape(-1),
                           params['mlp_w2'].reshape(-1),
                           params['mlp_b2'].reshape(-1)]).astype(jnp.float32)

    meta = dict(num_heads=num_heads, n_channels=C, din=Din, attn_dim=Da,
                v_dim=Dv, hidden_dim=hidden, hidden_pad=LW, adj_out_dim=Do,
                scale=1.0 / math.sqrt(Dv),
                mc_b1_row=mc_b1_row, mc_w2_row=mc_w2_row, mc_b2_row=mc_b2_row)
    return dict(wqkv=wqkv, mc=mc, mlp=mlp, meta=meta)


# ----------------------------------------------------------------------------
# Forward wrapper
# ----------------------------------------------------------------------------
def attention_layer_forward(packed, x, adj, flags, batch_grid=None):
    """AttentionLayer.forward.  x:(B,N,Fin)  adj:(B,C,N,N)  flags:(B,N)."""
    meta = packed['meta']
    B, C, N, _ = adj.shape
    Din = x.shape[-1]
    Da, Dv, Do = meta['attn_dim'], meta['v_dim'], meta['adj_out_dim']
    hd, hp, H = meta['hidden_dim'], meta['hidden_pad'], meta['num_heads']
    dqkv = 2 * Da + Dv
    assert C == meta['n_channels'] and Din == meta['din']

    if batch_grid is None:
        batch_grid = _batch_grid_default()
    bpb = 1 if (batch_grid and B > 1) else B        # batch elements per step
    grid = (B // bpb,)

    flags_row = flags.reshape(B, 1, N).astype(jnp.float32)
    wqkv, mc, mlp = packed['wqkv'], packed['mc'], packed['mlp']

    kernel = functools.partial(_attention_layer_kernel, bpb=bpb, **meta)

    # rough advisory cost estimate (helps XLA schedule around a tiny call)
    per_c = (2 * N * Din * dqkv + 2 * N * N * dqkv + 2 * H * N * N * Da
             + 2 * N * Da * H * N + 2 * N * H * N * N + 2 * N * dqkv * hp
             + 4 * N * N * N)
    flops = B * (C * per_c + 2 * N * hp * hp
                 + 2 * (2 * C * hd + hd * Do) * N * N + 4 * Do * N * N * N)
    transc = B * (C * (H * N * N + N) + N * hp + hd * N * N + N * Dv)
    bytes_acc = 4 * (x.size + adj.size + flags.size + wqkv.size + mc.size
                     + mlp.size + B * N * Dv + B * Do * N * N)

    x_out, adj_out = pl.pallas_call(
        kernel,
        grid=grid,
        in_specs=[
            pl.BlockSpec((bpb, N, Din), lambda g: (g, 0, 0)),        # x
            pl.BlockSpec((bpb, C, N, N), lambda g: (g, 0, 0, 0)),    # raw adj
            pl.BlockSpec((bpb, 1, N), lambda g: (g, 0, 0)),          # flags (row)
            pl.BlockSpec(tuple(wqkv.shape), lambda g: (0, 0, 0)),    # packed QKV W+b
            pl.BlockSpec(tuple(mc.shape), lambda g: (0, 0)),         # packed mc MLP
            pl.BlockSpec(memory_space=pltpu.MemorySpace.SMEM),       # adj-MLP scalars
        ],
        out_specs=(
            pl.BlockSpec((bpb, N, Dv), lambda g: (g, 0, 0)),
            pl.BlockSpec((bpb, Do, N, N), lambda g: (g, 0, 0, 0)),
        ),
        out_shape=(
            jax.ShapeDtypeStruct((B, N, Dv), jnp.float32),
            jax.ShapeDtypeStruct((B, Do, N, N), jnp.float32),
        ),
        compiler_params=pltpu.CompilerParams(
            dimension_semantics=("parallel",) if bpb == 1 else ("arbitrary",)),
        cost_estimate=pl.CostEstimate(flops=int(flops),
                                      transcendentals=int(transc),
                                      bytes_accessed=int(bytes_acc)),
    )(x.astype(jnp.float32), adj.astype(jnp.float32), flags_row, wqkv, mc, mlp)
    return x_out, adj_out


# ----------------------------------------------------------------------------
# Pure-JAX reference (for verification)
# ----------------------------------------------------------------------------
def _ref_gcn(x, adj, w, b):
    N = adj.shape[-1]
    eye = jnp.eye(N, dtype=bool)
    adjl = jnp.where(eye, 1.0, adj)
    deg = adjl.sum(-1)
    dinv = jnp.maximum(deg, 1.0) ** -0.5
    adjn = dinv[..., :, None] * adjl * dinv[..., None, :]
    return jnp.einsum('bij,bjf->bif', adjn, x @ w) + b.reshape(1, 1, -1)


def reference_forward(params, x, adj, flags, num_heads):
    B, C, N, _ = adj.shape
    x_list, mask_list = [], []
    for c in range(C):
        adj_c = adj[:, c]
        Q = _ref_gcn(x, adj_c, params['wq'][c], params['bq'][c])
        K = _ref_gcn(x, adj_c, params['wk'][c], params['bk'][c])
        V = _ref_gcn(x, adj_c, params['wv'][c], params['bv'][c])
        Qh = jnp.stack(jnp.split(Q, num_heads, axis=-1), 0)
        Kh = jnp.stack(jnp.split(K, num_heads, axis=-1), 0)
        scores = jnp.einsum('hbnd,hbmd->hbnm', Qh, Kh) / math.sqrt(V.shape[-1])
        A = jnp.tanh(scores).mean(0)
        A = (A + jnp.swapaxes(A, -1, -2)) / 2.0
        x_list.append(V)
        mask_list.append(A[..., None])
    x_cat = jnp.concatenate(x_list, -1)
    h = _elu(x_cat @ params['mc_w1'] + params['mc_b1'])
    mc = h @ params['mc_w2'] + params['mc_b2']
    x_out = jnp.tanh(mc * flags[:, :, None])

    mlp_in = jnp.concatenate(mask_list + [jnp.transpose(adj, (0, 2, 3, 1))], -1)
    h2 = _elu(mlp_in @ params['mlp_w1'] + params['mlp_b1'])
    mo = h2 @ params['mlp_w2'] + params['mlp_b2']
    adj_out = jnp.transpose(mo, (0, 3, 1, 2))
    adj_out = adj_out + jnp.swapaxes(adj_out, -1, -2)
    adj_out = adj_out * flags[:, None, :, None] * flags[:, None, None, :]
    return x_out, adj_out


# ----------------------------------------------------------------------------
# Main
# ----------------------------------------------------------------------------
if __name__ == "__main__":
    # AttentionLayer(num_linears=2, conv_input_dim=4, attn_dim=16,
    #                conv_output_dim=8, input_dim=3, output_dim=2, num_heads=4)
    B, N = 2, 16
    conv_input_dim, attn_dim, conv_output_dim = 4, 16, 8
    input_dim, output_dim = 3, 2          # adjacency channels in / out
    num_heads = 4
    hidden_dim = 2 * max(input_dim, output_dim)
    # TODO(synk): num_linears is fixed to 2 (matches the fused 2-layer MLP path).

    key = jax.random.PRNGKey(0)
    ks = jax.random.split(key, 16)

    def glorot(k, shape):
        stdv = math.sqrt(6.0 / (shape[-2] + shape[-1]))
        return jax.random.uniform(k, shape, jnp.float32, -stdv, stdv)

    def linear_init(kw, kb, fan_in, fan_out):
        bound = 1.0 / math.sqrt(fan_in)
        w = jax.random.uniform(kw, (fan_in, fan_out), jnp.float32, -bound, bound)
        b = jax.random.uniform(kb, (1, fan_out), jnp.float32, -bound, bound)
        return w, b

    params = {
        'wq': glorot(ks[0], (input_dim, conv_input_dim, attn_dim)),
        'bq': jnp.zeros((input_dim, 1, attn_dim), jnp.float32),
        'wk': glorot(ks[1], (input_dim, conv_input_dim, attn_dim)),
        'bk': jnp.zeros((input_dim, 1, attn_dim), jnp.float32),
        'wv': glorot(ks[2], (input_dim, conv_input_dim, conv_output_dim)),
        'bv': jnp.zeros((input_dim, 1, conv_output_dim), jnp.float32),
    }
    params['mc_w1'], params['mc_b1'] = linear_init(
        ks[3], ks[4], input_dim * conv_output_dim, hidden_dim)
    params['mc_w2'], params['mc_b2'] = linear_init(
        ks[5], ks[6], hidden_dim, conv_output_dim)
    params['mlp_w1'], params['mlp_b1'] = linear_init(
        ks[7], ks[8], 2 * input_dim, hidden_dim)
    params['mlp_w2'], params['mlp_b2'] = linear_init(
        ks[9], ks[10], hidden_dim, output_dim)

    x = jax.random.normal(ks[11], (B, N, conv_input_dim), jnp.float32)
    a_raw = jax.random.uniform(ks[12], (B, input_dim, N, N), jnp.float32)
    adj = (a_raw + jnp.swapaxes(a_raw, -1, -2)) / 2.0
    adj = adj * (1.0 - jnp.eye(N, dtype=jnp.float32))      # no self-loops in input
    flags = jnp.ones((B, N), jnp.float32).at[:, N - 3:].set(0.0)

    packed = prepare_params(params, num_heads=num_heads)   # one-time packing
    x_out, adj_out = attention_layer_forward(packed, x, adj, flags)
    jax.block_until_ready((x_out, adj_out))

    x_ref, adj_ref = reference_forward(params, x, adj, flags, num_heads)
    # Tolerance covers DEFAULT-precision (bf16-operand, f32-accumulate) MXU math
    # on the GCN / attention / MLP path.
    np.testing.assert_allclose(np.asarray(x_out), np.asarray(x_ref),
                               atol=2e-2, rtol=2e-2)
    np.testing.assert_allclose(np.asarray(adj_out), np.asarray(adj_ref),
                               atol=2e-2, rtol=2e-2)

    print("KERNEL_OK")
</pallas_src>

<mosaic_0001>
module attributes {stable_mosaic.version = 11 : i64} {
  func.func @_attention_layer_kernel(%arg0: i32, %arg1: memref<2x16x4xf32, #tpu.memory_space<vmem>>, %arg2: memref<2x3x16x16xf32, #tpu.memory_space<vmem>>, %arg3: memref<2x1x16xf32, #tpu.memory_space<vmem>>, %arg4: memref<3x5x40xf32, #tpu.memory_space<vmem>>, %arg5: memref<137x8xf32, #tpu.memory_space<vmem>>, %arg6: memref<56xf32, #tpu.memory_space<smem>>, %arg7: memref<2x16x8xf32, #tpu.memory_space<vmem>>, %arg8: memref<2x2x16x16xf32, #tpu.memory_space<vmem>>) attributes {dimension_semantics = [#tpu.dimension_semantics<arbitrary>], iteration_bounds = array<i64: 1>, scalar_prefetch = 0 : i64, scratch_operands = 0 : i64, tpu.core_type = #tpu.core_type<tc>, window_params = [{transform_indices = @transform_0, window_bounds = array<i64: 2, 16, 4>}, {transform_indices = @transform_1, window_bounds = array<i64: 2, 3, 16, 16>}, {transform_indices = @transform_2, window_bounds = array<i64: 2, 1, 16>}, {pipeline_mode = #tpu.pipeline_mode<synchronous>, transform_indices = @transform_3, window_bounds = array<i64: 3, 5, 40>}, {pipeline_mode = #tpu.pipeline_mode<synchronous>, transform_indices = @transform_4, window_bounds = array<i64: 137, 8>}, {transform_indices = @transform_5, window_bounds = array<i64: 56>}, {transform_indices = @transform_6, window_bounds = array<i64: 2, 16, 8>}, {transform_indices = @transform_7, window_bounds = array<i64: 2, 2, 16, 16>}]} {
    %0 = tpu.iota {dimensions = array<i32: 0>} : vector<16x16xi32>
    %1 = tpu.iota {dimensions = array<i32: 1>} : vector<16x16xi32>
    %2 = arith.cmpi eq, %0, %1 : vector<16x16xi32>
    %3 = arith.extui %2 : vector<16x16xi1> to vector<16x16xi32>
    %4 = arith.sitofp %3 : vector<16x16xi32> to vector<16x16xf32>
    %5 = tpu.iota {dimensions = array<i32: 0>} : vector<64x16xi32>
    %6 = tpu.iota {dimensions = array<i32: 1>} : vector<64x16xi32>
    %c0_i32 = arith.constant 0 : i32
    %7 = vector.broadcast %c0_i32 : i32 to vector<64x16xi32>
    %8 = arith.addi %6, %7 : vector<64x16xi32>
    %9 = arith.cmpi eq, %5, %8 : vector<64x16xi32>
    %c16_i32 = arith.constant 16 : i32
    %10 = vector.broadcast %c16_i32 : i32 to vector<64x16xi32>
    %11 = arith.addi %6, %10 : vector<64x16xi32>
    %12 = arith.cmpi eq, %5, %11 : vector<64x16xi32>
    %13 = arith.ori %9, %12 : vector<64x16xi1>
    %c32_i32 = arith.constant 32 : i32
    %14 = vector.broadcast %c32_i32 : i32 to vector<64x16xi32>
    %15 = arith.addi %6, %14 : vector<64x16xi32>
    %16 = arith.cmpi eq, %5, %15 : vector<64x16xi32>
    %17 = arith.ori %13, %16 : vector<64x16xi1>
    %c48_i32 = arith.constant 48 : i32
    %18 = vector.broadcast %c48_i32 : i32 to vector<64x16xi32>
    %19 = arith.addi %6, %18 : vector<64x16xi32>
    %20 = arith.cmpi eq, %5, %19 : vector<64x16xi32>
    %21 = arith.ori %17, %20 : vector<64x16xi1>
    %22 = arith.extui %21 : vector<64x16xi1> to vector<64x16xi32>
    %23 = arith.sitofp %22 : vector<64x16xi32> to vector<64x16xf32>
    %24 = tpu.iota {dimensions = array<i32: 0>} : vector<64x16xi32>
    %25 = tpu.iota {dimensions = array<i32: 1>} : vector<64x16xi32>
    %c0_i32_0 = arith.constant 0 : i32
    %26 = vector.broadcast %c0_i32_0 : i32 to vector<64x16xi32>
    %27 = arith.cmpi sge, %24, %26 : vector<64x16xi32>
    %c16_i32_1 = arith.constant 16 : i32
    %28 = vector.broadcast %c16_i32_1 : i32 to vector<64x16xi32>
    %29 = arith.cmpi slt, %24, %28 : vector<64x16xi32>
    %30 = arith.andi %27, %29 : vector<64x16xi1>
    %c0_i32_2 = arith.constant 0 : i32
    %31 = vector.broadcast %c0_i32_2 : i32 to vector<64x16xi32>
    %32 = arith.cmpi sge, %25, %31 : vector<64x16xi32>
    %33 = arith.andi %30, %32 : vector<64x16xi1>
    %c4_i32 = arith.constant 4 : i32
    %34 = vector.broadcast %c4_i32 : i32 to vector<64x16xi32>
    %35 = arith.cmpi slt, %25, %34 : vector<64x16xi32>
    %36 = arith.andi %33, %35 : vector<64x16xi1>
    %c16_i32_3 = arith.constant 16 : i32
    %37 = vector.broadcast %c16_i32_3 : i32 to vector<64x16xi32>
    %38 = arith.cmpi sge, %24, %37 : vector<64x16xi32>
    %c32_i32_4 = arith.constant 32 : i32
    %39 = vector.broadcast %c32_i32_4 : i32 to vector<64x16xi32>
    %40 = arith.cmpi slt, %24, %39 : vector<64x16xi32>
    %41 = arith.andi %38, %40 : vector<64x16xi1>
    %c4_i32_5 = arith.constant 4 : i32
    %42 = vector.broadcast %c4_i32_5 : i32 to vector<64x16xi32>
    %43 = arith.cmpi sge, %25, %42 : vector<64x16xi32>
    %44 = arith.andi %41, %43 : vector<64x16xi1>
    %c8_i32 = arith.constant 8 : i32
    %45 = vector.broadcast %c8_i32 : i32 to vector<64x16xi32>
    %46 = arith.cmpi slt, %25, %45 : vector<64x16xi32>
    %47 = arith.andi %44, %46 : vector<64x16xi1>
    %48 = arith.ori %36, %47 : vector<64x16xi1>
    %c32_i32_6 = arith.constant 32 : i32
    %49 = vector.broadcast %c32_i32_6 : i32 to vector<64x16xi32>
    %50 = arith.cmpi sge, %24, %49 : vector<64x16xi32>
    %c48_i32_7 = arith.constant 48 : i32
    %51 = vector.broadcast %c48_i32_7 : i32 to vector<64x16xi32>
    %52 = arith.cmpi slt, %24, %51 : vector<64x16xi32>
    %53 = arith.andi %50, %52 : vector<64x16xi1>
    %c8_i32_8 = arith.constant 8 : i32
    %54 = vector.broadcast %c8_i32_8 : i32 to vector<64x16xi32>
    %55 = arith.cmpi sge, %25, %54 : vector<64x16xi32>
    %56 = arith.andi %53, %55 : vector<64x16xi1>
    %c12_i32 = arith.constant 12 : i32
    %57 = vector.broadcast %c12_i32 : i32 to vector<64x16xi32>
    %58 = arith.cmpi slt, %25, %57 : vector<64x16xi32>
    %59 = arith.andi %56, %58 : vector<64x16xi1>
    %60 = arith.ori %48, %59 : vector<64x16xi1>
    %c48_i32_9 = arith.constant 48 : i32
    %61 = vector.broadcast %c48_i32_9 : i32 to vector<64x16xi32>
    %62 = arith.cmpi sge, %24, %61 : vector<64x16xi32>
    %c64_i32 = arith.constant 64 : i32
    %63 = vector.broadcast %c64_i32 : i32 to vector<64x16xi32>
    %64 = arith.cmpi slt, %24, %63 : vector<64x16xi32>
    %65 = arith.andi %62, %64 : vector<64x16xi1>
    %c12_i32_10 = arith.constant 12 : i32
    %66 = vector.broadcast %c12_i32_10 : i32 to vector<64x16xi32>
    %67 = arith.cmpi sge, %25, %66 : vector<64x16xi32>
    %68 = arith.andi %65, %67 : vector<64x16xi1>
    %c16_i32_11 = arith.constant 16 : i32
    %69 = vector.broadcast %c16_i32_11 : i32 to vector<64x16xi32>
    %70 = arith.cmpi slt, %25, %69 : vector<64x16xi32>
    %71 = arith.andi %68, %70 : vector<64x16xi1>
    %72 = arith.ori %60, %71 : vector<64x16xi1>
    %73 = arith.extui %72 : vector<64x16xi1> to vector<64x16xi32>
    %74 = arith.sitofp %73 : vector<64x16xi32> to vector<64x16xf32>
    %c120 = arith.constant 120 : index
    %c0 = arith.constant 0 : index
    %75 = vector.load %arg5[%c120, %c0] : memref<137x8xf32, #tpu.memory_space<vmem>>, vector<1x8xf32>
    %c128 = arith.constant 128 : index
    %c0_12 = arith.constant 0 : index
    %76 = vector.load %arg5[%c128, %c0_12] : memref<137x8xf32, #tpu.memory_space<vmem>>, vector<8x8xf32>
    %c136 = arith.constant 136 : index
    %c0_13 = arith.constant 0 : index
    %77 = vector.load %arg5[%c136, %c0_13] : memref<137x8xf32, #tpu.memory_space<vmem>>, vector<1x8xf32>
    %c0_14 = arith.constant 0 : index
    %c0_15 = arith.constant 0 : index
    %c0_16 = arith.constant 0 : index
    %78 = vector.load %arg3[%c0_14, %c0_15, %c0_16] : memref<2x1x16xf32, #tpu.memory_space<vmem>>, vector<1x1x16xf32>
    %79 = vector.shape_cast %78 : vector<1x1x16xf32> to vector<1x16xf32>
    %80 = vector.broadcast %79 : vector<1x16xf32> to vector<16x16xf32>
    %81 = arith.mulf %4, %80 : vector<16x16xf32>
    %cst = arith.constant dense<0.000000e+00> : vector<16xf32>
    %82 = vector.multi_reduction <add>, %81, %cst [1] : vector<16x16xf32> to vector<16xf32>
    %83 = vector.shape_cast %82 : vector<16xf32> to vector<16x1xf32>
    %c0_17 = arith.constant 0 : index
    %c0_18 = arith.constant 0 : index
    %c0_19 = arith.constant 0 : index
    %84 = vector.load %arg1[%c0_17, %c0_18, %c0_19] : memref<2x16x4xf32, #tpu.memory_space<vmem>>, vector<1x16x4xf32>
    %85 = vector.shape_cast %84 : vector<1x16x4xf32> to vector<16x4xf32>
    %c0_20 = arith.constant 0 : index
    %c0_21 = arith.constant 0 : index
    %c0_22 = arith.constant 0 : index
    %c0_23 = arith.constant 0 : index
    %86 = vector.load %arg2[%c0_20, %c0_21, %c0_22, %c0_23] : memref<2x3x16x16xf32, #tpu.memory_space<vmem>>, vector<1x1x16x16xf32>
    %87 = vector.shape_cast %86 : vector<1x1x16x16xf32> to vector<16x16xf32>
    %cst_24 = arith.constant 1.000000e+00 : f32
    %88 = vector.broadcast %cst_24 : f32 to vector<16x16xf32>
    %89 = arith.select %2, %88, %87 : vector<16x16xi1>, vector<16x16xf32>
    %cst_25 = arith.constant dense<0.000000e+00> : vector<16xf32>
    %90 = vector.multi_reduction <add>, %89, %cst_25 [1] : vector<16x16xf32> to vector<16xf32>
    %91 = vector.shape_cast %90 : vector<16xf32> to vector<16x1xf32>
    %cst_26 = arith.constant 1.000000e+00 : f32
    %92 = vector.broadcast %cst_26 : f32 to vector<16x1xf32>
    %93 = arith.maximumf %91, %92 : vector<16x1xf32>
    %94 = math.rsqrt %93 : vector<16x1xf32>
    %c0_27 = arith.constant 0 : index
    %c0_28 = arith.constant 0 : index
    %c0_29 = arith.constant 0 : index
    %95 = vector.load %arg4[%c0_27, %c0_28, %c0_29] : memref<3x5x40xf32, #tpu.memory_space<vmem>>, vector<1x5x40xf32>
    %96 = vector.shape_cast %95 : vector<1x5x40xf32> to vector<5x40xf32>
    %97 = vector.extract_strided_slice %96 {offsets = [0, 0], sizes = [4, 40], strides = [1, 1]} : vector<5x40xf32> to vector<4x40xf32>
    %cst_30 = arith.constant dense<0.000000e+00> : vector<16x40xf32>
    %98 = tpu.matmul %85, %97, %cst_30 {dimension_numbers = #tpu.dot_dimension_numbers<[1], [0], [0], [1], [0, 0, 1, 1], [], []>} : vector<16x4xf32>, vector<4x40xf32>, vector<16x40xf32> -> vector<16x40xf32>
    %99 = vector.broadcast %94 : vector<16x1xf32> to vector<16x40xf32>
    %100 = arith.mulf %99, %98 : vector<16x40xf32>
    %cst_31 = arith.constant dense<0.000000e+00> : vector<16x40xf32>
    %101 = tpu.matmul %89, %100, %cst_31 {dimension_numbers = #tpu.dot_dimension_numbers<[1], [0], [0], [1], [0, 0, 1, 1], [], []>} : vector<16x16xf32>, vector<16x40xf32>, vector<16x40xf32> -> vector<16x40xf32>
    %102 = vector.broadcast %94 : vector<16x1xf32> to vector<16x40xf32>
    %103 = arith.mulf %102, %101 : vector<16x40xf32>
    %104 = vector.extract_strided_slice %96 {offsets = [4, 0], sizes = [1, 40], strides = [1, 1]} : vector<5x40xf32> to vector<1x40xf32>
    %105 = vector.broadcast %104 : vector<1x40xf32> to vector<16x40xf32>
    %106 = arith.addf %103, %105 : vector<16x40xf32>
    %107 = vector.extract_strided_slice %106 {offsets = [0, 0], sizes = [16, 16], strides = [1, 1]} : vector<16x40xf32> to vector<16x16xf32>
    %108 = vector.extract_strided_slice %106 {offsets = [0, 16], sizes = [16, 16], strides = [1, 1]} : vector<16x40xf32> to vector<16x16xf32>
    %cst_32 = arith.constant dense<0.000000e+00> : vector<64x16xf32>
    %109 = tpu.matmul %23, %108, %cst_32 {dimension_numbers = #tpu.dot_dimension_numbers<[1], [0], [0], [1], [0, 0, 1, 1], [], []>} : vector<64x16xf32>, vector<16x16xf32>, vector<64x16xf32> -> vector<64x16xf32>
    %110 = arith.mulf %109, %74 : vector<64x16xf32>
    %cst_33 = arith.constant dense<0.000000e+00> : vector<16x64xf32>
    %111 = tpu.matmul %107, %110, %cst_33 {dimension_numbers = #tpu.dot_dimension_numbers<[1], [1], [0], [0], [0, 0, 1, 0], [], []>} : vector<16x16xf32>, vector<64x16xf32>, vector<16x64xf32> -> vector<16x64xf32>
    %cst_34 = arith.constant 0.353553385 : f32
    %112 = vector.broadcast %cst_34 : f32 to vector<16x64xf32>
    %113 = arith.mulf %111, %112 : vector<16x64xf32>
    %114 = math.tanh %113 : vector<16x64xf32>
    %cst_35 = arith.constant dense<0.000000e+00> : vector<16x16xf32>
    %115 = tpu.matmul %114, %23, %cst_35 {dimension_numbers = #tpu.dot_dimension_numbers<[1], [0], [0], [1], [0, 0, 1, 1], [], []>} : vector<16x64xf32>, vector<64x16xf32>, vector<16x16xf32> -> vector<16x16xf32>
    %116 = arith.truncf %115 : vector<16x16xf32> to vector<16x16xbf16>
    %117 = arith.extf %116 : vector<16x16xbf16> to vector<16x16xf32>
    %cst_36 = arith.constant dense<0.000000e+00> : vector<16x16xf32>
    %118 = tpu.matmul %4, %117, %cst_36 {dimension_numbers = #tpu.dot_dimension_numbers<[1], [1], [0], [0], [0, 0, 1, 0], [], []>} : vector<16x16xf32>, vector<16x16xf32>, vector<16x16xf32> -> vector<16x16xf32>
    %119 = arith.subf %115, %117 : vector<16x16xf32>
    %cst_37 = arith.constant dense<0.000000e+00> : vector<16x16xf32>
    %120 = tpu.matmul %4, %119, %cst_37 {dimension_numbers = #tpu.dot_dimension_numbers<[1], [1], [0], [0], [0, 0, 1, 0], [], []>} : vector<16x16xf32>, vector<16x16xf32>, vector<16x16xf32> -> vector<16x16xf32>
    %121 = arith.addf %118, %120 : vector<16x16xf32>
    %122 = arith.addf %115, %121 : vector<16x16xf32>
    %cst_38 = arith.constant 1.250000e-01 : f32
    %123 = vector.broadcast %cst_38 : f32 to vector<16x16xf32>
    %124 = arith.mulf %122, %123 : vector<16x16xf32>
    %c0_39 = arith.constant 0 : index
    %c0_40 = arith.constant 0 : index
    %125 = vector.load %arg5[%c0_39, %c0_40] : memref<137x8xf32, #tpu.memory_space<vmem>>, vector<40x8xf32>
    %cst_41 = arith.constant dense<0.000000e+00> : vector<16x8xf32>
    %126 = tpu.matmul %106, %125, %cst_41 {dimension_numbers = #tpu.dot_dimension_numbers<[1], [0], [0], [1], [0, 0, 1, 1], [], []>} : vector<16x40xf32>, vector<40x8xf32>, vector<16x8xf32> -> vector<16x8xf32>
    %c0_42 = arith.constant 0 : index
    %c1 = arith.constant 1 : index
    %c0_43 = arith.constant 0 : index
    %c0_44 = arith.constant 0 : index
    %127 = vector.load %arg2[%c0_42, %c1, %c0_43, %c0_44] : memref<2x3x16x16xf32, #tpu.memory_space<vmem>>, vector<1x1x16x16xf32>
    %128 = vector.shape_cast %127 : vector<1x1x16x16xf32> to vector<16x16xf32>
    %cst_45 = arith.constant 1.000000e+00 : f32
    %129 = vector.broadcast %cst_45 : f32 to vector<16x16xf32>
    %130 = arith.select %2, %129, %128 : vector<16x16xi1>, vector<16x16xf32>
    %cst_46 = arith.constant dense<0.000000e+00> : vector<16xf32>
    %131 = vector.multi_reduction <add>, %130, %cst_46 [1] : vector<16x16xf32> to vector<16xf32>
    %132 = vector.shape_cast %131 : vector<16xf32> to vector<16x1xf32>
    %cst_47 = arith.constant 1.000000e+00 : f32
    %133 = vector.broadcast %cst_47 : f32 to vector<16x1xf32>
    %134 = arith.maximumf %132, %133 : vector<16x1xf32>
    %135 = math.rsqrt %134 : vector<16x1xf32>
    %c1_48 = arith.constant 1 : index
    %c0_49 = arith.constant 0 : index
    %c0_50 = arith.constant 0 : index
    %136 = vector.load %arg4[%c1_48, %c0_49, %c0_50] : memref<3x5x40xf32, #tpu.memory_space<vmem>>, vector<1x5x40xf32>
    %137 = vector.shape_cast %136 : vector<1x5x40xf32> to vector<5x40xf32>
    %138 = vector.extract_strided_slice %137 {offsets = [0, 0], sizes = [4, 40], strides = [1, 1]} : vector<5x40xf32> to vector<4x40xf32>
    %cst_51 = arith.constant dense<0.000000e+00> : vector<16x40xf32>
    %139 = tpu.matmul %85, %138, %cst_51 {dimension_numbers = #tpu.dot_dimension_numbers<[1], [0], [0], [1], [0, 0, 1, 1], [], []>} : vector<16x4xf32>, vector<4x40xf32>, vector<16x40xf32> -> vector<16x40xf32>
    %140 = vector.broadcast %135 : vector<16x1xf32> to vector<16x40xf32>
    %141 = arith.mulf %140, %139 : vector<16x40xf32>
    %cst_52 = arith.constant dense<0.000000e+00> : vector<16x40xf32>
    %142 = tpu.matmul %130, %141, %cst_52 {dimension_numbers = #tpu.dot_dimension_numbers<[1], [0], [0], [1], [0, 0, 1, 1], [], []>} : vector<16x16xf32>, vector<16x40xf32>, vector<16x40xf32> -> vector<16x40xf32>
    %143 = vector.broadcast %135 : vector<16x1xf32> to vector<16x40xf32>
    %144 = arith.mulf %143, %142 : vector<16x40xf32>
    %145 = vector.extract_strided_slice %137 {offsets = [4, 0], sizes = [1, 40], strides = [1, 1]} : vector<5x40xf32> to vector<1x40xf32>
    %146 = vector.broadcast %145 : vector<1x40xf32> to vector<16x40xf32>
    %147 = arith.addf %144, %146 : vector<16x40xf32>
    %148 = vector.extract_strided_slice %147 {offsets = [0, 0], sizes = [16, 16], strides = [1, 1]} : vector<16x40xf32> to vector<16x16xf32>
    %149 = vector.extract_strided_slice %147 {offsets = [0, 16], sizes = [16, 16], strides = [1, 1]} : vector<16x40xf32> to vector<16x16xf32>
    %cst_53 = arith.constant dense<0.000000e+00> : vector<64x16xf32>
    %150 = tpu.matmul %23, %149, %cst_53 {dimension_numbers = #tpu.dot_dimension_numbers<[1], [0], [0], [1], [0, 0, 1, 1], [], []>} : vector<64x16xf32>, vector<16x16xf32>, vector<64x16xf32> -> vector<64x16xf32>
    %151 = arith.mulf %150, %74 : vector<64x16xf32>
    %cst_54 = arith.constant dense<0.000000e+00> : vector<16x64xf32>
    %152 = tpu.matmul %148, %151, %cst_54 {dimension_numbers = #tpu.dot_dimension_numbers<[1], [1], [0], [0], [0, 0, 1, 0], [], []>} : vector<16x16xf32>, vector<64x16xf32>, vector<16x64xf32> -> vector<16x64xf32>
    %cst_55 = arith.constant 0.353553385 : f32
    %153 = vector.broadcast %cst_55 : f32 to vector<16x64xf32>
    %154 = arith.mulf %152, %153 : vector<16x64xf32>
    %155 = math.tanh %154 : vector<16x64xf32>
    %cst_56 = arith.constant dense<0.000000e+00> : vector<16x16xf32>
    %156 = tpu.matmul %155, %23, %cst_56 {dimension_numbers = #tpu.dot_dimension_numbers<[1], [0], [0], [1], [0, 0, 1, 1], [], []>} : vector<16x64xf32>, vector<64x16xf32>, vector<16x16xf32> -> vector<16x16xf32>
    %157 = arith.truncf %156 : vector<16x16xf32> to vector<16x16xbf16>
    %158 = arith.extf %157 : vector<16x16xbf16> to vector<16x16xf32>
    %cst_57 = arith.constant dense<0.000000e+00> : vector<16x16xf32>
    %159 = tpu.matmul %4, %158, %cst_57 {dimension_numbers = #tpu.dot_dimension_numbers<[1], [1], [0], [0], [0, 0, 1, 0], [], []>} : vector<16x16xf32>, vector<16x16xf32>, vector<16x16xf32> -> vector<16x16xf32>
    %160 = arith.subf %156, %158 : vector<16x16xf32>
    %cst_58 = arith.constant dense<0.000000e+00> : vector<16x16xf32>
    %161 = tpu.matmul %4, %160, %cst_58 {dimension_numbers = #tpu.dot_dimension_numbers<[1], [1], [0], [0], [0, 0, 1, 0], [], []>} : vector<16x16xf32>, vector<16x16xf32>, vector<16x16xf32> -> vector<16x16xf32>
    %162 = arith.addf %159, %161 : vector<16x16xf32>
    %163 = arith.addf %156, %162 : vector<16x16xf32>
    %cst_59 = arith.constant 1.250000e-01 : f32
    %164 = vector.broadcast %cst_59 : f32 to vector<16x16xf32>
    %165 = arith.mulf %163, %164 : vector<16x16xf32>
    %c40 = arith.constant 40 : index
    %c0_60 = arith.constant 0 : index
    %166 = vector.load %arg5[%c40, %c0_60] : memref<137x8xf32, #tpu.memory_space<vmem>>, vector<40x8xf32>
    %cst_61 = arith.constant dense<0.000000e+00> : vector<16x8xf32>
    %167 = tpu.matmul %147, %166, %cst_61 {dimension_numbers = #tpu.dot_dimension_numbers<[1], [0], [0], [1], [0, 0, 1, 1], [], []>} : vector<16x40xf32>, vector<40x8xf32>, vector<16x8xf32> -> vector<16x8xf32>
    %168 = arith.addf %126, %167 : vector<16x8xf32>
    %c0_62 = arith.constant 0 : index
    %c2 = arith.constant 2 : index
    %c0_63 = arith.constant 0 : index
    %c0_64 = arith.constant 0 : index
    %169 = vector.load %arg2[%c0_62, %c2, %c0_63, %c0_64] : memref<2x3x16x16xf32, #tpu.memory_space<vmem>>, vector<1x1x16x16xf32>
    %170 = vector.shape_cast %169 : vector<1x1x16x16xf32> to vector<16x16xf32>
    %cst_65 = arith.constant 1.000000e+00 : f32
    %171 = vector.broadcast %cst_65 : f32 to vector<16x16xf32>
    %172 = arith.select %2, %171, %170 : vector<16x16xi1>, vector<16x16xf32>
    %cst_66 = arith.constant dense<0.000000e+00> : vector<16xf32>
    %173 = vector.multi_reduction <add>, %172, %cst_66 [1] : vector<16x16xf32> to vector<16xf32>
    %174 = vector.shape_cast %173 : vector<16xf32> to vector<16x1xf32>
    %cst_67 = arith.constant 1.000000e+00 : f32
    %175 = vector.broadcast %cst_67 : f32 to vector<16x1xf32>
    %176 = arith.maximumf %174, %175 : vector<16x1xf32>
    %177 = math.rsqrt %176 : vector<16x1xf32>
    %c2_68 = arith.constant 2 : index
    %c0_69 = arith.constant 0 : index
    %c0_70 = arith.constant 0 : index
    %178 = vector.load %arg4[%c2_68, %c0_69, %c0_70] : memref<3x5x40xf32, #tpu.memory_space<vmem>>, vector<1x5x40xf32>
    %179 = vector.shape_cast %178 : vector<1x5x40xf32> to vector<5x40xf32>
    %180 = vector.extract_strided_slice %179 {offsets = [0, 0], sizes = [4, 40], strides = [1, 1]} : vector<5x40xf32> to vector<4x40xf32>
    %cst_71 = arith.constant dense<0.000000e+00> : vector<16x40xf32>
    %181 = tpu.matmul %85, %180, %cst_71 {dimension_numbers = #tpu.dot_dimension_numbers<[1], [0], [0], [1], [0, 0, 1, 1], [], []>} : vector<16x4xf32>, vector<4x40xf32>, vector<16x40xf32> -> vector<16x40xf32>
    %182 = vector.broadcast %177 : vector<16x1xf32> to vector<16x40xf32>
    %183 = arith.mulf %182, %181 : vector<16x40xf32>
    %cst_72 = arith.constant dense<0.000000e+00> : vector<16x40xf32>
    %184 = tpu.matmul %172, %183, %cst_72 {dimension_numbers = #tpu.dot_dimension_numbers<[1], [0], [0], [1], [0, 0, 1, 1], [], []>} : vector<16x16xf32>, vector<16x40xf32>, vector<16x40xf32> -> vector<16x40xf32>
    %185 = vector.broadcast %177 : vector<16x1xf32> to vector<16x40xf32>
    %186 = arith.mulf %185, %184 : vector<16x40xf32>
    %187 = vector.extract_strided_slice %179 {offsets = [4, 0], sizes = [1, 40], strides = [1, 1]} : vector<5x40xf32> to vector<1x40xf32>
    %188 = vector.broadcast %187 : vector<1x40xf32> to vector<16x40xf32>
    %189 = arith.addf %186, %188 : vector<16x40xf32>
    %190 = vector.extract_strided_slice %189 {offsets = [0, 0], sizes = [16, 16], strides = [1, 1]} : vector<16x40xf32> to vector<16x16xf32>
    %191 = vector.extract_strided_slice %189 {offsets = [0, 16], sizes = [16, 16], strides = [1, 1]} : vector<16x40xf32> to vector<16x16xf32>
    %cst_73 = arith.constant dense<0.000000e+00> : vector<64x16xf32>
    %192 = tpu.matmul %23, %191, %cst_73 {dimension_numbers = #tpu.dot_dimension_numbers<[1], [0], [0], [1], [0, 0, 1, 1], [], []>} : vector<64x16xf32>, vector<16x16xf32>, vector<64x16xf32> -> vector<64x16xf32>
    %193 = arith.mulf %192, %74 : vector<64x16xf32>
    %cst_74 = arith.constant dense<0.000000e+00> : vector<16x64xf32>
    %194 = tpu.matmul %190, %193, %cst_74 {dimension_numbers = #tpu.dot_dimension_numbers<[1], [1], [0], [0], [0, 0, 1, 0], [], []>} : vector<16x16xf32>, vector<64x16xf32>, vector<16x64xf32> -> vector<16x64xf32>
    %cst_75 = arith.constant 0.353553385 : f32
    %195 = vector.broadcast %cst_75 : f32 to vector<16x64xf32>
    %196 = arith.mulf %194, %195 : vector<16x64xf32>
    %197 = math.tanh %196 : vector<16x64xf32>
    %cst_76 = arith.constant dense<0.000000e+00> : vector<16x16xf32>
    %198 = tpu.matmul %197, %23, %cst_76 {dimension_numbers = #tpu.dot_dimension_numbers<[1], [0], [0], [1], [0, 0, 1, 1], [], []>} : vector<16x64xf32>, vector<64x16xf32>, vector<16x16xf32> -> vector<16x16xf32>
    %199 = arith.truncf %198 : vector<16x16xf32> to vector<16x16xbf16>
    %200 = arith.extf %199 : vector<16x16xbf16> to vector<16x16xf32>
    %cst_77 = arith.constant dense<0.000000e+00> : vector<16x16xf32>
    %201 = tpu.matmul %4, %200, %cst_77 {dimension_numbers = #tpu.dot_dimension_numbers<[1], [1], [0], [0], [0, 0, 1, 0], [], []>} : vector<16x16xf32>, vector<16x16xf32>, vector<16x16xf32> -> vector<16x16xf32>
    %202 = arith.subf %198, %200 : vector<16x16xf32>
    %cst_78 = arith.constant dense<0.000000e+00> : vector<16x16xf32>
    %203 = tpu.matmul %4, %202, %cst_78 {dimension_numbers = #tpu.dot_dimension_numbers<[1], [1], [0], [0], [0, 0, 1, 0], [], []>} : vector<16x16xf32>, vector<16x16xf32>, vector<16x16xf32> -> vector<16x16xf32>
    %204 = arith.addf %201, %203 : vector<16x16xf32>
    %205 = arith.addf %198, %204 : vector<16x16xf32>
    %cst_79 = arith.constant 1.250000e-01 : f32
    %206 = vector.broadcast %cst_79 : f32 to vector<16x16xf32>
    %207 = arith.mulf %205, %206 : vector<16x16xf32>
    %c80 = arith.constant 80 : index
    %c0_80 = arith.constant 0 : index
    %208 = vector.load %arg5[%c80, %c0_80] : memref<137x8xf32, #tpu.memory_space<vmem>>, vector<40x8xf32>
    %cst_81 = arith.constant dense<0.000000e+00> : vector<16x8xf32>
    %209 = tpu.matmul %189, %208, %cst_81 {dimension_numbers = #tpu.dot_dimension_numbers<[1], [0], [0], [1], [0, 0, 1, 1], [], []>} : vector<16x40xf32>, vector<40x8xf32>, vector<16x8xf32> -> vector<16x8xf32>
    %210 = arith.addf %168, %209 : vector<16x8xf32>
    %211 = vector.broadcast %75 : vector<1x8xf32> to vector<16x8xf32>
    %212 = arith.addf %210, %211 : vector<16x8xf32>
    %cst_82 = arith.constant 0.000000e+00 : f32
    %213 = vector.broadcast %cst_82 : f32 to vector<16x8xf32>
    %214 = arith.cmpf ogt, %212, %213 : vector<16x8xf32>
    %cst_83 = arith.constant 0.000000e+00 : f32
    %215 = vector.broadcast %cst_83 : f32 to vector<16x8xf32>
    %216 = arith.minimumf %212, %215 : vector<16x8xf32>
    %217 = math.exp %216 : vector<16x8xf32>
    %cst_84 = arith.constant 1.000000e+00 : f32
    %218 = vector.broadcast %cst_84 : f32 to vector<16x8xf32>
    %219 = arith.subf %217, %218 : vector<16x8xf32>
    %220 = arith.select %214, %212, %219 : vector<16x8xi1>, vector<16x8xf32>
    %cst_85 = arith.constant dense<0.000000e+00> : vector<16x8xf32>
    %221 = tpu.matmul %220, %76, %cst_85 {dimension_numbers = #tpu.dot_dimension_numbers<[1], [0], [0], [1], [0, 0, 1, 1], [], []>} : vector<16x8xf32>, vector<8x8xf32>, vector<16x8xf32> -> vector<16x8xf32>
    %222 = vector.broadcast %77 : vector<1x8xf32> to vector<16x8xf32>
    %223 = arith.addf %221, %222 : vector<16x8xf32>
    %224 = vector.broadcast %83 : vector<16x1xf32> to vector<16x8xf32>
    %225 = arith.mulf %223, %224 : vector<16x8xf32>
    %226 = math.tanh %225 : vector<16x8xf32>
    %c0_86 = arith.constant 0 : index
    %c0_87 = arith.constant 0 : index
    %c0_88 = arith.constant 0 : index
    %227 = vector.load %arg7[%c0_86, %c0_87, %c0_88] : memref<2x16x8xf32, #tpu.memory_space<vmem>>, vector<1x16x8xf32>
    %228 = vector.shape_cast %227 : vector<1x16x8xf32> to vector<16x8xf32>
    %229 = vector.shape_cast %226 : vector<16x8xf32> to vector<1x16x8xf32>
    tpu.vector_store %arg7[%c0_86, %c0_87, %c0_88], %229 {strides = array<i32>} : memref<2x16x8xf32, #tpu.memory_space<vmem>>, vector<1x16x8xf32>,
    %cst_89 = arith.constant 0.000000e+00 : f32
    %230 = vector.broadcast %cst_89 : f32 to vector<16x16xf32>
    %cst_90 = arith.constant 0.000000e+00 : f32
    %231 = vector.broadcast %cst_90 : f32 to vector<16x16xf32>
    %c0_91 = arith.constant 0 : index
    %232 = memref.load %arg6[%c0_91] : memref<56xf32, #tpu.memory_space<smem>>
    %233 = vector.broadcast %232 : f32 to vector<16x16xf32>
    %234 = arith.mulf %124, %233 : vector<16x16xf32>
    %c6 = arith.constant 6 : index
    %235 = memref.load %arg6[%c6] : memref<56xf32, #tpu.memory_space<smem>>
    %236 = vector.broadcast %235 : f32 to vector<16x16xf32>
    %237 = arith.mulf %165, %236 : vector<16x16xf32>
    %238 = arith.addf %234, %237 : vector<16x16xf32>
    %c12 = arith.constant 12 : index
    %239 = memref.load %arg6[%c12] : memref<56xf32, #tpu.memory_space<smem>>
    %240 = vector.broadcast %239 : f32 to vector<16x16xf32>
    %241 = arith.mulf %207, %240 : vector<16x16xf32>
    %242 = arith.addf %238, %241 : vector<16x16xf32>
    %c18 = arith.constant 18 : index
    %243 = memref.load %arg6[%c18] : memref<56xf32, #tpu.memory_space<smem>>
    %244 = vector.broadcast %243 : f32 to vector<16x16xf32>
    %245 = arith.mulf %87, %244 : vector<16x16xf32>
    %246 = arith.addf %242, %245 : vector<16x16xf32>
    %c24 = arith.constant 24 : index
    %247 = memref.load %arg6[%c24] : memref<56xf32, #tpu.memory_space<smem>>
    %248 = vector.broadcast %247 : f32 to vector<16x16xf32>
    %249 = arith.mulf %128, %248 : vector<16x16xf32>
    %250 = arith.addf %246, %249 : vector<16x16xf32>
    %c30 = arith.constant 30 : index
    %251 = memref.load %arg6[%c30] : memref<56xf32, #tpu.memory_space<smem>>
    %252 = vector.broadcast %251 : f32 to vector<16x16xf32>
    %253 = arith.mulf %170, %252 : vector<16x16xf32>
    %254 = arith.addf %250, %253 : vector<16x16xf32>
    %c36 = arith.constant 36 : index
    %255 = memref.load %arg6[%c36] : memref<56xf32, #tpu.memory_space<smem>>
    %256 = vector.broadcast %255 : f32 to vector<16x16xf32>
    %257 = arith.addf %254, %256 : vector<16x16xf32>
    %cst_92 = arith.constant 0.000000e+00 : f32
    %258 = vector.broadcast %cst_92 : f32 to vector<16x16xf32>
    %259 = arith.cmpf ogt, %257, %258 : vector<16x16xf32>
    %cst_93 = arith.constant 0.000000e+00 : f32
    %260 = vector.broadcast %cst_93 : f32 to vector<16x16xf32>
    %261 = arith.minimumf %257, %260 : vector<16x16xf32>
    %262 = math.exp %261 : vector<16x16xf32>
    %cst_94 = arith.constant 1.000000e+00 : f32
    %263 = vector.broadcast %cst_94 : f32 to vector<16x16xf32>
    %264 = arith.subf %262, %263 : vector<16x16xf32>
    %265 = arith.select %259, %257, %264 : vector<16x16xi1>, vector<16x16xf32>
    %c42 = arith.constant 42 : index
    %266 = memref.load %arg6[%c42] : memref<56xf32, #tpu.memory_space<smem>>
    %267 = vector.broadcast %266 : f32 to vector<16x16xf32>
    %268 = arith.mulf %265, %267 : vector<16x16xf32>
    %269 = arith.addf %230, %268 : vector<16x16xf32>
    %c43 = arith.constant 43 : index
    %270 = memref.load %arg6[%c43] : memref<56xf32, #tpu.memory_space<smem>>
    %271 = vector.broadcast %270 : f32 to vector<16x16xf32>
    %272 = arith.mulf %265, %271 : vector<16x16xf32>
    %273 = arith.addf %231, %272 : vector<16x16xf32>
    %c1_95 = arith.constant 1 : index
    %274 = memref.load %arg6[%c1_95] : memref<56xf32, #tpu.memory_space<smem>>
    %275 = vector.broadcast %274 : f32 to vector<16x16xf32>
    %276 = arith.mulf %124, %275 : vector<16x16xf32>
    %c7 = arith.constant 7 : index
    %277 = memref.load %arg6[%c7] : memref<56xf32, #tpu.memory_space<smem>>
    %278 = vector.broadcast %277 : f32 to vector<16x16xf32>
    %279 = arith.mulf %165, %278 : vector<16x16xf32>
    %280 = arith.addf %276, %279 : vector<16x16xf32>
    %c13 = arith.constant 13 : index
    %281 = memref.load %arg6[%c13] : memref<56xf32, #tpu.memory_space<smem>>
    %282 = vector.broadcast %281 : f32 to vector<16x16xf32>
    %283 = arith.mulf %207, %282 : vector<16x16xf32>
    %284 = arith.addf %280, %283 : vector<16x16xf32>
    %c19 = arith.constant 19 : index
    %285 = memref.load %arg6[%c19] : memref<56xf32, #tpu.memory_space<smem>>
    %286 = vector.broadcast %285 : f32 to vector<16x16xf32>
    %287 = arith.mulf %87, %286 : vector<16x16xf32>
    %288 = arith.addf %284, %287 : vector<16x16xf32>
    %c25 = arith.constant 25 : index
    %289 = memref.load %arg6[%c25] : memref<56xf32, #tpu.memory_space<smem>>
    %290 = vector.broadcast %289 : f32 to vector<16x16xf32>
    %291 = arith.mulf %128, %290 : vector<16x16xf32>
    %292 = arith.addf %288, %291 : vector<16x16xf32>
    %c31 = arith.constant 31 : index
    %293 = memref.load %arg6[%c31] : memref<56xf32, #tpu.memory_space<smem>>
    %294 = vector.broadcast %293 : f32 to vector<16x16xf32>
    %295 = arith.mulf %170, %294 : vector<16x16xf32>
    %296 = arith.addf %292, %295 : vector<16x16xf32>
    %c37 = arith.constant 37 : index
    %297 = memref.load %arg6[%c37] : memref<56xf32, #tpu.memory_space<smem>>
    %298 = vector.broadcast %297 : f32 to vector<16x16xf32>
    %299 = arith.addf %296, %298 : vector<16x16xf32>
    %cst_96 = arith.constant 0.000000e+00 : f32
    %300 = vector.broadcast %cst_96 : f32 to vector<16x16xf32>
    %301 = arith.cmpf ogt, %299, %300 : vector<16x16xf32>
    %cst_97 = arith.constant 0.000000e+00 : f32
    %302 = vector.broadcast %cst_97 : f32 to vector<16x16xf32>
    %303 = arith.minimumf %299, %302 : vector<16x16xf32>
    %304 = math.exp %303 : vector<16x16xf32>
    %cst_98 = arith.constant 1.000000e+00 : f32
    %305 = vector.broadcast %cst_98 : f32 to vector<16x16xf32>
    %306 = arith.subf %304, %305 : vector<16x16xf32>
    %307 = arith.select %301, %299, %306 : vector<16x16xi1>, vector<16x16xf32>
    %c44 = arith.constant 44 : index
    %308 = memref.load %arg6[%c44] : memref<56xf32, #tpu.memory_space<smem>>
    %309 = vector.broadcast %308 : f32 to vector<16x16xf32>
    %310 = arith.mulf %307, %309 : vector<16x16xf32>
    %311 = arith.addf %269, %310 : vector<16x16xf32>
    %c45 = arith.constant 45 : index
    %312 = memref.load %arg6[%c45] : memref<56xf32, #tpu.memory_space<smem>>
    %313 = vector.broadcast %312 : f32 to vector<16x16xf32>
    %314 = arith.mulf %307, %313 : vector<16x16xf32>
    %315 = arith.addf %273, %314 : vector<16x16xf32>
    %c2_99 = arith.constant 2 : index
    %316 = memref.load %arg6[%c2_99] : memref<56xf32, #tpu.memory_space<smem>>
    %317 = vector.broadcast %316 : f32 to vector<16x16xf32>
    %318 = arith.mulf %124, %317 : vector<16x16xf32>
    %c8 = arith.constant 8 : index
    %319 = memref.load %arg6[%c8] : memref<56xf32, #tpu.memory_space<smem>>
    %320 = vector.broadcast %319 : f32 to vector<16x16xf32>
    %321 = arith.mulf %165, %320 : vector<16x16xf32>
    %322 = arith.addf %318, %321 : vector<16x16xf32>
    %c14 = arith.constant 14 : index
    %323 = memref.load %arg6[%c14] : memref<56xf32, #tpu.memory_space<smem>>
    %324 = vector.broadcast %323 : f32 to vector<16x16xf32>
    %325 = arith.mulf %207, %324 : vector<16x16xf32>
    %326 = arith.addf %322, %325 : vector<16x16xf32>
    %c20 = arith.constant 20 : index
    %327 = memref.load %arg6[%c20] : memref<56xf32, #tpu.memory_space<smem>>
    %328 = vector.broadcast %327 : f32 to vector<16x16xf32>
    %329 = arith.mulf %87, %328 : vector<16x16xf32>
    %330 = arith.addf %326, %329 : vector<16x16xf32>
    %c26 = arith.constant 26 : index
    %331 = memref.load %arg6[%c26] : memref<56xf32, #tpu.memory_space<smem>>
    %332 = vector.broadcast %331 : f32 to vector<16x16xf32>
    %333 = arith.mulf %128, %332 : vector<16x16xf32>
    %334 = arith.addf %330, %333 : vector<16x16xf32>
    %c32 = arith.constant 32 : index
    %335 = memref.load %arg6[%c32] : memref<56xf32, #tpu.memory_space<smem>>
    %336 = vector.broadcast %335 : f32 to vector<16x16xf32>
    %337 = arith.mulf %170, %336 : vector<16x16xf32>
    %338 = arith.addf %334, %337 : vector<16x16xf32>
    %c38 = arith.constant 38 : index
    %339 = memref.load %arg6[%c38] : memref<56xf32, #tpu.memory_space<smem>>
    %340 = vector.broadcast %339 : f32 to vector<16x16xf32>
    %341 = arith.addf %338, %340 : vector<16x16xf32>
    %cst_100 = arith.constant 0.000000e+00 : f32
    %342 = vector.broadcast %cst_100 : f32 to vector<16x16xf32>
    %343 = arith.cmpf ogt, %341, %342 : vector<16x16xf32>
    %cst_101 = arith.constant 0.000000e+00 : f32
    %344 = vector.broadcast %cst_101 : f32 to vector<16x16xf32>
    %345 = arith.minimumf %341, %344 : vector<16x16xf32>
    %346 = math.exp %345 : vector<16x16xf32>
    %cst_102 = arith.constant 1.000000e+00 : f32
    %347 = vector.broadcast %cst_102 : f32 to vector<16x16xf32>
    %348 = arith.subf %346, %347 : vector<16x16xf32>
    %349 = arith.select %343, %341, %348 : vector<16x16xi1>, vector<16x16xf32>
    %c46 = arith.constant 46 : index
    %350 = memref.load %arg6[%c46] : memref<56xf32, #tpu.memory_space<smem>>
    %351 = vector.broadcast %350 : f32 to vector<16x16xf32>
    %352 = arith.mulf %349, %351 : vector<16x16xf32>
    %353 = arith.addf %311, %352 : vector<16x16xf32>
    %c47 = arith.constant 47 : index
    %354 = memref.load %arg6[%c47] : memref<56xf32, #tpu.memory_space<smem>>
    %355 = vector.broadcast %354 : f32 to vector<16x16xf32>
    %356 = arith.mulf %349, %355 : vector<16x16xf32>
    %357 = arith.addf %315, %356 : vector<16x16xf32>
    %c3 = arith.constant 3 : index
    %358 = memref.load %arg6[%c3] : memref<56xf32, #tpu.memory_space<smem>>
    %359 = vector.broadcast %358 : f32 to vector<16x16xf32>
    %360 = arith.mulf %124, %359 : vector<16x16xf32>
    %c9 = arith.constant 9 : index
    %361 = memref.load %arg6[%c9] : memref<56xf32, #tpu.memory_space<smem>>
    %362 = vector.broadcast %361 : f32 to vector<16x16xf32>
    %363 = arith.mulf %165, %362 : vector<16x16xf32>
    %364 = arith.addf %360, %363 : vector<16x16xf32>
    %c15 = arith.constant 15 : index
    %365 = memref.load %arg6[%c15] : memref<56xf32, #tpu.memory_space<smem>>
    %366 = vector.broadcast %365 : f32 to vector<16x16xf32>
    %367 = arith.mulf %207, %366 : vector<16x16xf32>
    %368 = arith.addf %364, %367 : vector<16x16xf32>
    %c21 = arith.constant 21 : index
    %369 = memref.load %arg6[%c21] : memref<56xf32, #tpu.memory_space<smem>>
    %370 = vector.broadcast %369 : f32 to vector<16x16xf32>
    %371 = arith.mulf %87, %370 : vector<16x16xf32>
    %372 = arith.addf %368, %371 : vector<16x16xf32>
    %c27 = arith.constant 27 : index
    %373 = memref.load %arg6[%c27] : memref<56xf32, #tpu.memory_space<smem>>
    %374 = vector.broadcast %373 : f32 to vector<16x16xf32>
    %375 = arith.mulf %128, %374 : vector<16x16xf32>
    %376 = arith.addf %372, %375 : vector<16x16xf32>
    %c33 = arith.constant 33 : index
    %377 = memref.load %arg6[%c33] : memref<56xf32, #tpu.memory_space<smem>>
    %378 = vector.broadcast %377 : f32 to vector<16x16xf32>
    %379 = arith.mulf %170, %378 : vector<16x16xf32>
    %380 = arith.addf %376, %379 : vector<16x16xf32>
    %c39 = arith.constant 39 : index
    %381 = memref.load %arg6[%c39] : memref<56xf32, #tpu.memory_space<smem>>
    %382 = vector.broadcast %381 : f32 to vector<16x16xf32>
    %383 = arith.addf %380, %382 : vector<16x16xf32>
    %cst_103 = arith.constant 0.000000e+00 : f32
    %384 = vector.broadcast %cst_103 : f32 to vector<16x16xf32>
    %385 = arith.cmpf ogt, %383, %384 : vector<16x16xf32>
    %cst_104 = arith.constant 0.000000e+00 : f32
    %386 = vector.broadcast %cst_104 : f32 to vector<16x16xf32>
    %387 = arith.minimumf %383, %386 : vector<16x16xf32>
    %388 = math.exp %387 : vector<16x16xf32>
    %cst_105 = arith.constant 1.000000e+00 : f32
    %389 = vector.broadcast %cst_105 : f32 to vector<16x16xf32>
    %390 = arith.subf %388, %389 : vector<16x16xf32>
    %391 = arith.select %385, %383, %390 : vector<16x16xi1>, vector<16x16xf32>
    %c48 = arith.constant 48 : index
    %392 = memref.load %arg6[%c48] : memref<56xf32, #tpu.memory_space<smem>>
    %393 = vector.broadcast %392 : f32 to vector<16x16xf32>
    %394 = arith.mulf %391, %393 : vector<16x16xf32>
    %395 = arith.addf %353, %394 : vector<16x16xf32>
    %c49 = arith.constant 49 : index
    %396 = memref.load %arg6[%c49] : memref<56xf32, #tpu.memory_space<smem>>
    %397 = vector.broadcast %396 : f32 to vector<16x16xf32>
    %398 = arith.mulf %391, %397 : vector<16x16xf32>
    %399 = arith.addf %357, %398 : vector<16x16xf32>
    %c4 = arith.constant 4 : index
    %400 = memref.load %arg6[%c4] : memref<56xf32, #tpu.memory_space<smem>>
    %401 = vector.broadcast %400 : f32 to vector<16x16xf32>
    %402 = arith.mulf %124, %401 : vector<16x16xf32>
    %c10 = arith.constant 10 : index
    %403 = memref.load %arg6[%c10] : memref<56xf32, #tpu.memory_space<smem>>
    %404 = vector.broadcast %403 : f32 to vector<16x16xf32>
    %405 = arith.mulf %165, %404 : vector<16x16xf32>
    %406 = arith.addf %402, %405 : vector<16x16xf32>
    %c16 = arith.constant 16 : index
    %407 = memref.load %arg6[%c16] : memref<56xf32, #tpu.memory_space<smem>>
    %408 = vector.broadcast %407 : f32 to vector<16x16xf32>
    %409 = arith.mulf %207, %408 : vector<16x16xf32>
    %410 = arith.addf %406, %409 : vector<16x16xf32>
    %c22 = arith.constant 22 : index
    %411 = memref.load %arg6[%c22] : memref<56xf32, #tpu.memory_space<smem>>
    %412 = vector.broadcast %411 : f32 to vector<16x16xf32>
    %413 = arith.mulf %87, %412 : vector<16x16xf32>
    %414 = arith.addf %410, %413 : vector<16x16xf32>
    %c28 = arith.constant 28 : index
    %415 = memref.load %arg6[%c28] : memref<56xf32, #tpu.memory_space<smem>>
    %416 = vector.broadcast %415 : f32 to vector<16x16xf32>
    %417 = arith.mulf %128, %416 : vector<16x16xf32>
    %418 = arith.addf %414, %417 : vector<16x16xf32>
    %c34 = arith.constant 34 : index
    %419 = memref.load %arg6[%c34] : memref<56xf32, #tpu.memory_space<smem>>
    %420 = vector.broadcast %419 : f32 to vector<16x16xf32>
    %421 = arith.mulf %170, %420 : vector<16x16xf32>
    %422 = arith.addf %418, %421 : vector<16x16xf32>
    %c40_106 = arith.constant 40 : index
    %423 = memref.load %arg6[%c40_106] : memref<56xf32, #tpu.memory_space<smem>>
    %424 = vector.broadcast %423 : f32 to vector<16x16xf32>
    %425 = arith.addf %422, %424 : vector<16x16xf32>
    %cst_107 = arith.constant 0.000000e+00 : f32
    %426 = vector.broadcast %cst_107 : f32 to vector<16x16xf32>
    %427 = arith.cmpf ogt, %425, %426 : vector<16x16xf32>
    %cst_108 = arith.constant 0.000000e+00 : f32
    %428 = vector.broadcast %cst_108 : f32 to vector<16x16xf32>
    %429 = arith.minimumf %425, %428 : vector<16x16xf32>
    %430 = math.exp %429 : vector<16x16xf32>
    %cst_109 = arith.constant 1.000000e+00 : f32
    %431 = vector.broadcast %cst_109 : f32 to vector<16x16xf32>
    %432 = arith.subf %430, %431 : vector<16x16xf32>
    %433 = arith.select %427, %425, %432 : vector<16x16xi1>, vector<16x16xf32>
    %c50 = arith.constant 50 : index
    %434 = memref.load %arg6[%c50] : memref<56xf32, #tpu.memory_space<smem>>
    %435 = vector.broadcast %434 : f32 to vector<16x16xf32>
    %436 = arith.mulf %433, %435 : vector<16x16xf32>
    %437 = arith.addf %395, %436 : vector<16x16xf32>
    %c51 = arith.constant 51 : index
    %438 = memref.load %arg6[%c51] : memref<56xf32, #tpu.memory_space<smem>>
    %439 = vector.broadcast %438 : f32 to vector<16x16xf32>
    %440 = arith.mulf %433, %439 : vector<16x16xf32>
    %441 = arith.addf %399, %440 : vector<16x16xf32>
    %c5 = arith.constant 5 : index
    %442 = memref.load %arg6[%c5] : memref<56xf32, #tpu.memory_space<smem>>
    %443 = vector.broadcast %442 : f32 to vector<16x16xf32>
    %444 = arith.mulf %124, %443 : vector<16x16xf32>
    %c11 = arith.constant 11 : index
    %445 = memref.load %arg6[%c11] : memref<56xf32, #tpu.memory_space<smem>>
    %446 = vector.broadcast %445 : f32 to vector<16x16xf32>
    %447 = arith.mulf %165, %446 : vector<16x16xf32>
    %448 = arith.addf %444, %447 : vector<16x16xf32>
    %c17 = arith.constant 17 : index
    %449 = memref.load %arg6[%c17] : memref<56xf32, #tpu.memory_space<smem>>
    %450 = vector.broadcast %449 : f32 to vector<16x16xf32>
    %451 = arith.mulf %207, %450 : vector<16x16xf32>
    %452 = arith.addf %448, %451 : vector<16x16xf32>
    %c23 = arith.constant 23 : index
    %453 = memref.load %arg6[%c23] : memref<56xf32, #tpu.memory_space<smem>>
    %454 = vector.broadcast %453 : f32 to vector<16x16xf32>
    %455 = arith.mulf %87, %454 : vector<16x16xf32>
    %456 = arith.addf %452, %455 : vector<16x16xf32>
    %c29 = arith.constant 29 : index
    %457 = memref.load %arg6[%c29] : memref<56xf32, #tpu.memory_space<smem>>
    %458 = vector.broadcast %457 : f32 to vector<16x16xf32>
    %459 = arith.mulf %128, %458 : vector<16x16xf32>
    %460 = arith.addf %456, %459 : vector<16x16xf32>
    %c35 = arith.constant 35 : index
    %461 = memref.load %arg6[%c35] : memref<56xf32, #tpu.memory_space<smem>>
    %462 = vector.broadcast %461 : f32 to vector<16x16xf32>
    %463 = arith.mulf %170, %462 : vector<16x16xf32>
    %464 = arith.addf %460, %463 : vector<16x16xf32>
    %c41 = arith.constant 41 : index
    %465 = memref.load %arg6[%c41] : memref<56xf32, #tpu.memory_space<smem>>
    %466 = vector.broadcast %465 : f32 to vector<16x16xf32>
    %467 = arith.addf %464, %466 : vector<16x16xf32>
    %cst_110 = arith.constant 0.000000e+00 : f32
    %468 = vector.broadcast %cst_110 : f32 to vector<16x16xf32>
    %469 = arith.cmpf ogt, %467, %468 : vector<16x16xf32>
    %cst_111 = arith.constant 0.000000e+00 : f32
    %470 = vector.broadcast %cst_111 : f32 to vector<16x16xf32>
    %471 = arith.minimumf %467, %470 : vector<16x16xf32>
    %472 = math.exp %471 : vector<16x16xf32>
    %cst_112 = arith.constant 1.000000e+00 : f32
    %473 = vector.broadcast %cst_112 : f32 to vector<16x16xf32>
    %474 = arith.subf %472, %473 : vector<16x16xf32>
    %475 = arith.select %469, %467, %474 : vector<16x16xi1>, vector<16x16xf32>
    %c52 = arith.constant 52 : index
    %476 = memref.load %arg6[%c52] : memref<56xf32, #tpu.memory_space<smem>>
    %477 = vector.broadcast %476 : f32 to vector<16x16xf32>
    %478 = arith.mulf %475, %477 : vector<16x16xf32>
    %479 = arith.addf %437, %478 : vector<16x16xf32>
    %c53 = arith.constant 53 : index
    %480 = memref.load %arg6[%c53] : memref<56xf32, #tpu.memory_space<smem>>
    %481 = vector.broadcast %480 : f32 to vector<16x16xf32>
    %482 = arith.mulf %475, %481 : vector<16x16xf32>
    %483 = arith.addf %441, %482 : vector<16x16xf32>
    %484 = vector.broadcast %83 : vector<16x1xf32> to vector<16x16xf32>
    %485 = vector.broadcast %79 : vector<1x16xf32> to vector<16x16xf32>
    %486 = arith.mulf %484, %485 : vector<16x16xf32>
    %c54 = arith.constant 54 : index
    %487 = memref.load %arg6[%c54] : memref<56xf32, #tpu.memory_space<smem>>
    %488 = vector.broadcast %487 : f32 to vector<16x16xf32>
    %489 = arith.addf %479, %488 : vector<16x16xf32>
    %490 = arith.truncf %489 : vector<16x16xf32> to vector<16x16xbf16>
    %491 = arith.extf %490 : vector<16x16xbf16> to vector<16x16xf32>
    %cst_113 = arith.constant dense<0.000000e+00> : vector<16x16xf32>
    %492 = tpu.matmul %4, %491, %cst_113 {dimension_numbers = #tpu.dot_dimension_numbers<[1], [1], [0], [0], [0, 0, 1, 0], [], []>} : vector<16x16xf32>, vector<16x16xf32>, vector<16x16xf32> -> vector<16x16xf32>
    %493 = arith.subf %489, %491 : vector<16x16xf32>
    %cst_114 = arith.constant dense<0.000000e+00> : vector<16x16xf32>
    %494 = tpu.matmul %4, %493, %cst_114 {dimension_numbers = #tpu.dot_dimension_numbers<[1], [1], [0], [0], [0, 0, 1, 0], [], []>} : vector<16x16xf32>, vector<16x16xf32>, vector<16x16xf32> -> vector<16x16xf32>
    %495 = arith.addf %492, %494 : vector<16x16xf32>
    %496 = arith.addf %489, %495 : vector<16x16xf32>
    %497 = arith.mulf %496, %486 : vector<16x16xf32>
    %c0_115 = arith.constant 0 : index
    %c0_116 = arith.constant 0 : index
    %c0_117 = arith.constant 0 : index
    %c0_118 = arith.constant 0 : index
    %498 = vector.load %arg8[%c0_115, %c0_116, %c0_117, %c0_118] : memref<2x2x16x16xf32, #tpu.memory_space<vmem>>, vector<1x1x16x16xf32>
    %499 = vector.shape_cast %498 : vector<1x1x16x16xf32> to vector<16x16xf32>
    %500 = vector.shape_cast %497 : vector<16x16xf32> to vector<1x1x16x16xf32>
    tpu.vector_store %arg8[%c0_115, %c0_116, %c0_117, %c0_118], %500 {strides = array<i32>} : memref<2x2x16x16xf32, #tpu.memory_space<vmem>>, vector<1x1x16x16xf32>,
    %c55 = arith.constant 55 : index
    %501 = memref.load %arg6[%c55] : memref<56xf32, #tpu.memory_space<smem>>
    %502 = vector.broadcast %501 : f32 to vector<16x16xf32>
    %503 = arith.addf %483, %502 : vector<16x16xf32>
    %504 = arith.truncf %503 : vector<16x16xf32> to vector<16x16xbf16>
    %505 = arith.extf %504 : vector<16x16xbf16> to vector<16x16xf32>
    %cst_119 = arith.constant dense<0.000000e+00> : vector<16x16xf32>
    %506 = tpu.matmul %4, %505, %cst_119 {dimension_numbers = #tpu.dot_dimension_numbers<[1], [1], [0], [0], [0, 0, 1, 0], [], []>} : vector<16x16xf32>, vector<16x16xf32>, vector<16x16xf32> -> vector<16x16xf32>
    %507 = arith.subf %503, %505 : vector<16x16xf32>
    %cst_120 = arith.constant dense<0.000000e+00> : vector<16x16xf32>
    %508 = tpu.matmul %4, %507, %cst_120 {dimension_numbers = #tpu.dot_dimension_numbers<[1], [1], [0], [0], [0, 0, 1, 0], [], []>} : vector<16x16xf32>, vector<16x16xf32>, vector<16x16xf32> -> vector<16x16xf32>
    %509 = arith.addf %506, %508 : vector<16x16xf32>
    %510 = arith.addf %503, %509 : vector<16x16xf32>
    %511 = arith.mulf %510, %486 : vector<16x16xf32>
    %c0_121 = arith.constant 0 : index
    %c1_122 = arith.constant 1 : index
    %c0_123 = arith.constant 0 : index
    %c0_124 = arith.constant 0 : index
    %512 = vector.load %arg8[%c0_121, %c1_122, %c0_123, %c0_124] : memref<2x2x16x16xf32, #tpu.memory_space<vmem>>, vector<1x1x16x16xf32>
    %513 = vector.shape_cast %512 : vector<1x1x16x16xf32> to vector<16x16xf32>
    %514 = vector.shape_cast %511 : vector<16x16xf32> to vector<1x1x16x16xf32>
    tpu.vector_store %arg8[%c0_121, %c1_122, %c0_123, %c0_124], %514 {strides = array<i32>} : memref<2x2x16x16xf32, #tpu.memory_space<vmem>>, vector<1x1x16x16xf32>,
    %c1_125 = arith.constant 1 : index
    %c0_126 = arith.constant 0 : index
    %c0_127 = arith.constant 0 : index
    %515 = vector.load %arg3[%c1_125, %c0_126, %c0_127] : memref<2x1x16xf32, #tpu.memory_space<vmem>>, vector<1x1x16xf32>
    %516 = vector.shape_cast %515 : vector<1x1x16xf32> to vector<1x16xf32>
    %517 = vector.broadcast %516 : vector<1x16xf32> to vector<16x16xf32>
    %518 = arith.mulf %4, %517 : vector<16x16xf32>
    %cst_128 = arith.constant dense<0.000000e+00> : vector<16xf32>
    %519 = vector.multi_reduction <add>, %518, %cst_128 [1] : vector<16x16xf32> to vector<16xf32>
    %520 = vector.shape_cast %519 : vector<16xf32> to vector<16x1xf32>
    %c1_129 = arith.constant 1 : index
    %c0_130 = arith.constant 0 : index
    %c0_131 = arith.constant 0 : index
    %521 = vector.load %arg1[%c1_129, %c0_130, %c0_131] : memref<2x16x4xf32, #tpu.memory_space<vmem>>, vector<1x16x4xf32>
    %522 = vector.shape_cast %521 : vector<1x16x4xf32> to vector<16x4xf32>
    %c1_132 = arith.constant 1 : index
    %c0_133 = arith.constant 0 : index
    %c0_134 = arith.constant 0 : index
    %c0_135 = arith.constant 0 : index
    %523 = vector.load %arg2[%c1_132, %c0_133, %c0_134, %c0_135] : memref<2x3x16x16xf32, #tpu.memory_space<vmem>>, vector<1x1x16x16xf32>
    %524 = vector.shape_cast %523 : vector<1x1x16x16xf32> to vector<16x16xf32>
    %cst_136 = arith.constant 1.000000e+00 : f32
    %525 = vector.broadcast %cst_136 : f32 to vector<16x16xf32>
    %526 = arith.select %2, %525, %524 : vector<16x16xi1>, vector<16x16xf32>
    %cst_137 = arith.constant dense<0.000000e+00> : vector<16xf32>
    %527 = vector.multi_reduction <add>, %526, %cst_137 [1] : vector<16x16xf32> to vector<16xf32>
    %528 = vector.shape_cast %527 : vector<16xf32> to vector<16x1xf32>
    %cst_138 = arith.constant 1.000000e+00 : f32
    %529 = vector.broadcast %cst_138 : f32 to vector<16x1xf32>
    %530 = arith.maximumf %528, %529 : vector<16x1xf32>
    %531 = math.rsqrt %530 : vector<16x1xf32>
    %c0_139 = arith.constant 0 : index
    %c0_140 = arith.constant 0 : index
    %c0_141 = arith.constant 0 : index
    %532 = vector.load %arg4[%c0_139, %c0_140, %c0_141] : memref<3x5x40xf32, #tpu.memory_space<vmem>>, vector<1x5x40xf32>
    %533 = vector.shape_cast %532 : vector<1x5x40xf32> to vector<5x40xf32>
    %534 = vector.extract_strided_slice %533 {offsets = [0, 0], sizes = [4, 40], strides = [1, 1]} : vector<5x40xf32> to vector<4x40xf32>
    %cst_142 = arith.constant dense<0.000000e+00> : vector<16x40xf32>
    %535 = tpu.matmul %522, %534, %cst_142 {dimension_numbers = #tpu.dot_dimension_numbers<[1], [0], [0], [1], [0, 0, 1, 1], [], []>} : vector<16x4xf32>, vector<4x40xf32>, vector<16x40xf32> -> vector<16x40xf32>
    %536 = vector.broadcast %531 : vector<16x1xf32> to vector<16x40xf32>
    %537 = arith.mulf %536, %535 : vector<16x40xf32>
    %cst_143 = arith.constant dense<0.000000e+00> : vector<16x40xf32>
    %538 = tpu.matmul %526, %537, %cst_143 {dimension_numbers = #tpu.dot_dimension_numbers<[1], [0], [0], [1], [0, 0, 1, 1], [], []>} : vector<16x16xf32>, vector<16x40xf32>, vector<16x40xf32> -> vector<16x40xf32>
    %539 = vector.broadcast %531 : vector<16x1xf32> to vector<16x40xf32>
    %540 = arith.mulf %539, %538 : vector<16x40xf32>
    %541 = vector.extract_strided_slice %533 {offsets = [4, 0], sizes = [1, 40], strides = [1, 1]} : vector<5x40xf32> to vector<1x40xf32>
    %542 = vector.broadcast %541 : vector<1x40xf32> to vector<16x40xf32>
    %543 = arith.addf %540, %542 : vector<16x40xf32>
    %544 = vector.extract_strided_slice %543 {offsets = [0, 0], sizes = [16, 16], strides = [1, 1]} : vector<16x40xf32> to vector<16x16xf32>
    %545 = vector.extract_strided_slice %543 {offsets = [0, 16], sizes = [16, 16], strides = [1, 1]} : vector<16x40xf32> to vector<16x16xf32>
    %cst_144 = arith.constant dense<0.000000e+00> : vector<64x16xf32>
    %546 = tpu.matmul %23, %545, %cst_144 {dimension_numbers = #tpu.dot_dimension_numbers<[1], [0], [0], [1], [0, 0, 1, 1], [], []>} : vector<64x16xf32>, vector<16x16xf32>, vector<64x16xf32> -> vector<64x16xf32>
    %547 = arith.mulf %546, %74 : vector<64x16xf32>
    %cst_145 = arith.constant dense<0.000000e+00> : vector<16x64xf32>
    %548 = tpu.matmul %544, %547, %cst_145 {dimension_numbers = #tpu.dot_dimension_numbers<[1], [1], [0], [0], [0, 0, 1, 0], [], []>} : vector<16x16xf32>, vector<64x16xf32>, vector<16x64xf32> -> vector<16x64xf32>
    %cst_146 = arith.constant 0.353553385 : f32
    %549 = vector.broadcast %cst_146 : f32 to vector<16x64xf32>
    %550 = arith.mulf %548, %549 : vector<16x64xf32>
    %551 = math.tanh %550 : vector<16x64xf32>
    %cst_147 = arith.constant dense<0.000000e+00> : vector<16x16xf32>
    %552 = tpu.matmul %551, %23, %cst_147 {dimension_numbers = #tpu.dot_dimension_numbers<[1], [0], [0], [1], [0, 0, 1, 1], [], []>} : vector<16x64xf32>, vector<64x16xf32>, vector<16x16xf32> -> vector<16x16xf32>
    %553 = arith.truncf %552 : vector<16x16xf32> to vector<16x16xbf16>
    %554 = arith.extf %553 : vector<16x16xbf16> to vector<16x16xf32>
    %cst_148 = arith.constant dense<0.000000e+00> : vector<16x16xf32>
    %555 = tpu.matmul %4, %554, %cst_148 {dimension_numbers = #tpu.dot_dimension_numbers<[1], [1], [0], [0], [0, 0, 1, 0], [], []>} : vector<16x16xf32>, vector<16x16xf32>, vector<16x16xf32> -> vector<16x16xf32>
    %556 = arith.subf %552, %554 : vector<16x16xf32>
    %cst_149 = arith.constant dense<0.000000e+00> : vector<16x16xf32>
    %557 = tpu.matmul %4, %556, %cst_149 {dimension_numbers = #tpu.dot_dimension_numbers<[1], [1], [0], [0], [0, 0, 1, 0], [], []>} : vector<16x16xf32>, vector<16x16xf32>, vector<16x16xf32> -> vector<16x16xf32>
    %558 = arith.addf %555, %557 : vector<16x16xf32>
    %559 = arith.addf %552, %558 : vector<16x16xf32>
    %cst_150 = arith.constant 1.250000e-01 : f32
    %560 = vector.broadcast %cst_150 : f32 to vector<16x16xf32>
    %561 = arith.mulf %559, %560 : vector<16x16xf32>
    %c0_151 = arith.constant 0 : index
    %c0_152 = arith.constant 0 : index
    %562 = vector.load %arg5[%c0_151, %c0_152] : memref<137x8xf32, #tpu.memory_space<vmem>>, vector<40x8xf32>
    %cst_153 = arith.constant dense<0.000000e+00> : vector<16x8xf32>
    %563 = tpu.matmul %543, %562, %cst_153 {dimension_numbers = #tpu.dot_dimension_numbers<[1], [0], [0], [1], [0, 0, 1, 1], [], []>} : vector<16x40xf32>, vector<40x8xf32>, vector<16x8xf32> -> vector<16x8xf32>
    %c1_154 = arith.constant 1 : index
    %c1_155 = arith.constant 1 : index
    %c0_156 = arith.constant 0 : index
    %c0_157 = arith.constant 0 : index
    %564 = vector.load %arg2[%c1_154, %c1_155, %c0_156, %c0_157] : memref<2x3x16x16xf32, #tpu.memory_space<vmem>>, vector<1x1x16x16xf32>
    %565 = vector.shape_cast %564 : vector<1x1x16x16xf32> to vector<16x16xf32>
    %cst_158 = arith.constant 1.000000e+00 : f32
    %566 = vector.broadcast %cst_158 : f32 to vector<16x16xf32>
    %567 = arith.select %2, %566, %565 : vector<16x16xi1>, vector<16x16xf32>
    %cst_159 = arith.constant dense<0.000000e+00> : vector<16xf32>
    %568 = vector.multi_reduction <add>, %567, %cst_159 [1] : vector<16x16xf32> to vector<16xf32>
    %569 = vector.shape_cast %568 : vector<16xf32> to vector<16x1xf32>
    %cst_160 = arith.constant 1.000000e+00 : f32
    %570 = vector.broadcast %cst_160 : f32 to vector<16x1xf32>
    %571 = arith.maximumf %569, %570 : vector<16x1xf32>
    %572 = math.rsqrt %571 : vector<16x1xf32>
    %c1_161 = arith.constant 1 : index
    %c0_162 = arith.constant 0 : index
    %c0_163 = arith.constant 0 : index
    %573 = vector.load %arg4[%c1_161, %c0_162, %c0_163] : memref<3x5x40xf32, #tpu.memory_space<vmem>>, vector<1x5x40xf32>
    %574 = vector.shape_cast %573 : vector<1x5x40xf32> to vector<5x40xf32>
    %575 = vector.extract_strided_slice %574 {offsets = [0, 0], sizes = [4, 40], strides = [1, 1]} : vector<5x40xf32> to vector<4x40xf32>
    %cst_164 = arith.constant dense<0.000000e+00> : vector<16x40xf32>
    %576 = tpu.matmul %522, %575, %cst_164 {dimension_numbers = #tpu.dot_dimension_numbers<[1], [0], [0], [1], [0, 0, 1, 1], [], []>} : vector<16x4xf32>, vector<4x40xf32>, vector<16x40xf32> -> vector<16x40xf32>
    %577 = vector.broadcast %572 : vector<16x1xf32> to vector<16x40xf32>
    %578 = arith.mulf %577, %576 : vector<16x40xf32>
    %cst_165 = arith.constant dense<0.000000e+00> : vector<16x40xf32>
    %579 = tpu.matmul %567, %578, %cst_165 {dimension_numbers = #tpu.dot_dimension_numbers<[1], [0], [0], [1], [0, 0, 1, 1], [], []>} : vector<16x16xf32>, vector<16x40xf32>, vector<16x40xf32> -> vector<16x40xf32>
    %580 = vector.broadcast %572 : vector<16x1xf32> to vector<16x40xf32>
    %581 = arith.mulf %580, %579 : vector<16x40xf32>
    %582 = vector.extract_strided_slice %574 {offsets = [4, 0], sizes = [1, 40], strides = [1, 1]} : vector<5x40xf32> to vector<1x40xf32>
    %583 = vector.broadcast %582 : vector<1x40xf32> to vector<16x40xf32>
    %584 = arith.addf %581, %583 : vector<16x40xf32>
    %585 = vector.extract_strided_slice %584 {offsets = [0, 0], sizes = [16, 16], strides = [1, 1]} : vector<16x40xf32> to vector<16x16xf32>
    %586 = vector.extract_strided_slice %584 {offsets = [0, 16], sizes = [16, 16], strides = [1, 1]} : vector<16x40xf32> to vector<16x16xf32>
    %cst_166 = arith.constant dense<0.000000e+00> : vector<64x16xf32>
    %587 = tpu.matmul %23, %586, %cst_166 {dimension_numbers = #tpu.dot_dimension_numbers<[1], [0], [0], [1], [0, 0, 1, 1], [], []>} : vector<64x16xf32>, vector<16x16xf32>, vector<64x16xf32> -> vector<64x16xf32>
    %588 = arith.mulf %587, %74 : vector<64x16xf32>
    %cst_167 = arith.constant dense<0.000000e+00> : vector<16x64xf32>
    %589 = tpu.matmul %585, %588, %cst_167 {dimension_numbers = #tpu.dot_dimension_numbers<[1], [1], [0], [0], [0, 0, 1, 0], [], []>} : vector<16x16xf32>, vector<64x16xf32>, vector<16x64xf32> -> vector<16x64xf32>
    %cst_168 = arith.constant 0.353553385 : f32
    %590 = vector.broadcast %cst_168 : f32 to vector<16x64xf32>
    %591 = arith.mulf %589, %590 : vector<16x64xf32>
    %592 = math.tanh %591 : vector<16x64xf32>
    %cst_169 = arith.constant dense<0.000000e+00> : vector<16x16xf32>
    %593 = tpu.matmul %592, %23, %cst_169 {dimension_numbers = #tpu.dot_dimension_numbers<[1], [0], [0], [1], [0, 0, 1, 1], [], []>} : vector<16x64xf32>, vector<64x16xf32>, vector<16x16xf32> -> vector<16x16xf32>
    %594 = arith.truncf %593 : vector<16x16xf32> to vector<16x16xbf16>
    %595 = arith.extf %594 : vector<16x16xbf16> to vector<16x16xf32>
    %cst_170 = arith.constant dense<0.000000e+00> : vector<16x16xf32>
    %596 = tpu.matmul %4, %595, %cst_170 {dimension_numbers = #tpu.dot_dimension_numbers<[1], [1], [0], [0], [0, 0, 1, 0], [], []>} : vector<16x16xf32>, vector<16x16xf32>, vector<16x16xf32> -> vector<16x16xf32>
    %597 = arith.subf %593, %595 : vector<16x16xf32>
    %cst_171 = arith.constant dense<0.000000e+00> : vector<16x16xf32>
    %598 = tpu.matmul %4, %597, %cst_171 {dimension_numbers = #tpu.dot_dimension_numbers<[1], [1], [0], [0], [0, 0, 1, 0], [], []>} : vector<16x16xf32>, vector<16x16xf32>, vector<16x16xf32> -> vector<16x16xf32>
    %599 = arith.addf %596, %598 : vector<16x16xf32>
    %600 = arith.addf %593, %599 : vector<16x16xf32>
    %cst_172 = arith.constant 1.250000e-01 : f32
    %601 = vector.broadcast %cst_172 : f32 to vector<16x16xf32>
    %602 = arith.mulf %600, %601 : vector<16x16xf32>
    %c40_173 = arith.constant 40 : index
    %c0_174 = arith.constant 0 : index
    %603 = vector.load %arg5[%c40_173, %c0_174] : memref<137x8xf32, #tpu.memory_space<vmem>>, vector<40x8xf32>
    %cst_175 = arith.constant dense<0.000000e+00> : vector<16x8xf32>
    %604 = tpu.matmul %584, %603, %cst_175 {dimension_numbers = #tpu.dot_dimension_numbers<[1], [0], [0], [1], [0, 0, 1, 1], [], []>} : vector<16x40xf32>, vector<40x8xf32>, vector<16x8xf32> -> vector<16x8xf32>
    %605 = arith.addf %563, %604 : vector<16x8xf32>
    %c1_176 = arith.constant 1 : index
    %c2_177 = arith.constant 2 : index
    %c0_178 = arith.constant 0 : index
    %c0_179 = arith.constant 0 : index
    %606 = vector.load %arg2[%c1_176, %c2_177, %c0_178, %c0_179] : memref<2x3x16x16xf32, #tpu.memory_space<vmem>>, vector<1x1x16x16xf32>
    %607 = vector.shape_cast %606 : vector<1x1x16x16xf32> to vector<16x16xf32>
    %cst_180 = arith.constant 1.000000e+00 : f32
    %608 = vector.broadcast %cst_180 : f32 to vector<16x16xf32>
    %609 = arith.select %2, %608, %607 : vector<16x16xi1>, vector<16x16xf32>
    %cst_181 = arith.constant dense<0.000000e+00> : vector<16xf32>
    %610 = vector.multi_reduction <add>, %609, %cst_181 [1] : vector<16x16xf32> to vector<16xf32>
    %611 = vector.shape_cast %610 : vector<16xf32> to vector<16x1xf32>
    %cst_182 = arith.constant 1.000000e+00 : f32
    %612 = vector.broadcast %cst_182 : f32 to vector<16x1xf32>
    %613 = arith.maximumf %611, %612 : vector<16x1xf32>
    %614 = math.rsqrt %613 : vector<16x1xf32>
    %c2_183 = arith.constant 2 : index
    %c0_184 = arith.constant 0 : index
    %c0_185 = arith.constant 0 : index
    %615 = vector.load %arg4[%c2_183, %c0_184, %c0_185] : memref<3x5x40xf32, #tpu.memory_space<vmem>>, vector<1x5x40xf32>
    %616 = vector.shape_cast %615 : vector<1x5x40xf32> to vector<5x40xf32>
    %617 = vector.extract_strided_slice %616 {offsets = [0, 0], sizes = [4, 40], strides = [1, 1]} : vector<5x40xf32> to vector<4x40xf32>
    %cst_186 = arith.constant dense<0.000000e+00> : vector<16x40xf32>
    %618 = tpu.matmul %522, %617, %cst_186 {dimension_numbers = #tpu.dot_dimension_numbers<[1], [0], [0], [1], [0, 0, 1, 1], [], []>} : vector<16x4xf32>, vector<4x40xf32>, vector<16x40xf32> -> vector<16x40xf32>
    %619 = vector.broadcast %614 : vector<16x1xf32> to vector<16x40xf32>
    %620 = arith.mulf %619, %618 : vector<16x40xf32>
    %cst_187 = arith.constant dense<0.000000e+00> : vector<16x40xf32>
    %621 = tpu.matmul %609, %620, %cst_187 {dimension_numbers = #tpu.dot_dimension_numbers<[1], [0], [0], [1], [0, 0, 1, 1], [], []>} : vector<16x16xf32>, vector<16x40xf32>, vector<16x40xf32> -> vector<16x40xf32>
    %622 = vector.broadcast %614 : vector<16x1xf32> to vector<16x40xf32>
    %623 = arith.mulf %622, %621 : vector<16x40xf32>
    %624 = vector.extract_strided_slice %616 {offsets = [4, 0], sizes = [1, 40], strides = [1, 1]} : vector<5x40xf32> to vector<1x40xf32>
    %625 = vector.broadcast %624 : vector<1x40xf32> to vector<16x40xf32>
    %626 = arith.addf %623, %625 : vector<16x40xf32>
    %627 = vector.extract_strided_slice %626 {offsets = [0, 0], sizes = [16, 16], strides = [1, 1]} : vector<16x40xf32> to vector<16x16xf32>
    %628 = vector.extract_strided_slice %626 {offsets = [0, 16], sizes = [16, 16], strides = [1, 1]} : vector<16x40xf32> to vector<16x16xf32>
    %cst_188 = arith.constant dense<0.000000e+00> : vector<64x16xf32>
    %629 = tpu.matmul %23, %628, %cst_188 {dimension_numbers = #tpu.dot_dimension_numbers<[1], [0], [0], [1], [0, 0, 1, 1], [], []>} : vector<64x16xf32>, vector<16x16xf32>, vector<64x16xf32> -> vector<64x16xf32>
    %630 = arith.mulf %629, %74 : vector<64x16xf32>
    %cst_189 = arith.constant dense<0.000000e+00> : vector<16x64xf32>
    %631 = tpu.matmul %627, %630, %cst_189 {dimension_numbers = #tpu.dot_dimension_numbers<[1], [1], [0], [0], [0, 0, 1, 0], [], []>} : vector<16x16xf32>, vector<64x16xf32>, vector<16x64xf32> -> vector<16x64xf32>
    %cst_190 = arith.constant 0.353553385 : f32
    %632 = vector.broadcast %cst_190 : f32 to vector<16x64xf32>
    %633 = arith.mulf %631, %632 : vector<16x64xf32>
    %634 = math.tanh %633 : vector<16x64xf32>
    %cst_191 = arith.constant dense<0.000000e+00> : vector<16x16xf32>
    %635 = tpu.matmul %634, %23, %cst_191 {dimension_numbers = #tpu.dot_dimension_numbers<[1], [0], [0], [1], [0, 0, 1, 1], [], []>} : vector<16x64xf32>, vector<64x16xf32>, vector<16x16xf32> -> vector<16x16xf32>
    %636 = arith.truncf %635 : vector<16x16xf32> to vector<16x16xbf16>
    %637 = arith.extf %636 : vector<16x16xbf16> to vector<16x16xf32>
    %cst_192 = arith.constant dense<0.000000e+00> : vector<16x16xf32>
    %638 = tpu.matmul %4, %637, %cst_192 {dimension_numbers = #tpu.dot_dimension_numbers<[1], [1], [0], [0], [0, 0, 1, 0], [], []>} : vector<16x16xf32>, vector<16x16xf32>, vector<16x16xf32> -> vector<16x16xf32>
    %639 = arith.subf %635, %637 : vector<16x16xf32>
    %cst_193 = arith.constant dense<0.000000e+00> : vector<16x16xf32>
    %640 = tpu.matmul %4, %639, %cst_193 {dimension_numbers = #tpu.dot_dimension_numbers<[1], [1], [0], [0], [0, 0, 1, 0], [], []>} : vector<16x16xf32>, vector<16x16xf32>, vector<16x16xf32> -> vector<16x16xf32>
    %641 = arith.addf %638, %640 : vector<16x16xf32>
    %642 = arith.addf %635, %641 : vector<16x16xf32>
    %cst_194 = arith.constant 1.250000e-01 : f32
    %643 = vector.broadcast %cst_194 : f32 to vector<16x16xf32>
    %644 = arith.mulf %642, %643 : vector<16x16xf32>
    %c80_195 = arith.constant 80 : index
    %c0_196 = arith.constant 0 : index
    %645 = vector.load %arg5[%c80_195, %c0_196] : memref<137x8xf32, #tpu.memory_space<vmem>>, vector<40x8xf32>
    %cst_197 = arith.constant dense<0.000000e+00> : vector<16x8xf32>
    %646 = tpu.matmul %626, %645, %cst_197 {dimension_numbers = #tpu.dot_dimension_numbers<[1], [0], [0], [1], [0, 0, 1, 1], [], []>} : vector<16x40xf32>, vector<40x8xf32>, vector<16x8xf32> -> vector<16x8xf32>
    %647 = arith.addf %605, %646 : vector<16x8xf32>
    %648 = vector.broadcast %75 : vector<1x8xf32> to vector<16x8xf32>
    %649 = arith.addf %647, %648 : vector<16x8xf32>
    %cst_198 = arith.constant 0.000000e+00 : f32
    %650 = vector.broadcast %cst_198 : f32 to vector<16x8xf32>
    %651 = arith.cmpf ogt, %649, %650 : vector<16x8xf32>
    %cst_199 = arith.constant 0.000000e+00 : f32
    %652 = vector.broadcast %cst_199 : f32 to vector<16x8xf32>
    %653 = arith.minimumf %649, %652 : vector<16x8xf32>
    %654 = math.exp %653 : vector<16x8xf32>
    %cst_200 = arith.constant 1.000000e+00 : f32
    %655 = vector.broadcast %cst_200 : f32 to vector<16x8xf32>
    %656 = arith.subf %654, %655 : vector<16x8xf32>
    %657 = arith.select %651, %649, %656 : vector<16x8xi1>, vector<16x8xf32>
    %cst_201 = arith.constant dense<0.000000e+00> : vector<16x8xf32>
    %658 = tpu.matmul %657, %76, %cst_201 {dimension_numbers = #tpu.dot_dimension_numbers<[1], [0], [0], [1], [0, 0, 1, 1], [], []>} : vector<16x8xf32>, vector<8x8xf32>, vector<16x8xf32> -> vector<16x8xf32>
    %659 = vector.broadcast %77 : vector<1x8xf32> to vector<16x8xf32>
    %660 = arith.addf %658, %659 : vector<16x8xf32>
    %661 = vector.broadcast %520 : vector<16x1xf32> to vector<16x8xf32>
    %662 = arith.mulf %660, %661 : vector<16x8xf32>
    %663 = math.tanh %662 : vector<16x8xf32>
    %c1_202 = arith.constant 1 : index
    %c0_203 = arith.constant 0 : index
    %c0_204 = arith.constant 0 : index
    %664 = vector.load %arg7[%c1_202, %c0_203, %c0_204] : memref<2x16x8xf32, #tpu.memory_space<vmem>>, vector<1x16x8xf32>
    %665 = vector.shape_cast %664 : vector<1x16x8xf32> to vector<16x8xf32>
    %666 = vector.shape_cast %663 : vector<16x8xf32> to vector<1x16x8xf32>
    tpu.vector_store %arg7[%c1_202, %c0_203, %c0_204], %666 {strides = array<i32>} : memref<2x16x8xf32, #tpu.memory_space<vmem>>, vector<1x16x8xf32>,
    %cst_205 = arith.constant 0.000000e+00 : f32
    %667 = vector.broadcast %cst_205 : f32 to vector<16x16xf32>
    %cst_206 = arith.constant 0.000000e+00 : f32
    %668 = vector.broadcast %cst_206 : f32 to vector<16x16xf32>
    %c0_207 = arith.constant 0 : index
    %669 = memref.load %arg6[%c0_207] : memref<56xf32, #tpu.memory_space<smem>>
    %670 = vector.broadcast %669 : f32 to vector<16x16xf32>
    %671 = arith.mulf %561, %670 : vector<16x16xf32>
    %c6_208 = arith.constant 6 : index
    %672 = memref.load %arg6[%c6_208] : memref<56xf32, #tpu.memory_space<smem>>
    %673 = vector.broadcast %672 : f32 to vector<16x16xf32>
    %674 = arith.mulf %602, %673 : vector<16x16xf32>
    %675 = arith.addf %671, %674 : vector<16x16xf32>
    %c12_209 = arith.constant 12 : index
    %676 = memref.load %arg6[%c12_209] : memref<56xf32, #tpu.memory_space<smem>>
    %677 = vector.broadcast %676 : f32 to vector<16x16xf32>
    %678 = arith.mulf %644, %677 : vector<16x16xf32>
    %679 = arith.addf %675, %678 : vector<16x16xf32>
    %c18_210 = arith.constant 18 : index
    %680 = memref.load %arg6[%c18_210] : memref<56xf32, #tpu.memory_space<smem>>
    %681 = vector.broadcast %680 : f32 to vector<16x16xf32>
    %682 = arith.mulf %524, %681 : vector<16x16xf32>
    %683 = arith.addf %679, %682 : vector<16x16xf32>
    %c24_211 = arith.constant 24 : index
    %684 = memref.load %arg6[%c24_211] : memref<56xf32, #tpu.memory_space<smem>>
    %685 = vector.broadcast %684 : f32 to vector<16x16xf32>
    %686 = arith.mulf %565, %685 : vector<16x16xf32>
    %687 = arith.addf %683, %686 : vector<16x16xf32>
    %c30_212 = arith.constant 30 : index
    %688 = memref.load %arg6[%c30_212] : memref<56xf32, #tpu.memory_space<smem>>
    %689 = vector.broadcast %688 : f32 to vector<16x16xf32>
    %690 = arith.mulf %607, %689 : vector<16x16xf32>
    %691 = arith.addf %687, %690 : vector<16x16xf32>
    %c36_213 = arith.constant 36 : index
    %692 = memref.load %arg6[%c36_213] : memref<56xf32, #tpu.memory_space<smem>>
    %693 = vector.broadcast %692 : f32 to vector<16x16xf32>
    %694 = arith.addf %691, %693 : vector<16x16xf32>
    %cst_214 = arith.constant 0.000000e+00 : f32
    %695 = vector.broadcast %cst_214 : f32 to vector<16x16xf32>
    %696 = arith.cmpf ogt, %694, %695 : vector<16x16xf32>
    %cst_215 = arith.constant 0.000000e+00 : f32
    %697 = vector.broadcast %cst_215 : f32 to vector<16x16xf32>
    %698 = arith.minimumf %694, %697 : vector<16x16xf32>
    %699 = math.exp %698 : vector<16x16xf32>
    %cst_216 = arith.constant 1.000000e+00 : f32
    %700 = vector.broadcast %cst_216 : f32 to vector<16x16xf32>
    %701 = arith.subf %699, %700 : vector<16x16xf32>
    %702 = arith.select %696, %694, %701 : vector<16x16xi1>, vector<16x16xf32>
    %c42_217 = arith.constant 42 : index
    %703 = memref.load %arg6[%c42_217] : memref<56xf32, #tpu.memory_space<smem>>
    %704 = vector.broadcast %703 : f32 to vector<16x16xf32>
    %705 = arith.mulf %702, %704 : vector<16x16xf32>
    %706 = arith.addf %667, %705 : vector<16x16xf32>
    %c43_218 = arith.constant 43 : index
    %707 = memref.load %arg6[%c43_218] : memref<56xf32, #tpu.memory_space<smem>>
    %708 = vector.broadcast %707 : f32 to vector<16x16xf32>
    %709 = arith.mulf %702, %708 : vector<16x16xf32>
    %710 = arith.addf %668, %709 : vector<16x16xf32>
    %c1_219 = arith.constant 1 : index
    %711 = memref.load %arg6[%c1_219] : memref<56xf32, #tpu.memory_space<smem>>
    %712 = vector.broadcast %711 : f32 to vector<16x16xf32>
    %713 = arith.mulf %561, %712 : vector<16x16xf32>
    %c7_220 = arith.constant 7 : index
    %714 = memref.load %arg6[%c7_220] : memref<56xf32, #tpu.memory_space<smem>>
    %715 = vector.broadcast %714 : f32 to vector<16x16xf32>
    %716 = arith.mulf %602, %715 : vector<16x16xf32>
    %717 = arith.addf %713, %716 : vector<16x16xf32>
    %c13_221 = arith.constant 13 : index
    %718 = memref.load %arg6[%c13_221] : memref<56xf32, #tpu.memory_space<smem>>
    %719 = vector.broadcast %718 : f32 to vector<16x16xf32>
    %720 = arith.mulf %644, %719 : vector<16x16xf32>
    %721 = arith.addf %717, %720 : vector<16x16xf32>
    %c19_222 = arith.constant 19 : index
    %722 = memref.load %arg6[%c19_222] : memref<56xf32, #tpu.memory_space<smem>>
    %723 = vector.broadcast %722 : f32 to vector<16x16xf32>
    %724 = arith.mulf %524, %723 : vector<16x16xf32>
    %725 = arith.addf %721, %724 : vector<16x16xf32>
    %c25_223 = arith.constant 25 : index
    %726 = memref.load %arg6[%c25_223] : memref<56xf32, #tpu.memory_space<smem>>
    %727 = vector.broadcast %726 : f32 to vector<16x16xf32>
    %728 = arith.mulf %565, %727 : vector<16x16xf32>
    %729 = arith.addf %725, %728 : vector<16x16xf32>
    %c31_224 = arith.constant 31 : index
    %730 = memref.load %arg6[%c31_224] : memref<56xf32, #tpu.memory_space<smem>>
    %731 = vector.broadcast %730 : f32 to vector<16x16xf32>
    %732 = arith.mulf %607, %731 : vector<16x16xf32>
    %733 = arith.addf %729, %732 : vector<16x16xf32>
    %c37_225 = arith.constant 37 : index
    %734 = memref.load %arg6[%c37_225] : memref<56xf32, #tpu.memory_space<smem>>
    %735 = vector.broadcast %734 : f32 to vector<16x16xf32>
    %736 = arith.addf %733, %735 : vector<16x16xf32>
    %cst_226 = arith.constant 0.000000e+00 : f32
    %737 = vector.broadcast %cst_226 : f32 to vector<16x16xf32>
    %738 = arith.cmpf ogt, %736, %737 : vector<16x16xf32>
    %cst_227 = arith.constant 0.000000e+00 : f32
    %739 = vector.broadcast %cst_227 : f32 to vector<16x16xf32>
    %740 = arith.minimumf %736, %739 : vector<16x16xf32>
    %741 = math.exp %740 : vector<16x16xf32>
    %cst_228 = arith.constant 1.000000e+00 : f32
    %742 = vector.broadcast %cst_228 : f32 to vector<16x16xf32>
    %743 = arith.subf %741, %742 : vector<16x16xf32>
    %744 = arith.select %738, %736, %743 : vector<16x16xi1>, vector<16x16xf32>
    %c44_229 = arith.constant 44 : index
    %745 = memref.load %arg6[%c44_229] : memref<56xf32, #tpu.memory_space<smem>>
    %746 = vector.broadcast %745 : f32 to vector<16x16xf32>
    %747 = arith.mulf %744, %746 : vector<16x16xf32>
    %748 = arith.addf %706, %747 : vector<16x16xf32>
    %c45_230 = arith.constant 45 : index
    %749 = memref.load %arg6[%c45_230] : memref<56xf32, #tpu.memory_space<smem>>
    %750 = vector.broadcast %749 : f32 to vector<16x16xf32>
    %751 = arith.mulf %744, %750 : vector<16x16xf32>
    %752 = arith.addf %710, %751 : vector<16x16xf32>
    %c2_231 = arith.constant 2 : index
    %753 = memref.load %arg6[%c2_231] : memref<56xf32, #tpu.memory_space<smem>>
    %754 = vector.broadcast %753 : f32 to vector<16x16xf32>
    %755 = arith.mulf %561, %754 : vector<16x16xf32>
    %c8_232 = arith.constant 8 : index
    %756 = memref.load %arg6[%c8_232] : memref<56xf32, #tpu.memory_space<smem>>
    %757 = vector.broadcast %756 : f32 to vector<16x16xf32>
    %758 = arith.mulf %602, %757 : vector<16x16xf32>
    %759 = arith.addf %755, %758 : vector<16x16xf32>
    %c14_233 = arith.constant 14 : index
    %760 = memref.load %arg6[%c14_233] : memref<56xf32, #tpu.memory_space<smem>>
    %761 = vector.broadcast %760 : f32 to vector<16x16xf32>
    %762 = arith.mulf %644, %761 : vector<16x16xf32>
    %763 = arith.addf %759, %762 : vector<16x16xf32>
    %c20_234 = arith.constant 20 : index
    %764 = memref.load %arg6[%c20_234] : memref<56xf32, #tpu.memory_space<smem>>
    %765 = vector.broadcast %764 : f32 to vector<16x16xf32>
    %766 = arith.mulf %524, %765 : vector<16x16xf32>
    %767 = arith.addf %763, %766 : vector<16x16xf32>
    %c26_235 = arith.constant 26 : index
    %768 = memref.load %arg6[%c26_235] : memref<56xf32, #tpu.memory_space<smem>>
    %769 = vector.broadcast %768 : f32 to vector<16x16xf32>
    %770 = arith.mulf %565, %769 : vector<16x16xf32>
    %771 = arith.addf %767, %770 : vector<16x16xf32>
    %c32_236 = arith.constant 32 : index
    %772 = memref.load %arg6[%c32_236] : memref<56xf32, #tpu.memory_space<smem>>
    %773 = vector.broadcast %772 : f32 to vector<16x16xf32>
    %774 = arith.mulf %607, %773 : vector<16x16xf32>
    %775 = arith.addf %771, %774 : vector<16x16xf32>
    %c38_237 = arith.constant 38 : index
    %776 = memref.load %arg6[%c38_237] : memref<56xf32, #tpu.memory_space<smem>>
    %777 = vector.broadcast %776 : f32 to vector<16x16xf32>
    %778 = arith.addf %775, %777 : vector<16x16xf32>
    %cst_238 = arith.constant 0.000000e+00 : f32
    %779 = vector.broadcast %cst_238 : f32 to vector<16x16xf32>
    %780 = arith.cmpf ogt, %778, %779 : vector<16x16xf32>
    %cst_239 = arith.constant 0.000000e+00 : f32
    %781 = vector.broadcast %cst_239 : f32 to vector<16x16xf32>
    %782 = arith.minimumf %778, %781 : vector<16x16xf32>
    %783 = math.exp %782 : vector<16x16xf32>
    %cst_240 = arith.constant 1.000000e+00 : f32
    %784 = vector.broadcast %cst_240 : f32 to vector<16x16xf32>
    %785 = arith.subf %783, %784 : vector<16x16xf32>
    %786 = arith.select %780, %778, %785 : vector<16x16xi1>, vector<16x16xf32>
    %c46_241 = arith.constant 46 : index
    %787 = memref.load %arg6[%c46_241] : memref<56xf32, #tpu.memory_space<smem>>
    %788 = vector.broadcast %787 : f32 to vector<16x16xf32>
    %789 = arith.mulf %786, %788 : vector<16x16xf32>
    %790 = arith.addf %748, %789 : vector<16x16xf32>
    %c47_242 = arith.constant 47 : index
    %791 = memref.load %arg6[%c47_242] : memref<56xf32, #tpu.memory_space<smem>>
    %792 = vector.broadcast %791 : f32 to vector<16x16xf32>
    %793 = arith.mulf %786, %792 : vector<16x16xf32>
    %794 = arith.addf %752, %793 : vector<16x16xf32>
    %c3_243 = arith.constant 3 : index
    %795 = memref.load %arg6[%c3_243] : memref<56xf32, #tpu.memory_space<smem>>
    %796 = vector.broadcast %795 : f32 to vector<16x16xf32>
    %797 = arith.mulf %561, %796 : vector<16x16xf32>
    %c9_244 = arith.constant 9 : index
    %798 = memref.load %arg6[%c9_244] : memref<56xf32, #tpu.memory_space<smem>>
    %799 = vector.broadcast %798 : f32 to vector<16x16xf32>
    %800 = arith.mulf %602, %799 : vector<16x16xf32>
    %801 = arith.addf %797, %800 : vector<16x16xf32>
    %c15_245 = arith.constant 15 : index
    %802 = memref.load %arg6[%c15_245] : memref<56xf32, #tpu.memory_space<smem>>
    %803 = vector.broadcast %802 : f32 to vector<16x16xf32>
    %804 = arith.mulf %644, %803 : vector<16x16xf32>
    %805 = arith.addf %801, %804 : vector<16x16xf32>
    %c21_246 = arith.constant 21 : index
    %806 = memref.load %arg6[%c21_246] : memref<56xf32, #tpu.memory_space<smem>>
    %807 = vector.broadcast %806 : f32 to vector<16x16xf32>
    %808 = arith.mulf %524, %807 : vector<16x16xf32>
    %809 = arith.addf %805, %808 : vector<16x16xf32>
    %c27_247 = arith.constant 27 : index
    %810 = memref.load %arg6[%c27_247] : memref<56xf32, #tpu.memory_space<smem>>
    %811 = vector.broadcast %810 : f32 to vector<16x16xf32>
    %812 = arith.mulf %565, %811 : vector<16x16xf32>
    %813 = arith.addf %809, %812 : vector<16x16xf32>
    %c33_248 = arith.constant 33 : index
    %814 = memref.load %arg6[%c33_248] : memref<56xf32, #tpu.memory_space<smem>>
    %815 = vector.broadcast %814 : f32 to vector<16x16xf32>
    %816 = arith.mulf %607, %815 : vector<16x16xf32>
    %817 = arith.addf %813, %816 : vector<16x16xf32>
    %c39_249 = arith.constant 39 : index
    %818 = memref.load %arg6[%c39_249] : memref<56xf32, #tpu.memory_space<smem>>
    %819 = vector.broadcast %818 : f32 to vector<16x16xf32>
    %820 = arith.addf %817, %819 : vector<16x16xf32>
    %cst_250 = arith.constant 0.000000e+00 : f32
    %821 = vector.broadcast %cst_250 : f32 to vector<16x16xf32>
    %822 = arith.cmpf ogt, %820, %821 : vector<16x16xf32>
    %cst_251 = arith.constant 0.000000e+00 : f32
    %823 = vector.broadcast %cst_251 : f32 to vector<16x16xf32>
    %824 = arith.minimumf %820, %823 : vector<16x16xf32>
    %825 = math.exp %824 : vector<16x16xf32>
    %cst_252 = arith.constant 1.000000e+00 : f32
    %826 = vector.broadcast %cst_252 : f32 to vector<16x16xf32>
    %827 = arith.subf %825, %826 : vector<16x16xf32>
    %828 = arith.select %822, %820, %827 : vector<16x16xi1>, vector<16x16xf32>
    %c48_253 = arith.constant 48 : index
    %829 = memref.load %arg6[%c48_253] : memref<56xf32, #tpu.memory_space<smem>>
    %830 = vector.broadcast %829 : f32 to vector<16x16xf32>
    %831 = arith.mulf %828, %830 : vector<16x16xf32>
    %832 = arith.addf %790, %831 : vector<16x16xf32>
    %c49_254 = arith.constant 49 : index
    %833 = memref.load %arg6[%c49_254] : memref<56xf32, #tpu.memory_space<smem>>
    %834 = vector.broadcast %833 : f32 to vector<16x16xf32>
    %835 = arith.mulf %828, %834 : vector<16x16xf32>
    %836 = arith.addf %794, %835 : vector<16x16xf32>
    %c4_255 = arith.constant 4 : index
    %837 = memref.load %arg6[%c4_255] : memref<56xf32, #tpu.memory_space<smem>>
    %838 = vector.broadcast %837 : f32 to vector<16x16xf32>
    %839 = arith.mulf %561, %838 : vector<16x16xf32>
    %c10_256 = arith.constant 10 : index
    %840 = memref.load %arg6[%c10_256] : memref<56xf32, #tpu.memory_space<smem>>
    %841 = vector.broadcast %840 : f32 to vector<16x16xf32>
    %842 = arith.mulf %602, %841 : vector<16x16xf32>
    %843 = arith.addf %839, %842 : vector<16x16xf32>
    %c16_257 = arith.constant 16 : index
    %844 = memref.load %arg6[%c16_257] : memref<56xf32, #tpu.memory_space<smem>>
    %845 = vector.broadcast %844 : f32 to vector<16x16xf32>
    %846 = arith.mulf %644, %845 : vector<16x16xf32>
    %847 = arith.addf %843, %846 : vector<16x16xf32>
    %c22_258 = arith.constant 22 : index
    %848 = memref.load %arg6[%c22_258] : memref<56xf32, #tpu.memory_space<smem>>
    %849 = vector.broadcast %848 : f32 to vector<16x16xf32>
    %850 = arith.mulf %524, %849 : vector<16x16xf32>
    %851 = arith.addf %847, %850 : vector<16x16xf32>
    %c28_259 = arith.constant 28 : index
    %852 = memref.load %arg6[%c28_259] : memref<56xf32, #tpu.memory_space<smem>>
    %853 = vector.broadcast %852 : f32 to vector<16x16xf32>
    %854 = arith.mulf %565, %853 : vector<16x16xf32>
    %855 = arith.addf %851, %854 : vector<16x16xf32>
    %c34_260 = arith.constant 34 : index
    %856 = memref.load %arg6[%c34_260] : memref<56xf32, #tpu.memory_space<smem>>
    %857 = vector.broadcast %856 : f32 to vector<16x16xf32>
    %858 = arith.mulf %607, %857 : vector<16x16xf32>
    %859 = arith.addf %855, %858 : vector<16x16xf32>
    %c40_261 = arith.constant 40 : index
    %860 = memref.load %arg6[%c40_261] : memref<56xf32, #tpu.memory_space<smem>>
    %861 = vector.broadcast %860 : f32 to vector<16x16xf32>
    %862 = arith.addf %859, %861 : vector<16x16xf32>
    %cst_262 = arith.constant 0.000000e+00 : f32
    %863 = vector.broadcast %cst_262 : f32 to vector<16x16xf32>
    %864 = arith.cmpf ogt, %862, %863 : vector<16x16xf32>
    %cst_263 = arith.constant 0.000000e+00 : f32
    %865 = vector.broadcast %cst_263 : f32 to vector<16x16xf32>
    %866 = arith.minimumf %862, %865 : vector<16x16xf32>
    %867 = math.exp %866 : vector<16x16xf32>
    %cst_264 = arith.constant 1.000000e+00 : f32
    %868 = vector.broadcast %cst_264 : f32 to vector<16x16xf32>
    %869 = arith.subf %867, %868 : vector<16x16xf32>
    %870 = arith.select %864, %862, %869 : vector<16x16xi1>, vector<16x16xf32>
    %c50_265 = arith.constant 50 : index
    %871 = memref.load %arg6[%c50_265] : memref<56xf32, #tpu.memory_space<smem>>
    %872 = vector.broadcast %871 : f32 to vector<16x16xf32>
    %873 = arith.mulf %870, %872 : vector<16x16xf32>
    %874 = arith.addf %832, %873 : vector<16x16xf32>
    %c51_266 = arith.constant 51 : index
    %875 = memref.load %arg6[%c51_266] : memref<56xf32, #tpu.memory_space<smem>>
    %876 = vector.broadcast %875 : f32 to vector<16x16xf32>
    %877 = arith.mulf %870, %876 : vector<16x16xf32>
    %878 = arith.addf %836, %877 : vector<16x16xf32>
    %c5_267 = arith.constant 5 : index
    %879 = memref.load %arg6[%c5_267] : memref<56xf32, #tpu.memory_space<smem>>
    %880 = vector.broadcast %879 : f32 to vector<16x16xf32>
    %881 = arith.mulf %561, %880 : vector<16x16xf32>
    %c11_268 = arith.constant 11 : index
    %882 = memref.load %arg6[%c11_268] : memref<56xf32, #tpu.memory_space<smem>>
    %883 = vector.broadcast %882 : f32 to vector<16x16xf32>
    %884 = arith.mulf %602, %883 : vector<16x16xf32>
    %885 = arith.addf %881, %884 : vector<16x16xf32>
    %c17_269 = arith.constant 17 : index
    %886 = memref.load %arg6[%c17_269] : memref<56xf32, #tpu.memory_space<smem>>
    %887 = vector.broadcast %886 : f32 to vector<16x16xf32>
    %888 = arith.mulf %644, %887 : vector<16x16xf32>
    %889 = arith.addf %885, %888 : vector<16x16xf32>
    %c23_270 = arith.constant 23 : index
    %890 = memref.load %arg6[%c23_270] : memref<56xf32, #tpu.memory_space<smem>>
    %891 = vector.broadcast %890 : f32 to vector<16x16xf32>
    %892 = arith.mulf %524, %891 : vector<16x16xf32>
    %893 = arith.addf %889, %892 : vector<16x16xf32>
    %c29_271 = arith.constant 29 : index
    %894 = memref.load %arg6[%c29_271] : memref<56xf32, #tpu.memory_space<smem>>
    %895 = vector.broadcast %894 : f32 to vector<16x16xf32>
    %896 = arith.mulf %565, %895 : vector<16x16xf32>
    %897 = arith.addf %893, %896 : vector<16x16xf32>
    %c35_272 = arith.constant 35 : index
    %898 = memref.load %arg6[%c35_272] : memref<56xf32, #tpu.memory_space<smem>>
    %899 = vector.broadcast %898 : f32 to vector<16x16xf32>
    %900 = arith.mulf %607, %899 : vector<16x16xf32>
    %901 = arith.addf %897, %900 : vector<16x16xf32>
    %c41_273 = arith.constant 41 : index
    %902 = memref.load %arg6[%c41_273] : memref<56xf32, #tpu.memory_space<smem>>
    %903 = vector.broadcast %902 : f32 to vector<16x16xf32>
    %904 = arith.addf %901, %903 : vector<16x16xf32>
    %cst_274 = arith.constant 0.000000e+00 : f32
    %905 = vector.broadcast %cst_274 : f32 to vector<16x16xf32>
    %906 = arith.cmpf ogt, %904, %905 : vector<16x16xf32>
    %cst_275 = arith.constant 0.000000e+00 : f32
    %907 = vector.broadcast %cst_275 : f32 to vector<16x16xf32>
    %908 = arith.minimumf %904, %907 : vector<16x16xf32>
    %909 = math.exp %908 : vector<16x16xf32>
    %cst_276 = arith.constant 1.000000e+00 : f32
    %910 = vector.broadcast %cst_276 : f32 to vector<16x16xf32>
    %911 = arith.subf %909, %910 : vector<16x16xf32>
    %912 = arith.select %906, %904, %911 : vector<16x16xi1>, vector<16x16xf32>
    %c52_277 = arith.constant 52 : index
    %913 = memref.load %arg6[%c52_277] : memref<56xf32, #tpu.memory_space<smem>>
    %914 = vector.broadcast %913 : f32 to vector<16x16xf32>
    %915 = arith.mulf %912, %914 : vector<16x16xf32>
    %916 = arith.addf %874, %915 : vector<16x16xf32>
    %c53_278 = arith.constant 53 : index
    %917 = memref.load %arg6[%c53_278] : memref<56xf32, #tpu.memory_space<smem>>
    %918 = vector.broadcast %917 : f32 to vector<16x16xf32>
    %919 = arith.mulf %912, %918 : vector<16x16xf32>
    %920 = arith.addf %878, %919 : vector<16x16xf32>
    %921 = vector.broadcast %520 : vector<16x1xf32> to vector<16x16xf32>
    %922 = vector.broadcast %516 : vector<1x16xf32> to vector<16x16xf32>
    %923 = arith.mulf %921, %922 : vector<16x16xf32>
    %c54_279 = arith.constant 54 : index
    %924 = memref.load %arg6[%c54_279] : memref<56xf32, #tpu.memory_space<smem>>
    %925 = vector.broadcast %924 : f32 to vector<16x16xf32>
    %926 = arith.addf %916, %925 : vector<16x16xf32>
    %927 = arith.truncf %926 : vector<16x16xf32> to vector<16x16xbf16>
    %928 = arith.extf %927 : vector<16x16xbf16> to vector<16x16xf32>
    %cst_280 = arith.constant dense<0.000000e+00> : vector<16x16xf32>
    %929 = tpu.matmul %4, %928, %cst_280 {dimension_numbers = #tpu.dot_dimension_numbers<[1], [1], [0], [0], [0, 0, 1, 0], [], []>} : vector<16x16xf32>, vector<16x16xf32>, vector<16x16xf32> -> vector<16x16xf32>
    %930 = arith.subf %926, %928 : vector<16x16xf32>
    %cst_281 = arith.constant dense<0.000000e+00> : vector<16x16xf32>
    %931 = tpu.matmul %4, %930, %cst_281 {dimension_numbers = #tpu.dot_dimension_numbers<[1], [1], [0], [0], [0, 0, 1, 0], [], []>} : vector<16x16xf32>, vector<16x16xf32>, vector<16x16xf32> -> vector<16x16xf32>
    %932 = arith.addf %929, %931 : vector<16x16xf32>
    %933 = arith.addf %926, %932 : vector<16x16xf32>
    %934 = arith.mulf %933, %923 : vector<16x16xf32>
    %c1_282 = arith.constant 1 : index
    %c0_283 = arith.constant 0 : index
    %c0_284 = arith.constant 0 : index
    %c0_285 = arith.constant 0 : index
    %935 = vector.load %arg8[%c1_282, %c0_283, %c0_284, %c0_285] : memref<2x2x16x16xf32, #tpu.memory_space<vmem>>, vector<1x1x16x16xf32>
    %936 = vector.shape_cast %935 : vector<1x1x16x16xf32> to vector<16x16xf32>
    %937 = vector.shape_cast %934 : vector<16x16xf32> to vector<1x1x16x16xf32>
    tpu.vector_store %arg8[%c1_282, %c0_283, %c0_284, %c0_285], %937 {strides = array<i32>} : memref<2x2x16x16xf32, #tpu.memory_space<vmem>>, vector<1x1x16x16xf32>,
    %c55_286 = arith.constant 55 : index
    %938 = memref.load %arg6[%c55_286] : memref<56xf32, #tpu.memory_space<smem>>
    %939 = vector.broadcast %938 : f32 to vector<16x16xf32>
    %940 = arith.addf %920, %939 : vector<16x16xf32>
    %941 = arith.truncf %940 : vector<16x16xf32> to vector<16x16xbf16>
    %942 = arith.extf %941 : vector<16x16xbf16> to vector<16x16xf32>
    %cst_287 = arith.constant dense<0.000000e+00> : vector<16x16xf32>
    %943 = tpu.matmul %4, %942, %cst_287 {dimension_numbers = #tpu.dot_dimension_numbers<[1], [1], [0], [0], [0, 0, 1, 0], [], []>} : vector<16x16xf32>, vector<16x16xf32>, vector<16x16xf32> -> vector<16x16xf32>
    %944 = arith.subf %940, %942 : vector<16x16xf32>
    %cst_288 = arith.constant dense<0.000000e+00> : vector<16x16xf32>
    %945 = tpu.matmul %4, %944, %cst_288 {dimension_numbers = #tpu.dot_dimension_numbers<[1], [1], [0], [0], [0, 0, 1, 0], [], []>} : vector<16x16xf32>, vector<16x16xf32>, vector<16x16xf32> -> vector<16x16xf32>
    %946 = arith.addf %943, %945 : vector<16x16xf32>
    %947 = arith.addf %940, %946 : vector<16x16xf32>
    %948 = arith.mulf %947, %923 : vector<16x16xf32>
    %c1_289 = arith.constant 1 : index
    %c1_290 = arith.constant 1 : index
    %c0_291 = arith.constant 0 : index
    %c0_292 = arith.constant 0 : index
    %949 = vector.load %arg8[%c1_289, %c1_290, %c0_291, %c0_292] : memref<2x2x16x16xf32, #tpu.memory_space<vmem>>, vector<1x1x16x16xf32>
    %950 = vector.shape_cast %949 : vector<1x1x16x16xf32> to vector<16x16xf32>
    %951 = vector.shape_cast %948 : vector<16x16xf32> to vector<1x1x16x16xf32>
    tpu.vector_store %arg8[%c1_289, %c1_290, %c0_291, %c0_292], %951 {strides = array<i32>} : memref<2x2x16x16xf32, #tpu.memory_space<vmem>>, vector<1x1x16x16xf32>,
    return
  }
  func.func @transform_0(%arg0: i32) -> (i32, i32, i32) {
    %c0_i32 = arith.constant 0 : i32
    %c0_i32_0 = arith.constant 0 : i32
    %c0_i32_1 = arith.constant 0 : i32
    return %arg0, %c0_i32, %c0_i32_0 : i32, i32, i32
  }
  func.func @transform_1(%arg0: i32) -> (i32, i32, i32, i32) {
    %c0_i32 = arith.constant 0 : i32
    %c0_i32_0 = arith.constant 0 : i32
    %c0_i32_1 = arith.constant 0 : i32
    %c0_i32_2 = arith.constant 0 : i32
    return %arg0, %c0_i32, %c0_i32_0, %c0_i32_1 : i32, i32, i32, i32
  }
  func.func @transform_2(%arg0: i32) -> (i32, i32, i32) {
    %c0_i32 = arith.constant 0 : i32
    %c0_i32_0 = arith.constant 0 : i32
    %c0_i32_1 = arith.constant 0 : i32
    return %arg0, %c0_i32, %c0_i32_0 : i32, i32, i32
  }
  func.func @transform_3(%arg0: i32) -> (i32, i32, i32) {
    %c0_i32 = arith.constant 0 : i32
    %c0_i32_0 = arith.constant 0 : i32
    %c0_i32_1 = arith.constant 0 : i32
    %c0_i32_2 = arith.constant 0 : i32
    return %c0_i32, %c0_i32_0, %c0_i32_1 : i32, i32, i32
  }
  func.func @transform_4(%arg0: i32) -> (i32, i32) {
    %c0_i32 = arith.constant 0 : i32
    %c0_i32_0 = arith.constant 0 : i32
    %c0_i32_1 = arith.constant 0 : i32
    return %c0_i32, %c0_i32_0 : i32, i32
  }
  func.func @transform_5(%arg0: i32) -> i32 {
    %c0_i32 = arith.constant 0 : i32
    %c0_i32_0 = arith.constant 0 : i32
    return %c0_i32 : i32
  }
  func.func @transform_6(%arg0: i32) -> (i32, i32, i32) {
    %c0_i32 = arith.constant 0 : i32
    %c0_i32_0 = arith.constant 0 : i32
    %c0_i32_1 = arith.constant 0 : i32
    return %arg0, %c0_i32, %c0_i32_0 : i32, i32, i32
  }
  func.func @transform_7(%arg0: i32) -> (i32, i32, i32, i32) {
    %c0_i32 = arith.constant 0 : i32
    %c0_i32_0 = arith.constant 0 : i32
    %c0_i32_1 = arith.constant 0 : i32
    %c0_i32_2 = arith.constant 0 : i32
    return %arg0, %c0_i32, %c0_i32_0, %c0_i32_1 : i32, i32, i32, i32
  }
}

</mosaic_0001>

<llo_original>
// kernel: tpu_custom_call.1
$region0: #{tpu_custom_call.1}
  #allocation0 [shape = 'u32[]', space=smem, size = 0x4, offset = 0x4, fixed_abs, tag = 'smem constant byte address 0x4 - core index']
  #allocation1 [shape = 'u32[72,128]{1,0:T(1,128)}', space=vmem, size = 0x9000, scoped, tag = 'internal scratch']
  %s0 = inlined_call_operand.vmem [shape: f32[2,16,4], index: 0, kind: input, shape index: {}]
  %s1 = inlined_call_operand.vmem [shape: f32[2,3,16,16], index: 1, kind: input, shape index: {}]
  %s2 = inlined_call_operand.vmem [shape: f32[2,1,16], index: 2, kind: input, shape index: {}]
  %s3 = inlined_call_operand.vmem [shape: f32[3,5,40], index: 3, kind: input, shape index: {}]
  %s4 = inlined_call_operand.vmem [shape: f32[137,8], index: 4, kind: input, shape index: {}]
  %s5 = inlined_call_operand.vmem [shape: f32[56], index: 5, kind: input, shape index: {}]
  %s6 = inlined_call_operand.vmem [shape: f32[2,16,8], index: 6, kind: output, shape index: {0}]
  %s7 = inlined_call_operand.hbm [shape: f32[2,2,16,16], index: 7, kind: output, shape index: {1}]
  %8 = xla_tuple %s6, %s7
  %s9 = sld [smem:[#allocation0]]
  $region46: #{tpu_custom_call.1} parent=0
    _
  %s11 = ssub.s32 1, %s9
  %s12 = scalar_select 0, %s11, %s9
  $region1: #{tpu_custom_call.1} parent=0
    #allocation2 [shape = 'u8[512]{0}', space=smem, size = 0x200, scoped, tag = 'input window, operand 5, single buffered']
    #allocation3 [shape = 's32[1]{0}', space=sflag, size = 0x4, scoped, tag = 'scoped memory for tpu_custom_call.1']
    #allocation4 [shape = 's32[1]{0}', space=sflag, size = 0x4, scoped, tag = 'scoped memory for tpu_custom_call.1']
    #allocation5 [shape = 'u8[32768]{0}', space=vmem, size = 0x8000, scoped, tag = 'output window, operand 1, single buffered']
    %13 = vsyncpa [#allocation4], 0
    %14 = vsyncpa [#allocation3], 0
    // Predicated region
    $region2: #{tpu_custom_call.1} parent=1 // pred_check
      _
    $region3: #{tpu_custom_call.1} parent=1 // pred_check_branch
      %16 = sbr.rel (0) target = $region5
    $region4: #{tpu_custom_call.1} parent=1 // pred_region
      _
    $region5: #{tpu_custom_call.1} parent=1 // pred_fallthru
      _
    // Predicated region
    $region6: #{tpu_custom_call.1} parent=1 // pred_check
      _
    $region7: #{tpu_custom_call.1} parent=1 // pred_check_branch
      %18 = sbr.rel (0) target = $region9
    $region8: #{tpu_custom_call.1} parent=1 // pred_region
      _
    $region9: #{tpu_custom_call.1} parent=1 // pred_fallthru
      _
    // Predicated region
    $region10: #{tpu_custom_call.1} parent=1 // pred_check
      _
    $region11: #{tpu_custom_call.1} parent=1 // pred_check_branch
      %20 = sbr.rel (0) target = $region13
    $region12: #{tpu_custom_call.1} parent=1 // pred_region
      _
    $region13: #{tpu_custom_call.1} parent=1 // pred_fallthru
      _
    // Predicated region
    $region14: #{tpu_custom_call.1} parent=1 // pred_check
      _
    $region15: #{tpu_custom_call.1} parent=1 // pred_check_branch
      %22 = sbr.rel (0) target = $region17
    $region16: #{tpu_custom_call.1} parent=1 // pred_region
      _
    $region17: #{tpu_custom_call.1} parent=1 // pred_fallthru
      _
    // Predicated region
    $region18: #{tpu_custom_call.1} parent=1 // pred_check
      _
    $region19: #{tpu_custom_call.1} parent=1 // pred_check_branch
      %24 = sbr.rel (0) target = $region21
    $region20: #{tpu_custom_call.1} parent=1 // pred_region
      _
    $region21: #{tpu_custom_call.1} parent=1 // pred_fallthru
      _
    // Predicated region
    $region22: #{tpu_custom_call.1} parent=1 // pred_check
      _
    $region23: #{tpu_custom_call.1} parent=1 // pred_check_branch
      %26 = sbr.rel (0) target = $region25
    $region24: #{tpu_custom_call.1} parent=1 // pred_region
      %28 = vsyncadd [#allocation4], 0
      %s30 = sshll.u32 %s5, 4
      %s31 = int_to_ptr.vmem [resolvable:$true] %s30
      %33 = dma.vmem_to_smem %s31, 16, [#allocation2], [#allocation4]
    $region25: #{tpu_custom_call.1} parent=1 // pred_fallthru
      _
    // Predicated region
    $region26: #{tpu_custom_call.1} parent=1 // pred_check
      _
    $region27: #{tpu_custom_call.1} parent=1 // pred_check_branch
      %35 = sbr.rel (0) target = $region29
    $region28: #{tpu_custom_call.1} parent=1 // pred_region
      %37 = dma.done [#allocation4], 16
    $region29: #{tpu_custom_call.1} parent=1 // pred_fallthru
      _
    %38 = sfence
    %v39 = vlaneseq
    %v40 = vshrl.u32 %v39, 7
    %v41 = vadd.s32 %v40, 8
    %v42 = vlaneseq
    %v43 = vand.u32 %v42, 127
    %vm44 = vcmp.eq.s32.totalorder %v40, %v43
    %vm45 = vcmp.eq.s32.totalorder %v41, %v43
    %v46 = vsel %vm44, 1, 0
    %v47 = vsel %vm45, 1, 0
    %v48 = vcvt.s32.f32 %v46
    %v49 = vcvt.s32.f32 %v47
    %v50 = vadd.s32 %v40, 16
    %v51 = vadd.s32 %v40, 24
    %v52 = vadd.s32 %v40, 32
    %v53 = vadd.s32 %v40, 40
    %v54 = vadd.s32 %v40, 48
    %v55 = vadd.s32 %v40, 56
    %vm56 = vcmp.eq.s32.totalorder %v50, %v43
    %vm57 = vcmp.eq.s32.totalorder %v51, %v43
    %vm58 = vcmp.eq.s32.totalorder %v52, %v43
    %vm59 = vcmp.eq.s32.totalorder %v53, %v43
    %vm60 = vcmp.eq.s32.totalorder %v54, %v43
    %vm61 = vcmp.eq.s32.totalorder %v55, %v43
    %v62 = vadd.s32 %v43, 16
    %vm63 = vcmp.eq.s32.totalorder %v40, %v62
    %vm64 = vcmp.eq.s32.totalorder %v41, %v62
    %vm65 = vcmp.eq.s32.totalorder %v50, %v62
    %vm66 = vcmp.eq.s32.totalorder %v51, %v62
    %vm67 = vcmp.eq.s32.totalorder %v52, %v62
    %vm68 = vcmp.eq.s32.totalorder %v53, %v62
    %vm69 = vcmp.eq.s32.totalorder %v54, %v62
    %vm70 = vcmp.eq.s32.totalorder %v55, %v62
    %vm71 = vmor %vm44, %vm63
    %vm72 = vmor %vm45, %vm64
    %vm73 = vmor %vm56, %vm65
    %vm74 = vmor %vm57, %vm66
    %vm75 = vmor %vm58, %vm67
    %vm76 = vmor %vm59, %vm68
    %vm77 = vmor %vm60, %vm69
    %vm78 = vmor %vm61, %vm70
    %v79 = vadd.s32 %v43, 32
    %vm80 = vcmp.eq.s32.totalorder %v40, %v79
    %vm81 = vcmp.eq.s32.totalorder %v41, %v79
    %vm82 = vcmp.eq.s32.totalorder %v50, %v79
    %vm83 = vcmp.eq.s32.totalorder %v51, %v79
    %vm84 = vcmp.eq.s32.totalorder %v52, %v79
    %vm85 = vcmp.eq.s32.totalorder %v53, %v79
    %vm86 = vcmp.eq.s32.totalorder %v54, %v79
    %vm87 = vcmp.eq.s32.totalorder %v55, %v79
    %vm88 = vmor %vm71, %vm80
    %vm89 = vmor %vm72, %vm81
    %vm90 = vmor %vm73, %vm82
    %vm91 = vmor %vm74, %vm83
    %vm92 = vmor %vm75, %vm84
    %vm93 = vmor %vm76, %vm85
    %vm94 = vmor %vm77, %vm86
    %vm95 = vmor %vm78, %vm87
    %v96 = vadd.s32 %v43, 48
    %vm97 = vcmp.eq.s32.totalorder %v40, %v96
    %vm98 = vcmp.eq.s32.totalorder %v41, %v96
    %vm99 = vcmp.eq.s32.totalorder %v50, %v96
    %vm100 = vcmp.eq.s32.totalorder %v51, %v96
    %vm101 = vcmp.eq.s32.totalorder %v52, %v96
    %vm102 = vcmp.eq.s32.totalorder %v53, %v96
    %vm103 = vcmp.eq.s32.totalorder %v54, %v96
    %vm104 = vcmp.eq.s32.totalorder %v55, %v96
    %vm105 = vmor %vm88, %vm97
    %vm106 = vmor %vm89, %vm98
    %vm107 = vmor %vm90, %vm99
    %vm108 = vmor %vm91, %vm100
    %vm109 = vmor %vm92, %vm101
    %vm110 = vmor %vm93, %vm102
    %vm111 = vmor %vm94, %vm103
    %vm112 = vmor %vm95, %vm104
    %v113 = vsel %vm105, 1, 0
    %v114 = vsel %vm106, 1, 0
    %v115 = vsel %vm107, 1, 0
    %v116 = vsel %vm108, 1, 0
    %v117 = vsel %vm109, 1, 0
    %v118 = vsel %vm110, 1, 0
    %v119 = vsel %vm111, 1, 0
    %v120 = vsel %vm112, 1, 0
    %v121 = vcvt.s32.f32 %v113
    %v122 = vcvt.s32.f32 %v114
    %v123 = vcvt.s32.f32 %v115
    %v124 = vcvt.s32.f32 %v116
    %v125 = vcvt.s32.f32 %v117
    %v126 = vcvt.s32.f32 %v118
    %v127 = vcvt.s32.f32 %v119
    %v128 = vcvt.s32.f32 %v120
    %vm129 = vcmp.ge.s32.totalorder %v40, 0
    %vm130 = vcmp.ge.s32.totalorder %v41, 0
    %vm131 = vcmp.ge.s32.totalorder %v50, 0
    %vm132 = vcmp.ge.s32.totalorder %v51, 0
    %vm133 = vcmp.ge.s32.totalorder %v52, 0
    %vm134 = vcmp.ge.s32.totalorder %v53, 0
    %vm135 = vcmp.ge.s32.totalorder %v54, 0
    %vm136 = vcmp.ge.s32.totalorder %v55, 0
    %vm137 = vcmp.lt.s32.totalorder %v40, 16
    %vm138 = vcmp.lt.s32.totalorder %v41, 16
    %vm139 = vcmp.lt.s32.totalorder %v50, 16
    %vm140 = vcmp.lt.s32.totalorder %v51, 16
    %vm141 = vcmp.lt.s32.totalorder %v52, 16
    %vm142 = vcmp.lt.s32.totalorder %v53, 16
    %vm143 = vcmp.lt.s32.totalorder %v54, 16
    %vm144 = vcmp.lt.s32.totalorder %v55, 16
    %vm145 = vmand %vm129, %vm137
    %vm146 = vmand %vm130, %vm138
    %vm147 = vmand %vm131, %vm139
    %vm148 = vmand %vm132, %vm140
    %vm149 = vmand %vm133, %vm141
    %vm150 = vmand %vm134, %vm142
    %vm151 = vmand %vm135, %vm143
    %vm152 = vmand %vm136, %vm144
    %vm153 = vcmp.ge.s32.totalorder %v43, 0
    %vm154 = vmand %vm145, %vm153
    %vm155 = vmand %vm146, %vm153
    %vm156 = vmand %vm147, %vm153
    %vm157 = vmand %vm148, %vm153
    %vm158 = vmand %vm149, %vm153
    %vm159 = vmand %vm150, %vm153
    %vm160 = vmand %vm151, %vm153
    %vm161 = vmand %vm152, %vm153
    %vm162 = vcmp.lt.s32.totalorder %v43, 4
    %vm163 = vmand %vm154, %vm162
    %vm164 = vmand %vm155, %vm162
    %vm165 = vmand %vm156, %vm162
    %vm166 = vmand %vm157, %vm162
    %vm167 = vmand %vm158, %vm162
    %vm168 = vmand %vm159, %vm162
    %vm169 = vmand %vm160, %vm162
    %vm170 = vmand %vm161, %vm162
    %vm171 = vcmp.ge.s32.totalorder %v40, 16
    %vm172 = vcmp.ge.s32.totalorder %v41, 16
    %vm173 = vcmp.ge.s32.totalorder %v50, 16
    %vm174 = vcmp.ge.s32.totalorder %v51, 16
    %vm175 = vcmp.ge.s32.totalorder %v52, 16
    %vm176 = vcmp.ge.s32.totalorder %v53, 16
    %vm177 = vcmp.ge.s32.totalorder %v54, 16
    %vm178 = vcmp.ge.s32.totalorder %v55, 16
    %vm179 = vcmp.lt.s32.totalorder %v40, 32
    %vm180 = vcmp.lt.s32.totalorder %v41, 32
    %vm181 = vcmp.lt.s32.totalorder %v50, 32
    %vm182 = vcmp.lt.s32.totalorder %v51, 32
    %vm183 = vcmp.lt.s32.totalorder %v52, 32
    %vm184 = vcmp.lt.s32.totalorder %v53, 32
    %vm185 = vcmp.lt.s32.totalorder %v54, 32
    %vm186 = vcmp.lt.s32.totalorder %v55, 32
    %vm187 = vmand %vm171, %vm179
    %vm188 = vmand %vm172, %vm180
    %vm189 = vmand %vm173, %vm181
    %vm190 = vmand %vm174, %vm182
    %vm191 = vmand %vm175, %vm183
    %vm192 = vmand %vm176, %vm184
    %vm193 = vmand %vm177, %vm185
    %vm194 = vmand %vm178, %vm186
    %vm195 = vcmp.ge.s32.totalorder %v43, 4
    %vm196 = vmand %vm187, %vm195
    %vm197 = vmand %vm188, %vm195
    %vm198 = vmand %vm189, %vm195
    %vm199 = vmand %vm190, %vm195
    %vm200 = vmand %vm191, %vm195
    %vm201 = vmand %vm192, %vm195
    %vm202 = vmand %vm193, %vm195
    %vm203 = vmand %vm194, %vm195
    %vm204 = vcmp.lt.s32.totalorder %v43, 8
    %vm205 = vmand %vm196, %vm204
    %vm206 = vmand %vm197, %vm204
    %vm207 = vmand %vm198, %vm204
    %vm208 = vmand %vm199, %vm204
    %vm209 = vmand %vm200, %vm204
    %vm210 = vmand %vm201, %vm204
    %vm211 = vmand %vm202, %vm204
    %vm212 = vmand %vm203, %vm204
    %vm213 = vmor %vm163, %vm205
    %vm214 = vmor %vm164, %vm206
    %vm215 = vmor %vm165, %vm207
    %vm216 = vmor %vm166, %vm208
    %vm217 = vmor %vm167, %vm209
    %vm218 = vmor %vm168, %vm210
    %vm219 = vmor %vm169, %vm211
    %vm220 = vmor %vm170, %vm212
    %vm221 = vcmp.ge.s32.totalorder %v40, 32
    %vm222 = vcmp.ge.s32.totalorder %v41, 32
    %vm223 = vcmp.ge.s32.totalorder %v50, 32
    %vm224 = vcmp.ge.s32.totalorder %v51, 32
    %vm225 = vcmp.ge.s32.totalorder %v52, 32
    %vm226 = vcmp.ge.s32.totalorder %v53, 32
    %vm227 = vcmp.ge.s32.totalorder %v54, 32
    %vm228 = vcmp.ge.s32.totalorder %v55, 32
    %vm229 = vcmp.lt.s32.totalorder %v40, 48
    %vm230 = vcmp.lt.s32.totalorder %v41, 48
    %vm231 = vcmp.lt.s32.totalorder %v50, 48
    %vm232 = vcmp.lt.s32.totalorder %v51, 48
    %vm233 = vcmp.lt.s32.totalorder %v52, 48
    %vm234 = vcmp.lt.s32.totalorder %v53, 48
    %vm235 = vcmp.lt.s32.totalorder %v54, 48
    %vm236 = vcmp.lt.s32.totalorder %v55, 48
    %vm237 = vmand %vm221, %vm229
    %vm238 = vmand %vm222, %vm230
    %vm239 = vmand %vm223, %vm231
    %vm240 = vmand %vm224, %vm232
    %vm241 = vmand %vm225, %vm233
    %vm242 = vmand %vm226, %vm234
    %vm243 = vmand %vm227, %vm235
    %vm244 = vmand %vm228, %vm236
    %vm245 = vcmp.ge.s32.totalorder %v43, 8
    %vm246 = vmand %vm237, %vm245
    %vm247 = vmand %vm238, %vm245
    %vm248 = vmand %vm239, %vm245
    %vm249 = vmand %vm240, %vm245
    %vm250 = vmand %vm241, %vm245
    %vm251 = vmand %vm242, %vm245
    %vm252 = vmand %vm243, %vm245
    %vm253 = vmand %vm244, %vm245
    %vm254 = vcmp.lt.s32.totalorder %v43, 12
    %vm255 = vmand %vm246, %vm254
    %vm256 = vmand %vm247, %vm254
    %vm257 = vmand %vm248, %vm254
    %vm258 = vmand %vm249, %vm254
    %vm259 = vmand %vm250, %vm254
    %vm260 = vmand %vm251, %vm254
    %vm261 = vmand %vm252, %vm254
    %vm262 = vmand %vm253, %vm254
    %vm263 = vmor %vm213, %vm255
    %vm264 = vmor %vm214, %vm256
    %vm265 = vmor %vm215, %vm257
    %vm266 = vmor %vm216, %vm258
    %vm267 = vmor %vm217, %vm259
    %vm268 = vmor %vm218, %vm260
    %vm269 = vmor %vm219, %vm261
    %vm270 = vmor %vm220, %vm262
    %vm271 = vcmp.ge.s32.totalorder %v40, 48
    %vm272 = vcmp.ge.s32.totalorder %v41, 48
    %vm273 = vcmp.ge.s32.totalorder %v50, 48
    %vm274 = vcmp.ge.s32.totalorder %v51, 48
    %vm275 = vcmp.ge.s32.totalorder %v52, 48
    %vm276 = vcmp.ge.s32.totalorder %v53, 48
    %vm277 = vcmp.ge.s32.totalorder %v54, 48
    %vm278 = vcmp.ge.s32.totalorder %v55, 48
    %vm279 = vcmp.lt.s32.totalorder %v40, 64
    %vm280 = vcmp.lt.s32.totalorder %v41, 64
    %vm281 = vcmp.lt.s32.totalorder %v50, 64
    %vm282 = vcmp.lt.s32.totalorder %v51, 64
    %vm283 = vcmp.lt.s32.totalorder %v52, 64
    %vm284 = vcmp.lt.s32.totalorder %v53, 64
    %vm285 = vcmp.lt.s32.totalorder %v54, 64
    %vm286 = vcmp.lt.s32.totalorder %v55, 64
    %vm287 = vmand %vm271, %vm279
    %vm288 = vmand %vm272, %vm280
    %vm289 = vmand %vm273, %vm281
    %vm290 = vmand %vm274, %vm282
    %vm291 = vmand %vm275, %vm283
    %vm292 = vmand %vm276, %vm284
    %vm293 = vmand %vm277, %vm285
    %vm294 = vmand %vm278, %vm286
    %vm295 = vcmp.ge.s32.totalorder %v43, 12
    %vm296 = vmand %vm287, %vm295
    %vm297 = vmand %vm288, %vm295
    %vm298 = vmand %vm289, %vm295
    %vm299 = vmand %vm290, %vm295
    %vm300 = vmand %vm291, %vm295
    %vm301 = vmand %vm292, %vm295
    %vm302 = vmand %vm293, %vm295
    %vm303 = vmand %vm294, %vm295
    %vm304 = vcmp.lt.s32.totalorder %v43, 16
    %vm305 = vmand %vm296, %vm304
    %vm306 = vmand %vm297, %vm304
    %vm307 = vmand %vm298, %vm304
    %vm308 = vmand %vm299, %vm304
    %vm309 = vmand %vm300, %vm304
    %vm310 = vmand %vm301, %vm304
    %vm311 = vmand %vm302, %vm304
    %vm312 = vmand %vm303, %vm304
    %vm313 = vmor %vm263, %vm305
    %vm314 = vmor %vm264, %vm306
    %vm315 = vmor %vm265, %vm307
    %vm316 = vmor %vm266, %vm308
    %vm317 = vmor %vm267, %vm309
    %vm318 = vmor %vm268, %vm310
    %vm319 = vmor %vm269, %vm311
    %vm320 = vmor %vm270, %vm312
    %v321 = vsel %vm313, 1, 0
    %v322 = vsel %vm314, 1, 0
    %v323 = vsel %vm315, 1, 0
    %v324 = vsel %vm316, 1, 0
    %v325 = vsel %vm317, 1, 0
    %v326 = vsel %vm318, 1, 0
    %v327 = vsel %vm319, 1, 0
    %v328 = vsel %vm320, 1, 0
    %v329 = vcvt.s32.f32 %v321
    %v330 = vcvt.s32.f32 %v322
    %v331 = vcvt.s32.f32 %v323
    %v332 = vcvt.s32.f32 %v324
    %v333 = vcvt.s32.f32 %v325
    %v334 = vcvt.s32.f32 %v326
    %v335 = vcvt.s32.f32 %v327
    %v336 = vcvt.s32.f32 %v328
    %v337 = vld [vmem:[%s4 + $0x78] sm:$0x1]
    %v338 = vld [vmem:[%s4 + $0x80] sm:$0xff]
    %v339 = vld [vmem:[%s4 + $0x88] sm:$0x1]
    %v340 = vld [vmem:[%s2] sm:$0x1]
    %v342 = vperm.slane %v340, 0
    %v344 = vmul.f32 %v48, %v342
    %v345 = vmul.f32 %v49, %v342
    %vm346 = vcmask 130048
    %v347 = vsel %vm346, %v344, 0.0
    %348 = vadd.xlane.f32.xlu0 %v347
    %v349 = vpop.xlane.xlu0 %348
    %v350 = vsel %vm346, %v345, 0.0
    %351 = vadd.xlane.f32.xlu0 %v350
    %v352 = vpop.xlane.xlu0 %351
    %v353 = vld [vmem:[%s0] sm:$0xff]
    %v354 = vld [vmem:[%s0 + $0x8] sm:$0xff]
    %v355 = vld [vmem:[%s1] sm:$0xff]
    %v356 = vld [vmem:[%s1 + $0x8] sm:$0xff]
    %v357 = vsel %vm44, 1.0, %v355
    %v358 = vsel %vm45, 1.0, %v356
    %v359 = vsel %vm346, %v357, 0.0
    %360 = vadd.xlane.f32.xlu0 %v359
    %v361 = vpop.xlane.xlu0 %360
    %v362 = vsel %vm346, %v358, 0.0
    %363 = vadd.xlane.f32.xlu0 %v362
    %v364 = vpop.xlane.xlu0 %363
    %v365 = vmax.f32 %v361, 1.0
    %v366 = vmax.f32 %v364, 1.0
    %v367 = vrsqrt.pop %v365
    %v368 = vmul.f32 %v367, %v365
    %v369 = vmul.f32 %v368, %v367
    %v370 = vmul.f32 0.5, %v369
    %v371 = vsub.f32 1.5, %v370
    %v372 = vmul.f32 %v367, %v371
    %vm373 = vweird.f32 %v365
    %vm374 = vweird.f32 %v367
    %vm375 = vmor %vm373, %vm374
    %v376 = vsel %vm375, %v367, %v372
    %v377 = vrsqrt.pop %v366
    %v378 = vmul.f32 %v377, %v366
    %v379 = vmul.f32 %v378, %v377
    %v380 = vmul.f32 0.5, %v379
    %v381 = vsub.f32 1.5, %v380
    %v382 = vmul.f32 %v377, %v381
    %vm383 = vweird.f32 %v366
    %vm384 = vweird.f32 %v377
    %vm385 = vmor %vm383, %vm384
    %v386 = vsel %vm385, %v377, %v382
    %v387 = vld [vmem:[%s3] sm:$0x1f]
    %vm388 = vcmask 31744
    %v390 = vsel %vm388, %v353, 0
    %v393 = vsel %vm388, %v354, 0
    %vm395 = vcmask 1043456
    %v397 = vsel %vm395, %v387, 0
    %399 = vmatpush.msra.mxu0 0.0
    %400 = vmatpush.msra.mxu0 0.0
    %401 = vmatpush.msra.mxu0 0.0
    %402 = vmatpush.msra.mxu0 0.0
    %403 = vmatpush.msra.mxu0 0.0
    %404 = vmatpush.msra.mxu0 0.0
    %405 = vmatpush.msra.mxu0 0.0
    %406 = vmatpush.msra.mxu0 0.0
    %407 = vmatpush.msra.mxu0 0.0
    %408 = vmatpush.msra.mxu0 0.0
    %409 = vmatpush.msra.mxu0 0.0
    %410 = vmatpush.msra.mxu0 0.0
    %411 = vmatpush.msra.mxu0 0.0
    %412 = vmatpush.msra.mxu0 0.0
    %413 = vmatpush.msra.mxu0 0.0
    %414 = vmatpush.msra.mxu0 %v397
    %415 = vmatmul.f32.gmra.mxu0 %v390
    %v416 = vpop.f32.mrf.mxu0
    %v417 = vadd.f32 0.0, %v416
    %418 = vmatmul.f32.gmra.mxu0 %v393
    %v419 = vpop.f32.mrf.mxu0
    %v420 = vadd.f32 0.0, %v419
    %421 = vdwg.mxu0
    %v422 = vmul.f32 %v376, %v417
    %v423 = vmul.f32 %v386, %v420
    %v425 = vsel %vm346, %v357, 0
    %v428 = vsel %vm346, %v358, 0
    %430 = vmatpush.msra.mxu0 0.0
    %431 = vmatpush.msra.mxu0 0.0
    %432 = vmatpush.msra.mxu0 0.0
    %433 = vmatpush.msra.mxu0 0.0
    %434 = vmatpush.msra.mxu0 0.0
    %435 = vmatpush.msra.mxu0 0.0
    %436 = vmatpush.msra.mxu0 0.0
    %437 = vmatpush.msra.mxu0 0.0
    %438 = vmatpush.msra.mxu0 0.0
    %439 = vmatpush.msra.mxu0 0.0
    %440 = vmatpush.msra.mxu0 0.0
    %441 = vmatpush.msra.mxu0 0.0
    %442 = vmatpush.msra.mxu0 0.0
    %443 = vmatpush.msra.mxu0 0.0
    %444 = vmatpush.msra.mxu0 %v423
    %445 = vmatpush.msra.mxu0 %v422
    %446 = vmatmul.f32.gmra.mxu0 %v425
    %v447 = vpop.f32.mrf.mxu0
    %v448 = vadd.f32 0.0, %v447
    %449 = vmatmul.f32.gmra.mxu0 %v428
    %v450 = vpop.f32.mrf.mxu0
    %v451 = vadd.f32 0.0, %v450
    %452 = vdwg.mxu0
    %v453 = vmul.f32 %v376, %v448
    %v454 = vmul.f32 %v386, %v451
    %v455 = vperm.slane %v387, 4
    %v456 = vadd.f32 %v453, %v455
    %v457 = vadd.f32 %v454, %v455
    %460 = vrot.lane.b32.xlu0 %v456, 112
    %v461 = vpop.permute.xlu0 %460
    %462 = vrot.lane.b32.xlu0 %v457, 112
    %v463 = vpop.permute.xlu0 %462
    %v467 = vsel %vm346, %v121, 0
    %v470 = vsel %vm346, %v122, 0
    %v473 = vsel %vm346, %v123, 0
    %v476 = vsel %vm346, %v124, 0
    %v479 = vsel %vm346, %v125, 0
    %v482 = vsel %vm346, %v126, 0
    %v485 = vsel %vm346, %v127, 0
    %v488 = vsel %vm346, %v128, 0
    %490 = vmatpush.msra.mxu0 0.0
    %491 = vmatpush.msra.mxu0 0.0
    %492 = vmatpush.msra.mxu0 0.0
    %493 = vmatpush.msra.mxu0 0.0
    %494 = vmatpush.msra.mxu0 0.0
    %495 = vmatpush.msra.mxu0 0.0
    %496 = vmatpush.msra.mxu0 0.0
    %497 = vmatpush.msra.mxu0 0.0
    %498 = vmatpush.msra.mxu0 0.0
    %499 = vmatpush.msra.mxu0 0.0
    %500 = vmatpush.msra.mxu0 0.0
    %501 = vmatpush.msra.mxu0 0.0
    %502 = vmatpush.msra.mxu0 0.0
    %503 = vmatpush.msra.mxu0 0.0
    %504 = vmatpush.msra.mxu0 %v463
    %505 = vmatpush.msra.mxu0 %v461
    %506 = vmatmul.f32.gmra.mxu0 %v467
    %v507 = vpop.f32.mrf.mxu0
    %v508 = vadd.f32 0.0, %v507
    %509 = vmatmul.f32.gmra.mxu0 %v470
    %v510 = vpop.f32.mrf.mxu0
    %v511 = vadd.f32 0.0, %v510
    %512 = vmatmul.f32.gmra.mxu0 %v473
    %v513 = vpop.f32.mrf.mxu0
    %v514 = vadd.f32 0.0, %v513
    %515 = vmatmul.f32.gmra.mxu0 %v476
    %v516 = vpop.f32.mrf.mxu0
    %v517 = vadd.f32 0.0, %v516
    %518 = vmatmul.f32.gmra.mxu0 %v479
    %v519 = vpop.f32.mrf.mxu0
    %v520 = vadd.f32 0.0, %v519
    %521 = vmatmul.f32.gmra.mxu0 %v482
    %v522 = vpop.f32.mrf.mxu0
    %v523 = vadd.f32 0.0, %v522
    %524 = vmatmul.f32.gmra.mxu0 %v485
    %v525 = vpop.f32.mrf.mxu0
    %v526 = vadd.f32 0.0, %v525
    %527 = vmatmul.f32.gmra.mxu0 %v488
    %v528 = vpop.f32.mrf.mxu0
    %v529 = vadd.f32 0.0, %v528
    %530 = vdwg.mxu0
    %v531 = vmul.f32 %v508, %v329
    %v532 = vmul.f32 %v511, %v330
    %v533 = vmul.f32 %v514, %v331
    %v534 = vmul.f32 %v517, %v332
    %v535 = vmul.f32 %v520, %v333
    %v536 = vmul.f32 %v523, %v334
    %v537 = vmul.f32 %v526, %v335
    %v538 = vmul.f32 %v529, %v336
    %v539 = vsel %vm346, %v456, 0
    %v541 = vsel %vm346, %v457, 0
    %v544 = vsel %vm346, %v531, 0
    %v547 = vsel %vm346, %v532, 0
    %v550 = vsel %vm346, %v533, 0
    %v553 = vsel %vm346, %v534, 0
    %v556 = vsel %vm346, %v535, 0
    %v559 = vsel %vm346, %v536, 0
    %v562 = vsel %vm346, %v537, 0
    %v565 = vsel %vm346, %v538, 0
    %567 = vmatpush.xpose.msra.mxu0 0.0
    %568 = vmatpush.xpose.msra.mxu0 0.0
    %569 = vmatpush.xpose.msra.mxu0 0.0
    %570 = vmatpush.xpose.msra.mxu0 0.0
    %571 = vmatpush.xpose.msra.mxu0 0.0
    %572 = vmatpush.xpose.msra.mxu0 0.0
    %573 = vmatpush.xpose.msra.mxu0 0.0
    %574 = vmatpush.xpose.msra.mxu0 0.0
    %575 = vmatpush.xpose.msra.mxu0 %v565
    %576 = vmatpush.xpose.msra.mxu0 %v562
    %577 = vmatpush.xpose.msra.mxu0 %v559
    %578 = vmatpush.xpose.msra.mxu0 %v556
    %579 = vmatpush.xpose.msra.mxu0 %v553
    %580 = vmatpush.xpose.msra.mxu0 %v550
    %581 = vmatpush.xpose.msra.mxu0 %v547
    %582 = vmatpush.xpose.msra.mxu0 %v544
    %583 = vmatmul.f32.gmra.mxu0 %v539
    %v584 = vpop.f32.mrf.mxu0
    %v585 = vadd.f32 0.0, %v584
    %586 = vmatmul.f32.gmra.mxu0 %v541
    %v587 = vpop.f32.mrf.mxu0
    %v588 = vadd.f32 0.0, %v587
    %589 = vdwg.mxu0
    %v590 = vmul.f32 %v585, 0.35355338
    %v591 = vmul.f32 %v588, 0.35355338
    %v592 = vtanh.pop %v590
    %v593 = vtanh.pop %v591
    %vm594 = vcmask 523264
    %v596 = vsel %vm594, %v592, 0
    %v599 = vsel %vm594, %v593, 0
    %601 = vmatpush.msra.mxu0 0.0
    %602 = vmatpush.msra.mxu0 0.0
    %603 = vmatpush.msra.mxu0 0.0
    %604 = vmatpush.msra.mxu0 0.0
    %605 = vmatpush.msra.mxu0 0.0
    %606 = vmatpush.msra.mxu0 0.0
    %607 = vmatpush.msra.mxu0 0.0
    %608 = vmatpush.msra.mxu0 0.0
    %609 = vmatpush.msra.mxu0 %v128
    %610 = vmatpush.msra.mxu0 %v127
    %611 = vmatpush.msra.mxu0 %v126
    %612 = vmatpush.msra.mxu0 %v125
    %613 = vmatpush.msra.mxu0 %v124
    %614 = vmatpush.msra.mxu0 %v123
    %615 = vmatpush.msra.mxu0 %v122
    %616 = vmatpush.msra.mxu0 %v121
    %617 = vmatmul.f32.gmra.mxu0 %v596
    %v618 = vpop.f32.mrf.mxu0
    %v619 = vadd.f32 0.0, %v618
    %620 = vmatmul.f32.gmra.mxu0 %v599
    %v621 = vpop.f32.mrf.mxu0
    %v622 = vadd.f32 0.0, %v621
    %623 = vdwg.mxu0
    %v624 = vpack.c.bf16 %v619, %v619
    %v625 = vpack.c.bf16 %v622, %v622
    %v626 = vunpack.c.l.bf16 %v624
    %v627 = vunpack.c.l.bf16 %v625
    %v628 = vsub.f32 %v619, %v626
    %v629 = vsub.f32 %v622, %v627
    %v631 = vsel %vm346, %v48, 0
    %v634 = vsel %vm346, %v49, 0
    %v637 = vsel %vm346, %v628, 0
    %v640 = vsel %vm346, %v629, 0
    %642 = vmatpush.xpose.msra.mxu0 0.0
    %643 = vmatpush.xpose.msra.mxu0 0.0
    %644 = vmatpush.xpose.msra.mxu0 0.0
    %645 = vmatpush.xpose.msra.mxu0 0.0
    %646 = vmatpush.xpose.msra.mxu0 0.0
    %647 = vmatpush.xpose.msra.mxu0 0.0
    %648 = vmatpush.xpose.msra.mxu0 0.0
    %649 = vmatpush.xpose.msra.mxu0 0.0
    %650 = vmatpush.xpose.msra.mxu0 0.0
    %651 = vmatpush.xpose.msra.mxu0 0.0
    %652 = vmatpush.xpose.msra.mxu0 0.0
    %653 = vmatpush.xpose.msra.mxu0 0.0
    %654 = vmatpush.xpose.msra.mxu0 0.0
    %655 = vmatpush.xpose.msra.mxu0 0.0
    %656 = vmatpush.xpose.msra.mxu0 %v640
    %657 = vmatpush.xpose.msra.mxu0 %v637
    %658 = vmatmul.f32.gmra.mxu0 %v631
    %v659 = vpop.f32.mrf.mxu0
    %v660 = vadd.f32 0.0, %v659
    %661 = vmatmul.f32.gmra.mxu0 %v634
    %v662 = vpop.f32.mrf.mxu0
    %v663 = vadd.f32 0.0, %v662
    %664 = vdwg.mxu0
    %v666 = vsel %vm346, %v626, 0
    %v669 = vsel %vm346, %v627, 0
    %671 = vmatpush.xpose.msra.mxu0 0.0
    %672 = vmatpush.xpose.msra.mxu0 0.0
    %673 = vmatpush.xpose.msra.mxu0 0.0
    %674 = vmatpush.xpose.msra.mxu0 0.0
    %675 = vmatpush.xpose.msra.mxu0 0.0
    %676 = vmatpush.xpose.msra.mxu0 0.0
    %677 = vmatpush.xpose.msra.mxu0 0.0
    %678 = vmatpush.xpose.msra.mxu0 0.0
    %679 = vmatpush.xpose.msra.mxu0 0.0
    %680 = vmatpush.xpose.msra.mxu0 0.0
    %681 = vmatpush.xpose.msra.mxu0 0.0
    %682 = vmatpush.xpose.msra.mxu0 0.0
    %683 = vmatpush.xpose.msra.mxu0 0.0
    %684 = vmatpush.xpose.msra.mxu0 0.0
    %685 = vmatpush.xpose.msra.mxu0 %v669
    %686 = vmatpush.xpose.msra.mxu0 %v666
    %687 = vmatmul.f32.gmra.mxu0 %v631
    %v688 = vpop.f32.mrf.mxu0
    %v689 = vadd.f32 %v660, %v688
    %690 = vmatmul.f32.gmra.mxu0 %v634
    %v691 = vpop.f32.mrf.mxu0
    %v692 = vadd.f32 %v663, %v691
    %693 = vdwg.mxu0
    %v694 = vadd.f32 %v619, %v689
    %v695 = vadd.f32 %v622, %v692
    %v696 = vmul.f32 %v694, 0.125
    %v697 = vmul.f32 %v695, 0.125
    %v698 = vld [vmem:[%s4] sm:$0xff]
    %v699 = vld [vmem:[%s4 + $0x8] sm:$0xff]
    %v700 = vld [vmem:[%s4 + $0x10] sm:$0xff]
    %v701 = vld [vmem:[%s4 + $0x18] sm:$0xff]
    %v702 = vld [vmem:[%s4 + $0x20] sm:$0xff]
    %s703 = scalar_lea.vmem %s1, 16
    %v704 = vld [vmem:[%s703] sm:$0xff]
    %v705 = vld [vmem:[%s703 + $0x8] sm:$0xff]
    %v706 = vsel %vm44, 1.0, %v704
    %v707 = vsel %vm45, 1.0, %v705
    %v708 = vsel %vm346, %v706, 0.0
    %709 = vadd.xlane.f32.xlu0 %v708
    %v710 = vpop.xlane.xlu0 %709
    %v711 = vsel %vm346, %v707, 0.0
    %712 = vadd.xlane.f32.xlu0 %v711
    %v713 = vpop.xlane.xlu0 %712
    %v714 = vmax.f32 %v710, 1.0
    %v715 = vmax.f32 %v713, 1.0
    %v716 = vrsqrt.pop %v714
    %v717 = vmul.f32 %v716, %v714
    %v718 = vmul.f32 %v717, %v716
    %v719 = vmul.f32 0.5, %v718
    %v720 = vsub.f32 1.5, %v719
    %v721 = vmul.f32 %v716, %v720
    %vm722 = vweird.f32 %v714
    %vm723 = vweird.f32 %v716
    %vm724 = vmor %vm722, %vm723
    %v725 = vsel %vm724, %v716, %v721
    %v726 = vrsqrt.pop %v715
    %v727 = vmul.f32 %v726, %v715
    %v728 = vmul.f32 %v727, %v726
    %v729 = vmul.f32 0.5, %v728
    %v730 = vsub.f32 1.5, %v729
    %v731 = vmul.f32 %v726, %v730
    %vm732 = vweird.f32 %v715
    %vm733 = vweird.f32 %v726
    %vm734 = vmor %vm732, %vm733
    %v735 = vsel %vm734, %v726, %v731
    %s736 = scalar_lea.vmem %s3, 8
    %v737 = vld [vmem:[%s736] sm:$0x1f]
    %v739 = vsel %vm395, %v737, 0
    %741 = vmatpush.msra.mxu0 0.0
    %742 = vmatpush.msra.mxu0 0.0
    %743 = vmatpush.msra.mxu0 0.0
    %744 = vmatpush.msra.mxu0 0.0
    %745 = vmatpush.msra.mxu0 0.0
    %746 = vmatpush.msra.mxu0 0.0
    %747 = vmatpush.msra.mxu0 0.0
    %748 = vmatpush.msra.mxu0 0.0
    %749 = vmatpush.msra.mxu0 0.0
    %750 = vmatpush.msra.mxu0 0.0
    %751 = vmatpush.msra.mxu0 0.0
    %752 = vmatpush.msra.mxu0 0.0
    %753 = vmatpush.msra.mxu0 0.0
    %754 = vmatpush.msra.mxu0 0.0
    %755 = vmatpush.msra.mxu0 0.0
    %756 = vmatpush.msra.mxu0 %v739
    %757 = vmatmul.f32.gmra.mxu0 %v390
    %v758 = vpop.f32.mrf.mxu0
    %v759 = vadd.f32 0.0, %v758
    %760 = vmatmul.f32.gmra.mxu0 %v393
    %v761 = vpop.f32.mrf.mxu0
    %v762 = vadd.f32 0.0, %v761
    %763 = vdwg.mxu0
    %v764 = vmul.f32 %v725, %v759
    %v765 = vmul.f32 %v735, %v762
    %v767 = vsel %vm346, %v706, 0
    %v770 = vsel %vm346, %v707, 0
    %772 = vmatpush.msra.mxu0 0.0
    %773 = vmatpush.msra.mxu0 0.0
    %774 = vmatpush.msra.mxu0 0.0
    %775 = vmatpush.msra.mxu0 0.0
    %776 = vmatpush.msra.mxu0 0.0
    %777 = vmatpush.msra.mxu0 0.0
    %778 = vmatpush.msra.mxu0 0.0
    %779 = vmatpush.msra.mxu0 0.0
    %780 = vmatpush.msra.mxu0 0.0
    %781 = vmatpush.msra.mxu0 0.0
    %782 = vmatpush.msra.mxu0 0.0
    %783 = vmatpush.msra.mxu0 0.0
    %784 = vmatpush.msra.mxu0 0.0
    %785 = vmatpush.msra.mxu0 0.0
    %786 = vmatpush.msra.mxu0 %v765
    %787 = vmatpush.msra.mxu0 %v764
    %788 = vmatmul.f32.gmra.mxu0 %v767
    %v789 = vpop.f32.mrf.mxu0
    %v790 = vadd.f32 0.0, %v789
    %791 = vmatmul.f32.gmra.mxu0 %v770
    %v792 = vpop.f32.mrf.mxu0
    %v793 = vadd.f32 0.0, %v792
    %794 = vdwg.mxu0
    %v795 = vmul.f32 %v725, %v790
    %v796 = vmul.f32 %v735, %v793
    %v797 = vperm.slane %v737, 4
    %v798 = vadd.f32 %v795, %v797
    %v799 = vadd.f32 %v796, %v797
    %802 = vrot.lane.b32.xlu0 %v798, 112
    %v803 = vpop.permute.xlu0 %802
    %804 = vrot.lane.b32.xlu0 %v799, 112
    %v805 = vpop.permute.xlu0 %804
    %808 = vmatpush.msra.mxu0 0.0
    %809 = vmatpush.msra.mxu0 0.0
    %810 = vmatpush.msra.mxu0 0.0
    %811 = vmatpush.msra.mxu0 0.0
    %812 = vmatpush.msra.mxu0 0.0
    %813 = vmatpush.msra.mxu0 0.0
    %814 = vmatpush.msra.mxu0 0.0
    %815 = vmatpush.msra.mxu0 0.0
    %816 = vmatpush.msra.mxu0 0.0
    %817 = vmatpush.msra.mxu0 0.0
    %818 = vmatpush.msra.mxu0 0.0
    %819 = vmatpush.msra.mxu0 0.0
    %820 = vmatpush.msra.mxu0 0.0
    %821 = vmatpush.msra.mxu0 0.0
    %822 = vmatpush.msra.mxu0 %v805
    %823 = vmatpush.msra.mxu0 %v803
    %824 = vmatmul.f32.gmra.mxu0 %v467
    %v825 = vpop.f32.mrf.mxu0
    %v826 = vadd.f32 0.0, %v825
    %827 = vmatmul.f32.gmra.mxu0 %v470
    %v828 = vpop.f32.mrf.mxu0
    %v829 = vadd.f32 0.0, %v828
    %830 = vmatmul.f32.gmra.mxu0 %v473
    %v831 = vpop.f32.mrf.mxu0
    %v832 = vadd.f32 0.0, %v831
    %833 = vmatmul.f32.gmra.mxu0 %v476
    %v834 = vpop.f32.mrf.mxu0
    %v835 = vadd.f32 0.0, %v834
    %836 = vmatmul.f32.gmra.mxu0 %v479
    %v837 = vpop.f32.mrf.mxu0
    %v838 = vadd.f32 0.0, %v837
    %839 = vmatmul.f32.gmra.mxu0 %v482
    %v840 = vpop.f32.mrf.mxu0
    %v841 = vadd.f32 0.0, %v840
    %842 = vmatmul.f32.gmra.mxu0 %v485
    %v843 = vpop.f32.mrf.mxu0
    %v844 = vadd.f32 0.0, %v843
    %845 = vmatmul.f32.gmra.mxu0 %v488
    %v846 = vpop.f32.mrf.mxu0
    %v847 = vadd.f32 0.0, %v846
    %848 = vdwg.mxu0
    %v849 = vmul.f32 %v826, %v329
    %v850 = vmul.f32 %v829, %v330
    %v851 = vmul.f32 %v832, %v331
    %v852 = vmul.f32 %v835, %v332
    %v853 = vmul.f32 %v838, %v333
    %v854 = vmul.f32 %v841, %v334
    %v855 = vmul.f32 %v844, %v335
    %v856 = vmul.f32 %v847, %v336
    %v857 = vsel %vm346, %v798, 0
    %v859 = vsel %vm346, %v799, 0
    %v862 = vsel %vm346, %v849, 0
    %v865 = vsel %vm346, %v850, 0
    %v868 = vsel %vm346, %v851, 0
    %v871 = vsel %vm346, %v852, 0
    %v874 = vsel %vm346, %v853, 0
    %v877 = vsel %vm346, %v854, 0
    %v880 = vsel %vm346, %v855, 0
    %v883 = vsel %vm346, %v856, 0
    %885 = vmatpush.xpose.msra.mxu0 0.0
    %886 = vmatpush.xpose.msra.mxu0 0.0
    %887 = vmatpush.xpose.msra.mxu0 0.0
    %888 = vmatpush.xpose.msra.mxu0 0.0
    %889 = vmatpush.xpose.msra.mxu0 0.0
    %890 = vmatpush.xpose.msra.mxu0 0.0
    %891 = vmatpush.xpose.msra.mxu0 0.0
    %892 = vmatpush.xpose.msra.mxu0 0.0
    %893 = vmatpush.xpose.msra.mxu0 %v883
    %894 = vmatpush.xpose.msra.mxu0 %v880
    %895 = vmatpush.xpose.msra.mxu0 %v877
    %896 = vmatpush.xpose.msra.mxu0 %v874
    %897 = vmatpush.xpose.msra.mxu0 %v871
    %898 = vmatpush.xpose.msra.mxu0 %v868
    %899 = vmatpush.xpose.msra.mxu0 %v865
    %900 = vmatpush.xpose.msra.mxu0 %v862
    %901 = vmatmul.f32.gmra.mxu0 %v857
    %v902 = vpop.f32.mrf.mxu0
    %v903 = vadd.f32 0.0, %v902
    %904 = vmatmul.f32.gmra.mxu0 %v859
    %v905 = vpop.f32.mrf.mxu0
    %v906 = vadd.f32 0.0, %v905
    %907 = vdwg.mxu0
    %v908 = vmul.f32 %v903, 0.35355338
    %v909 = vmul.f32 %v906, 0.35355338
    %v910 = vtanh.pop %v908
    %v911 = vtanh.pop %v909
    %v913 = vsel %vm594, %v910, 0
    %v916 = vsel %vm594, %v911, 0
    %918 = vmatpush.msra.mxu0 0.0
    %919 = vmatpush.msra.mxu0 0.0
    %920 = vmatpush.msra.mxu0 0.0
    %921 = vmatpush.msra.mxu0 0.0
    %922 = vmatpush.msra.mxu0 0.0
    %923 = vmatpush.msra.mxu0 0.0
    %924 = vmatpush.msra.mxu0 0.0
    %925 = vmatpush.msra.mxu0 0.0
    %926 = vmatpush.msra.mxu0 %v128
    %927 = vmatpush.msra.mxu0 %v127
    %928 = vmatpush.msra.mxu0 %v126
    %929 = vmatpush.msra.mxu0 %v125
    %930 = vmatpush.msra.mxu0 %v124
    %931 = vmatpush.msra.mxu0 %v123
    %932 = vmatpush.msra.mxu0 %v122
    %933 = vmatpush.msra.mxu0 %v121
    %934 = vmatmul.f32.gmra.mxu0 %v913
    %v935 = vpop.f32.mrf.mxu0
    %v936 = vadd.f32 0.0, %v935
    %937 = vmatmul.f32.gmra.mxu0 %v916
    %v938 = vpop.f32.mrf.mxu0
    %v939 = vadd.f32 0.0, %v938
    %940 = vdwg.mxu0
    %v941 = vpack.c.bf16 %v936, %v936
    %v942 = vpack.c.bf16 %v939, %v939
    %v943 = vunpack.c.l.bf16 %v941
    %v944 = vunpack.c.l.bf16 %v942
    %v945 = vsub.f32 %v936, %v943
    %v946 = vsub.f32 %v939, %v944
    %v948 = vsel %vm346, %v945, 0
    %v951 = vsel %vm346, %v946, 0
    %953 = vmatpush.xpose.msra.mxu0 0.0
    %954 = vmatpush.xpose.msra.mxu0 0.0
    %955 = vmatpush.xpose.msra.mxu0 0.0
    %956 = vmatpush.xpose.msra.mxu0 0.0
    %957 = vmatpush.xpose.msra.mxu0 0.0
    %958 = vmatpush.xpose.msra.mxu0 0.0
    %959 = vmatpush.xpose.msra.mxu0 0.0
    %960 = vmatpush.xpose.msra.mxu0 0.0
    %961 = vmatpush.xpose.msra.mxu0 0.0
    %962 = vmatpush.xpose.msra.mxu0 0.0
    %963 = vmatpush.xpose.msra.mxu0 0.0
    %964 = vmatpush.xpose.msra.mxu0 0.0
    %965 = vmatpush.xpose.msra.mxu0 0.0
    %966 = vmatpush.xpose.msra.mxu0 0.0
    %967 = vmatpush.xpose.msra.mxu0 %v951
    %968 = vmatpush.xpose.msra.mxu0 %v948
    %969 = vmatmul.f32.gmra.mxu0 %v631
    %v970 = vpop.f32.mrf.mxu0
    %v971 = vadd.f32 0.0, %v970
    %972 = vmatmul.f32.gmra.mxu0 %v634
    %v973 = vpop.f32.mrf.mxu0
    %v974 = vadd.f32 0.0, %v973
    %975 = vdwg.mxu0
    %v977 = vsel %vm346, %v943, 0
    %v980 = vsel %vm346, %v944, 0
    %982 = vmatpush.xpose.msra.mxu0 0.0
    %983 = vmatpush.xpose.msra.mxu0 0.0
    %984 = vmatpush.xpose.msra.mxu0 0.0
    %985 = vmatpush.xpose.msra.mxu0 0.0
    %986 = vmatpush.xpose.msra.mxu0 0.0
    %987 = vmatpush.xpose.msra.mxu0 0.0
    %988 = vmatpush.xpose.msra.mxu0 0.0
    %989 = vmatpush.xpose.msra.mxu0 0.0
    %990 = vmatpush.xpose.msra.mxu0 0.0
    %991 = vmatpush.xpose.msra.mxu0 0.0
    %992 = vmatpush.xpose.msra.mxu0 0.0
    %993 = vmatpush.xpose.msra.mxu0 0.0
    %994 = vmatpush.xpose.msra.mxu0 0.0
    %995 = vmatpush.xpose.msra.mxu0 0.0
    %996 = vmatpush.xpose.msra.mxu0 %v980
    %997 = vmatpush.xpose.msra.mxu0 %v977
    %998 = vmatmul.f32.gmra.mxu0 %v631
    %v999 = vpop.f32.mrf.mxu0
    %v1000 = vadd.f32 %v971, %v999
    %1001 = vmatmul.f32.gmra.mxu0 %v634
    %v1002 = vpop.f32.mrf.mxu0
    %v1003 = vadd.f32 %v974, %v1002
    %1004 = vdwg.mxu0
    %v1005 = vadd.f32 %v936, %v1000
    %v1006 = vadd.f32 %v939, %v1003
    %v1007 = vmul.f32 %v1005, 0.125
    %v1008 = vmul.f32 %v1006, 0.125
    %v1009 = vld [vmem:[%s4 + $0x28] sm:$0xff]
    %v1010 = vld [vmem:[%s4 + $0x30] sm:$0xff]
    %v1011 = vld [vmem:[%s4 + $0x38] sm:$0xff]
    %v1012 = vld [vmem:[%s4 + $0x40] sm:$0xff]
    %v1013 = vld [vmem:[%s4 + $0x48] sm:$0xff]
    %vm1014 = vcmask 326656
    %v1015 = vsel %vm1014, %v798, 0
    %v1017 = vsel %vm1014, %v799, 0
    %1019 = vmatpush.msra.mxu0 0.0
    %1020 = vmatpush.msra.mxu0 0.0
    %1021 = vmatpush.msra.mxu0 0.0
    %1022 = vmatpush.msra.mxu0 0.0
    %1023 = vmatpush.msra.mxu0 0.0
    %1024 = vmatpush.msra.mxu0 0.0
    %1025 = vmatpush.msra.mxu0 0.0
    %1026 = vmatpush.msra.mxu0 0.0
    %1027 = vmatpush.msra.mxu0 0.0
    %1028 = vmatpush.msra.mxu0 0.0
    %1029 = vmatpush.msra.mxu0 0.0
    %1030 = vmatpush.msra.mxu0 %v1013
    %1031 = vmatpush.msra.mxu0 %v1012
    %1032 = vmatpush.msra.mxu0 %v1011
    %1033 = vmatpush.msra.mxu0 %v1010
    %1034 = vmatpush.msra.mxu0 %v1009
    %1035 = vmatmul.f32.gmra.mxu0 %v1015
    %v1036 = vpop.f32.mrf.mxu0
    %v1037 = vadd.f32 0.0, %v1036
    %1038 = vmatmul.f32.gmra.mxu0 %v1017
    %v1039 = vpop.f32.mrf.mxu0
    %v1040 = vadd.f32 0.0, %v1039
    %1041 = vdwg.mxu0
    %v1042 = vsel %vm1014, %v456, 0
    %v1044 = vsel %vm1014, %v457, 0
    %1046 = vmatpush.msra.mxu0 0.0
    %1047 = vmatpush.msra.mxu0 0.0
    %1048 = vmatpush.msra.mxu0 0.0
    %1049 = vmatpush.msra.mxu0 0.0
    %1050 = vmatpush.msra.mxu0 0.0
    %1051 = vmatpush.msra.mxu0 0.0
    %1052 = vmatpush.msra.mxu0 0.0
    %1053 = vmatpush.msra.mxu0 0.0
    %1054 = vmatpush.msra.mxu0 0.0
    %1055 = vmatpush.msra.mxu0 0.0
    %1056 = vmatpush.msra.mxu0 0.0
    %1057 = vmatpush.msra.mxu0 %v702
    %1058 = vmatpush.msra.mxu0 %v701
    %1059 = vmatpush.msra.mxu0 %v700
    %1060 = vmatpush.msra.mxu0 %v699
    %1061 = vmatpush.msra.mxu0 %v698
    %1062 = vmatmul.f32.gmra.mxu0 %v1042
    %v1063 = vpop.f32.mrf.mxu0
    %v1064 = vadd.f32 %v1037, %v1063
    %1065 = vmatmul.f32.gmra.mxu0 %v1044
    %v1066 = vpop.f32.mrf.mxu0
    %v1067 = vadd.f32 %v1040, %v1066
    %1068 = vdwg.mxu0
    %s1069 = scalar_lea.vmem %s1, 32
    %v1070 = vld [vmem:[%s1069] sm:$0xff]
    %v1071 = vld [vmem:[%s1069 + $0x8] sm:$0xff]
    %v1072 = vsel %vm44, 1.0, %v1070
    %v1073 = vsel %vm45, 1.0, %v1071
    %v1074 = vsel %vm346, %v1072, 0.0
    %1075 = vadd.xlane.f32.xlu0 %v1074
    %v1076 = vpop.xlane.xlu0 %1075
    %v1077 = vsel %vm346, %v1073, 0.0
    %1078 = vadd.xlane.f32.xlu0 %v1077
    %v1079 = vpop.xlane.xlu0 %1078
    %v1080 = vmax.f32 %v1076, 1.0
    %v1081 = vmax.f32 %v1079, 1.0
    %v1082 = vrsqrt.pop %v1080
    %v1083 = vmul.f32 %v1082, %v1080
    %v1084 = vmul.f32 %v1083, %v1082
    %v1085 = vmul.f32 0.5, %v1084
    %v1086 = vsub.f32 1.5, %v1085
    %v1087 = vmul.f32 %v1082, %v1086
    %vm1088 = vweird.f32 %v1080
    %vm1089 = vweird.f32 %v1082
    %vm1090 = vmor %vm1088, %vm1089
    %v1091 = vsel %vm1090, %v1082, %v1087
    %v1092 = vrsqrt.pop %v1081
    %v1093 = vmul.f32 %v1092, %v1081
    %v1094 = vmul.f32 %v1093, %v1092
    %v1095 = vmul.f32 0.5, %v1094
    %v1096 = vsub.f32 1.5, %v1095
    %v1097 = vmul.f32 %v1092, %v1096
    %vm1098 = vweird.f32 %v1081
    %vm1099 = vweird.f32 %v1092
    %vm1100 = vmor %vm1098, %vm1099
    %v1101 = vsel %vm1100, %v1092, %v1097
    %s1102 = scalar_lea.vmem %s3, 16
    %v1103 = vld [vmem:[%s1102] sm:$0x1f]
    %v1105 = vsel %vm395, %v1103, 0
    %1107 = vmatpush.msra.mxu0 0.0
    %1108 = vmatpush.msra.mxu0 0.0
    %1109 = vmatpush.msra.mxu0 0.0
    %1110 = vmatpush.msra.mxu0 0.0
    %1111 = vmatpush.msra.mxu0 0.0
    %1112 = vmatpush.msra.mxu0 0.0
    %1113 = vmatpush.msra.mxu0 0.0
    %1114 = vmatpush.msra.mxu0 0.0
    %1115 = vmatpush.msra.mxu0 0.0
    %1116 = vmatpush.msra.mxu0 0.0
    %1117 = vmatpush.msra.mxu0 0.0
    %1118 = vmatpush.msra.mxu0 0.0
    %1119 = vmatpush.msra.mxu0 0.0
    %1120 = vmatpush.msra.mxu0 0.0
    %1121 = vmatpush.msra.mxu0 0.0
    %1122 = vmatpush.msra.mxu0 %v1105
    %1123 = vmatmul.f32.gmra.mxu0 %v390
    %v1124 = vpop.f32.mrf.mxu0
    %v1125 = vadd.f32 0.0, %v1124
    %1126 = vmatmul.f32.gmra.mxu0 %v393
    %v1127 = vpop.f32.mrf.mxu0
    %v1128 = vadd.f32 0.0, %v1127
    %1129 = vdwg.mxu0
    %v1130 = vmul.f32 %v1091, %v1125
    %v1131 = vmul.f32 %v1101, %v1128
    %v1133 = vsel %vm346, %v1072, 0
    %v1136 = vsel %vm346, %v1073, 0
    %1138 = vmatpush.msra.mxu0 0.0
    %1139 = vmatpush.msra.mxu0 0.0
    %1140 = vmatpush.msra.mxu0 0.0
    %1141 = vmatpush.msra.mxu0 0.0
    %1142 = vmatpush.msra.mxu0 0.0
    %1143 = vmatpush.msra.mxu0 0.0
    %1144 = vmatpush.msra.mxu0 0.0
    %1145 = vmatpush.msra.mxu0 0.0
    %1146 = vmatpush.msra.mxu0 0.0
    %1147 = vmatpush.msra.mxu0 0.0
    %1148 = vmatpush.msra.mxu0 0.0
    %1149 = vmatpush.msra.mxu0 0.0
    %1150 = vmatpush.msra.mxu0 0.0
    %1151 = vmatpush.msra.mxu0 0.0
    %1152 = vmatpush.msra.mxu0 %v1131
    %1153 = vmatpush.msra.mxu0 %v1130
    %1154 = vmatmul.f32.gmra.mxu0 %v1133
    %v1155 = vpop.f32.mrf.mxu0
    %v1156 = vadd.f32 0.0, %v1155
    %1157 = vmatmul.f32.gmra.mxu0 %v1136
    %v1158 = vpop.f32.mrf.mxu0
    %v1159 = vadd.f32 0.0, %v1158
    %1160 = vdwg.mxu0
    %v1161 = vmul.f32 %v1091, %v1156
    %v1162 = vmul.f32 %v1101, %v1159
    %v1163 = vperm.slane %v1103, 4
    %v1164 = vadd.f32 %v1161, %v1163
    %v1165 = vadd.f32 %v1162, %v1163
    %1168 = vrot.lane.b32.xlu0 %v1164, 112
    %v1169 = vpop.permute.xlu0 %1168
    %1170 = vrot.lane.b32.xlu0 %v1165, 112
    %v1171 = vpop.permute.xlu0 %1170
    %1174 = vmatpush.msra.mxu0 0.0
    %1175 = vmatpush.msra.mxu0 0.0
    %1176 = vmatpush.msra.mxu0 0.0
    %1177 = vmatpush.msra.mxu0 0.0
    %1178 = vmatpush.msra.mxu0 0.0
    %1179 = vmatpush.msra.mxu0 0.0
    %1180 = vmatpush.msra.mxu0 0.0
    %1181 = vmatpush.msra.mxu0 0.0
    %1182 = vmatpush.msra.mxu0 0.0
    %1183 = vmatpush.msra.mxu0 0.0
    %1184 = vmatpush.msra.mxu0 0.0
    %1185 = vmatpush.msra.mxu0 0.0
    %1186 = vmatpush.msra.mxu0 0.0
    %1187 = vmatpush.msra.mxu0 0.0
    %1188 = vmatpush.msra.mxu0 %v1171
    %1189 = vmatpush.msra.mxu0 %v1169
    %1190 = vmatmul.f32.gmra.mxu0 %v467
    %v1191 = vpop.f32.mrf.mxu0
    %v1192 = vadd.f32 0.0, %v1191
    %1193 = vmatmul.f32.gmra.mxu0 %v470
    %v1194 = vpop.f32.mrf.mxu0
    %v1195 = vadd.f32 0.0, %v1194
    %1196 = vmatmul.f32.gmra.mxu0 %v473
    %v1197 = vpop.f32.mrf.mxu0
    %v1198 = vadd.f32 0.0, %v1197
    %1199 = vmatmul.f32.gmra.mxu0 %v476
    %v1200 = vpop.f32.mrf.mxu0
    %v1201 = vadd.f32 0.0, %v1200
    %1202 = vmatmul.f32.gmra.mxu0 %v479
    %v1203 = vpop.f32.mrf.mxu0
    %v1204 = vadd.f32 0.0, %v1203
    %1205 = vmatmul.f32.gmra.mxu0 %v482
    %v1206 = vpop.f32.mrf.mxu0
    %v1207 = vadd.f32 0.0, %v1206
    %1208 = vmatmul.f32.gmra.mxu0 %v485
    %v1209 = vpop.f32.mrf.mxu0
    %v1210 = vadd.f32 0.0, %v1209
    %1211 = vmatmul.f32.gmra.mxu0 %v488
    %v1212 = vpop.f32.mrf.mxu0
    %v1213 = vadd.f32 0.0, %v1212
    %1214 = vdwg.mxu0
    %v1215 = vmul.f32 %v1192, %v329
    %v1216 = vmul.f32 %v1195, %v330
    %v1217 = vmul.f32 %v1198, %v331
    %v1218 = vmul.f32 %v1201, %v332
    %v1219 = vmul.f32 %v1204, %v333
    %v1220 = vmul.f32 %v1207, %v334
    %v1221 = vmul.f32 %v1210, %v335
    %v1222 = vmul.f32 %v1213, %v336
    %v1223 = vsel %vm346, %v1164, 0
    %v1225 = vsel %vm346, %v1165, 0
    %v1228 = vsel %vm346, %v1215, 0
    %v1231 = vsel %vm346, %v1216, 0
    %v1234 = vsel %vm346, %v1217, 0
    %v1237 = vsel %vm346, %v1218, 0
    %v1240 = vsel %vm346, %v1219, 0
    %v1243 = vsel %vm346, %v1220, 0
    %v1246 = vsel %vm346, %v1221, 0
    %v1249 = vsel %vm346, %v1222, 0
    %1251 = vmatpush.xpose.msra.mxu0 0.0
    %1252 = vmatpush.xpose.msra.mxu0 0.0
    %1253 = vmatpush.xpose.msra.mxu0 0.0
    %1254 = vmatpush.xpose.msra.mxu0 0.0
    %1255 = vmatpush.xpose.msra.mxu0 0.0
    %1256 = vmatpush.xpose.msra.mxu0 0.0
    %1257 = vmatpush.xpose.msra.mxu0 0.0
    %1258 = vmatpush.xpose.msra.mxu0 0.0
    %1259 = vmatpush.xpose.msra.mxu0 %v1249
    %1260 = vmatpush.xpose.msra.mxu0 %v1246
    %1261 = vmatpush.xpose.msra.mxu0 %v1243
    %1262 = vmatpush.xpose.msra.mxu0 %v1240
    %1263 = vmatpush.xpose.msra.mxu0 %v1237
    %1264 = vmatpush.xpose.msra.mxu0 %v1234
    %1265 = vmatpush.xpose.msra.mxu0 %v1231
    %1266 = vmatpush.xpose.msra.mxu0 %v1228
    %1267 = vmatmul.f32.gmra.mxu0 %v1223
    %v1268 = vpop.f32.mrf.mxu0
    %v1269 = vadd.f32 0.0, %v1268
    %1270 = vmatmul.f32.gmra.mxu0 %v1225
    %v1271 = vpop.f32.mrf.mxu0
    %v1272 = vadd.f32 0.0, %v1271
    %1273 = vdwg.mxu0
    %v1274 = vmul.f32 %v1269, 0.35355338
    %v1275 = vmul.f32 %v1272, 0.35355338
    %v1276 = vtanh.pop %v1274
    %v1277 = vtanh.pop %v1275
    %v1279 = vsel %vm594, %v1276, 0
    %v1282 = vsel %vm594, %v1277, 0
    %1284 = vmatpush.msra.mxu0 0.0
    %1285 = vmatpush.msra.mxu0 0.0
    %1286 = vmatpush.msra.mxu0 0.0
    %1287 = vmatpush.msra.mxu0 0.0
    %1288 = vmatpush.msra.mxu0 0.0
    %1289 = vmatpush.msra.mxu0 0.0
    %1290 = vmatpush.msra.mxu0 0.0
    %1291 = vmatpush.msra.mxu0 0.0
    %1292 = vmatpush.msra.mxu0 %v128
    %1293 = vmatpush.msra.mxu0 %v127
    %1294 = vmatpush.msra.mxu0 %v126
    %1295 = vmatpush.msra.mxu0 %v125
    %1296 = vmatpush.msra.mxu0 %v124
    %1297 = vmatpush.msra.mxu0 %v123
    %1298 = vmatpush.msra.mxu0 %v122
    %1299 = vmatpush.msra.mxu0 %v121
    %1300 = vmatmul.f32.gmra.mxu0 %v1279
    %v1301 = vpop.f32.mrf.mxu0
    %v1302 = vadd.f32 0.0, %v1301
    %1303 = vmatmul.f32.gmra.mxu0 %v1282
    %v1304 = vpop.f32.mrf.mxu0
    %v1305 = vadd.f32 0.0, %v1304
    %1306 = vdwg.mxu0
    %v1307 = vpack.c.bf16 %v1302, %v1302
    %v1308 = vpack.c.bf16 %v1305, %v1305
    %v1309 = vunpack.c.l.bf16 %v1307
    %v1310 = vunpack.c.l.bf16 %v1308
    %v1311 = vsub.f32 %v1302, %v1309
    %v1312 = vsub.f32 %v1305, %v1310
    %v1314 = vsel %vm346, %v1311, 0
    %v1317 = vsel %vm346, %v1312, 0
    %1319 = vmatpush.xpose.msra.mxu0 0.0
    %1320 = vmatpush.xpose.msra.mxu0 0.0
    %1321 = vmatpush.xpose.msra.mxu0 0.0
    %1322 = vmatpush.xpose.msra.mxu0 0.0
    %1323 = vmatpush.xpose.msra.mxu0 0.0
    %1324 = vmatpush.xpose.msra.mxu0 0.0
    %1325 = vmatpush.xpose.msra.mxu0 0.0
    %1326 = vmatpush.xpose.msra.mxu0 0.0
    %1327 = vmatpush.xpose.msra.mxu0 0.0
    %1328 = vmatpush.xpose.msra.mxu0 0.0
    %1329 = vmatpush.xpose.msra.mxu0 0.0
    %1330 = vmatpush.xpose.msra.mxu0 0.0
    %1331 = vmatpush.xpose.msra.mxu0 0.0
    %1332 = vmatpush.xpose.msra.mxu0 0.0
    %1333 = vmatpush.xpose.msra.mxu0 %v1317
    %1334 = vmatpush.xpose.msra.mxu0 %v1314
    %1335 = vmatmul.f32.gmra.mxu0 %v631
    %v1336 = vpop.f32.mrf.mxu0
    %v1337 = vadd.f32 0.0, %v1336
    %1338 = vmatmul.f32.gmra.mxu0 %v634
    %v1339 = vpop.f32.mrf.mxu0
    %v1340 = vadd.f32 0.0, %v1339
    %1341 = vdwg.mxu0
    %v1343 = vsel %vm346, %v1309, 0
    %v1346 = vsel %vm346, %v1310, 0
    %1348 = vmatpush.xpose.msra.mxu0 0.0
    %1349 = vmatpush.xpose.msra.mxu0 0.0
    %1350 = vmatpush.xpose.msra.mxu0 0.0
    %1351 = vmatpush.xpose.msra.mxu0 0.0
    %1352 = vmatpush.xpose.msra.mxu0 0.0
    %1353 = vmatpush.xpose.msra.mxu0 0.0
    %1354 = vmatpush.xpose.msra.mxu0 0.0
    %1355 = vmatpush.xpose.msra.mxu0 0.0
    %1356 = vmatpush.xpose.msra.mxu0 0.0
    %1357 = vmatpush.xpose.msra.mxu0 0.0
    %1358 = vmatpush.xpose.msra.mxu0 0.0
    %1359 = vmatpush.xpose.msra.mxu0 0.0
    %1360 = vmatpush.xpose.msra.mxu0 0.0
    %1361 = vmatpush.xpose.msra.mxu0 0.0
    %1362 = vmatpush.xpose.msra.mxu0 %v1346
    %1363 = vmatpush.xpose.msra.mxu0 %v1343
    %1364 = vmatmul.f32.gmra.mxu0 %v631
    %v1365 = vpop.f32.mrf.mxu0
    %v1366 = vadd.f32 %v1337, %v1365
    %1367 = vmatmul.f32.gmra.mxu0 %v634
    %v1368 = vpop.f32.mrf.mxu0
    %v1369 = vadd.f32 %v1340, %v1368
    %1370 = vdwg.mxu0
    %v1371 = vadd.f32 %v1302, %v1366
    %v1372 = vadd.f32 %v1305, %v1369
    %v1373 = vmul.f32 %v1371, 0.125
    %v1374 = vmul.f32 %v1372, 0.125
    %v1375 = vld [vmem:[%s4 + $0x50] sm:$0xff]
    %v1376 = vld [vmem:[%s4 + $0x58] sm:$0xff]
    %v1377 = vld [vmem:[%s4 + $0x60] sm:$0xff]
    %v1378 = vld [vmem:[%s4 + $0x68] sm:$0xff]
    %v1379 = vld [vmem:[%s4 + $0x70] sm:$0xff]
    %v1380 = vsel %vm1014, %v1164, 0
    %v1382 = vsel %vm1014, %v1165, 0
    %1384 = vmatpush.msra.mxu0 0.0
    %1385 = vmatpush.msra.mxu0 0.0
    %1386 = vmatpush.msra.mxu0 0.0
    %1387 = vmatpush.msra.mxu0 0.0
    %1388 = vmatpush.msra.mxu0 0.0
    %1389 = vmatpush.msra.mxu0 0.0
    %1390 = vmatpush.msra.mxu0 0.0
    %1391 = vmatpush.msra.mxu0 0.0
    %1392 = vmatpush.msra.mxu0 0.0
    %1393 = vmatpush.msra.mxu0 0.0
    %1394 = vmatpush.msra.mxu0 0.0
    %1395 = vmatpush.msra.mxu0 %v1379
    %1396 = vmatpush.msra.mxu0 %v1378
    %1397 = vmatpush.msra.mxu0 %v1377
    %1398 = vmatpush.msra.mxu0 %v1376
    %1399 = vmatpush.msra.mxu0 %v1375
    %1400 = vmatmul.f32.gmra.mxu0 %v1380
    %v1401 = vpop.f32.mrf.mxu0
    %v1402 = vadd.f32 0.0, %v1401
    %1403 = vmatmul.f32.gmra.mxu0 %v1382
    %v1404 = vpop.f32.mrf.mxu0
    %v1405 = vadd.f32 0.0, %v1404
    %1406 = vdwg.mxu0
    %v1407 = vadd.f32 %v1064, %v1402
    %v1408 = vadd.f32 %v1067, %v1405
    %v1409 = vperm.slane %v337, 0
    %v1410 = vadd.f32 %v1407, %v1409
    %v1411 = vadd.f32 %v1408, %v1409
    %vm1412 = vcmp.gt.f32.partialorder %v1410, 0.0
    %vm1413 = vcmp.gt.f32.partialorder %v1411, 0.0
    %v1414 = vmin.f32 %v1410, 0.0
    %v1415 = vmin.f32 %v1411, 0.0
    %v1416 = vmul.f32 %v1414, 1.442695
    %v1417 = vpow.pop %v1416
    %v1418 = vmul.f32 %v1415, 1.442695
    %v1419 = vpow.pop %v1418
    %v1420 = vsub.f32 %v1417, 1.0
    %v1421 = vsub.f32 %v1419, 1.0
    %v1422 = vsel %vm1412, %v1410, %v1420
    %v1423 = vsel %vm1413, %v1411, %v1421
    %v1424 = vperm.slane %v339, 0
    %vm1425 = vcmask 64512
    %v1427 = vsel %vm1425, %v1422, 0
    %v1430 = vsel %vm1425, %v1423, 0
    %1432 = vmatpush.msra.mxu0 0.0
    %1433 = vmatpush.msra.mxu0 0.0
    %1434 = vmatpush.msra.mxu0 0.0
    %1435 = vmatpush.msra.mxu0 0.0
    %1436 = vmatpush.msra.mxu0 0.0
    %1437 = vmatpush.msra.mxu0 0.0
    %1438 = vmatpush.msra.mxu0 0.0
    %1439 = vmatpush.msra.mxu0 0.0
    %1440 = vmatpush.msra.mxu0 0.0
    %1441 = vmatpush.msra.mxu0 0.0
    %1442 = vmatpush.msra.mxu0 0.0
    %1443 = vmatpush.msra.mxu0 0.0
    %1444 = vmatpush.msra.mxu0 0.0
    %1445 = vmatpush.msra.mxu0 0.0
    %1446 = vmatpush.msra.mxu0 0.0
    %1447 = vmatpush.msra.mxu0 %v338
    %1448 = vmatmul.f32.gmra.mxu0 %v1427
    %v1449 = vpop.f32.mrf.mxu0
    %v1450 = vadd.f32 %v1424, %v1449
    %1451 = vmatmul.f32.gmra.mxu0 %v1430
    %v1452 = vpop.f32.mrf.mxu0
    %v1453 = vadd.f32 %v1424, %v1452
    %1454 = vdwg.mxu0
    %v1455 = vmul.f32 %v1450, %v349
    %v1456 = vmul.f32 %v1453, %v352
    %v1457 = vtanh.pop %v1455
    %v1458 = vtanh.pop %v1456
    %1459 = vst.msk [vmem:[%s6] sm:$0xff] %vm1425, %v1457
    %1460 = vst.msk [vmem:[%s6 + $0x8] sm:$0xff] %vm1425, %v1458
    %s1461 = sld [smem:[#allocation2]]
    %v1462 = vstv %s1461
    %v1463 = vmul.f32 %v696, %v1462
    %v1464 = vmul.f32 %v697, %v1462
    %s1465 = sld [smem:[#allocation2 + $0x6]]
    %v1466 = vstv %s1465
    %v1467 = vmul.f32 %v1007, %v1466
    %v1468 = vmul.f32 %v1008, %v1466
    %v1469 = vadd.f32 %v1463, %v1467
    %v1470 = vadd.f32 %v1464, %v1468
    %s1471 = sld [smem:[#allocation2 + $0xc]]
    %v1472 = vstv %s1471
    %v1473 = vmul.f32 %v1373, %v1472
    %v1474 = vmul.f32 %v1374, %v1472
    %v1475 = vadd.f32 %v1469, %v1473
    %v1476 = vadd.f32 %v1470, %v1474
    %s1477 = sld [smem:[#allocation2 + $0x12]]
    %v1478 = vstv %s1477
    %v1479 = vmul.f32 %v355, %v1478
    %v1480 = vmul.f32 %v356, %v1478
    %v1481 = vadd.f32 %v1475, %v1479
    %v1482 = vadd.f32 %v1476, %v1480
    %s1483 = sld [smem:[#allocation2 + $0x18]]
    %v1484 = vstv %s1483
    %v1485 = vmul.f32 %v704, %v1484
    %v1486 = vmul.f32 %v705, %v1484
    %v1487 = vadd.f32 %v1481, %v1485
    %v1488 = vadd.f32 %v1482, %v1486
    %s1489 = sld [smem:[#allocation2 + $0x1e]]
    %v1490 = vstv %s1489
    %v1491 = vmul.f32 %v1070, %v1490
    %v1492 = vmul.f32 %v1071, %v1490
    %v1493 = vadd.f32 %v1487, %v1491
    %v1494 = vadd.f32 %v1488, %v1492
    %s1495 = sld [smem:[#allocation2 + $0x24]]
    %v1496 = vstv %s1495
    %v1497 = vadd.f32 %v1493, %v1496
    %v1498 = vadd.f32 %v1494, %v1496
    %vm1499 = vcmp.gt.f32.partialorder %v1497, 0.0
    %vm1500 = vcmp.gt.f32.partialorder %v1498, 0.0
    %v1501 = vmin.f32 %v1497, 0.0
    %v1502 = vmin.f32 %v1498, 0.0
    %v1503 = vmul.f32 %v1501, 1.442695
    %v1504 = vpow.pop %v1503
    %v1505 = vmul.f32 %v1502, 1.442695
    %v1506 = vpow.pop %v1505
    %v1507 = vsub.f32 %v1504, 1.0
    %v1508 = vsub.f32 %v1506, 1.0
    %v1509 = vsel %vm1499, %v1497, %v1507
    %v1510 = vsel %vm1500, %v1498, %v1508
    %s1511 = sld [smem:[#allocation2 + $0x2a]]
    %v1512 = vstv %s1511
    %v1513 = vmul.f32 %v1509, %v1512
    %v1514 = vmul.f32 %v1510, %v1512
    %v1515 = vadd.f32 %v1513, 0.0
    %v1516 = vadd.f32 %v1514, 0.0
    %s1517 = sld [smem:[#allocation2 + $0x2b]]
    %v1518 = vstv %s1517
    %v1519 = vmul.f32 %v1509, %v1518
    %v1520 = vmul.f32 %v1510, %v1518
    %v1521 = vadd.f32 %v1519, 0.0
    %v1522 = vadd.f32 %v1520, 0.0
    %s1523 = sld [smem:[#allocation2 + $0x1]]
    %v1524 = vstv %s1523
    %v1525 = vmul.f32 %v696, %v1524
    %v1526 = vmul.f32 %v697, %v1524
    %s1527 = sld [smem:[#allocation2 + $0x7]]
    %v1528 = vstv %s1527
    %v1529 = vmul.f32 %v1007, %v1528
    %v1530 = vmul.f32 %v1008, %v1528
    %v1531 = vadd.f32 %v1525, %v1529
    %v1532 = vadd.f32 %v1526, %v1530
    %s1533 = sld [smem:[#allocation2 + $0xd]]
    %v1534 = vstv %s1533
    %v1535 = vmul.f32 %v1373, %v1534
    %v1536 = vmul.f32 %v1374, %v1534
    %v1537 = vadd.f32 %v1531, %v1535
    %v1538 = vadd.f32 %v1532, %v1536
    %s1539 = sld [smem:[#allocation2 + $0x13]]
    %v1540 = vstv %s1539
    %v1541 = vmul.f32 %v355, %v1540
    %v1542 = vmul.f32 %v356, %v1540
    %v1543 = vadd.f32 %v1537, %v1541
    %v1544 = vadd.f32 %v1538, %v1542
    %s1545 = sld [smem:[#allocation2 + $0x19]]
    %v1546 = vstv %s1545
    %v1547 = vmul.f32 %v704, %v1546
    %v1548 = vmul.f32 %v705, %v1546
    %v1549 = vadd.f32 %v1543, %v1547
    %v1550 = vadd.f32 %v1544, %v1548
    %s1551 = sld [smem:[#allocation2 + $0x1f]]
    %v1552 = vstv %s1551
    %v1553 = vmul.f32 %v1070, %v1552
    %v1554 = vmul.f32 %v1071, %v1552
    %v1555 = vadd.f32 %v1549, %v1553
    %v1556 = vadd.f32 %v1550, %v1554
    %s1557 = sld [smem:[#allocation2 + $0x25]]
    %v1558 = vstv %s1557
    %v1559 = vadd.f32 %v1555, %v1558
    %v1560 = vadd.f32 %v1556, %v1558
    %vm1561 = vcmp.gt.f32.partialorder %v1559, 0.0
    %vm1562 = vcmp.gt.f32.partialorder %v1560, 0.0
    %v1563 = vmin.f32 %v1559, 0.0
    %v1564 = vmin.f32 %v1560, 0.0
    %v1565 = vmul.f32 %v1563, 1.442695
    %v1566 = vpow.pop %v1565
    %v1567 = vmul.f32 %v1564, 1.442695
    %v1568 = vpow.pop %v1567
    %v1569 = vsub.f32 %v1566, 1.0
    %v1570 = vsub.f32 %v1568, 1.0
    %v1571 = vsel %vm1561, %v1559, %v1569
    %v1572 = vsel %vm1562, %v1560, %v1570
    %s1573 = sld [smem:[#allocation2 + $0x2c]]
    %v1574 = vstv %s1573
    %v1575 = vmul.f32 %v1571, %v1574
    %v1576 = vmul.f32 %v1572, %v1574
    %v1577 = vadd.f32 %v1515, %v1575
    %v1578 = vadd.f32 %v1516, %v1576
    %s1579 = sld [smem:[#allocation2 + $0x2d]]
    %v1580 = vstv %s1579
    %v1581 = vmul.f32 %v1571, %v1580
    %v1582 = vmul.f32 %v1572, %v1580
    %v1583 = vadd.f32 %v1521, %v1581
    %v1584 = vadd.f32 %v1522, %v1582
    %s1585 = sld [smem:[#allocation2 + $0x2]]
    %v1586 = vstv %s1585
    %v1587 = vmul.f32 %v696, %v1586
    %v1588 = vmul.f32 %v697, %v1586
    %s1589 = sld [smem:[#allocation2 + $0x8]]
    %v1590 = vstv %s1589
    %v1591 = vmul.f32 %v1007, %v1590
    %v1592 = vmul.f32 %v1008, %v1590
    %v1593 = vadd.f32 %v1587, %v1591
    %v1594 = vadd.f32 %v1588, %v1592
    %s1595 = sld [smem:[#allocation2 + $0xe]]
    %v1596 = vstv %s1595
    %v1597 = vmul.f32 %v1373, %v1596
    %v1598 = vmul.f32 %v1374, %v1596
    %v1599 = vadd.f32 %v1593, %v1597
    %v1600 = vadd.f32 %v1594, %v1598
    %s1601 = sld [smem:[#allocation2 + $0x14]]
    %v1602 = vstv %s1601
    %v1603 = vmul.f32 %v355, %v1602
    %v1604 = vmul.f32 %v356, %v1602
    %v1605 = vadd.f32 %v1599, %v1603
    %v1606 = vadd.f32 %v1600, %v1604
    %s1607 = sld [smem:[#allocation2 + $0x1a]]
    %v1608 = vstv %s1607
    %v1609 = vmul.f32 %v704, %v1608
    %v1610 = vmul.f32 %v705, %v1608
    %v1611 = vadd.f32 %v1605, %v1609
    %v1612 = vadd.f32 %v1606, %v1610
    %s1613 = sld [smem:[#allocation2 + $0x20]]
    %v1614 = vstv %s1613
    %v1615 = vmul.f32 %v1070, %v1614
    %v1616 = vmul.f32 %v1071, %v1614
    %v1617 = vadd.f32 %v1611, %v1615
    %v1618 = vadd.f32 %v1612, %v1616
    %s1619 = sld [smem:[#allocation2 + $0x26]]
    %v1620 = vstv %s1619
    %v1621 = vadd.f32 %v1617, %v1620
    %v1622 = vadd.f32 %v1618, %v1620
    %vm1623 = vcmp.gt.f32.partialorder %v1621, 0.0
    %vm1624 = vcmp.gt.f32.partialorder %v1622, 0.0
    %v1625 = vmin.f32 %v1621, 0.0
    %v1626 = vmin.f32 %v1622, 0.0
    %v1627 = vmul.f32 %v1625, 1.442695
    %v1628 = vpow.pop %v1627
    %v1629 = vmul.f32 %v1626, 1.442695
    %v1630 = vpow.pop %v1629
    %v1631 = vsub.f32 %v1628, 1.0
    %v1632 = vsub.f32 %v1630, 1.0
    %v1633 = vsel %vm1623, %v1621, %v1631
    %v1634 = vsel %vm1624, %v1622, %v1632
    %s1635 = sld [smem:[#allocation2 + $0x2e]]
    %v1636 = vstv %s1635
    %v1637 = vmul.f32 %v1633, %v1636
    %v1638 = vmul.f32 %v1634, %v1636
    %v1639 = vadd.f32 %v1577, %v1637
    %v1640 = vadd.f32 %v1578, %v1638
    %s1641 = sld [smem:[#allocation2 + $0x2f]]
    %v1642 = vstv %s1641
    %v1643 = vmul.f32 %v1633, %v1642
    %v1644 = vmul.f32 %v1634, %v1642
    %v1645 = vadd.f32 %v1583, %v1643
    %v1646 = vadd.f32 %v1584, %v1644
    %s1647 = sld [smem:[#allocation2 + $0x3]]
    %v1648 = vstv %s1647
    %v1649 = vmul.f32 %v696, %v1648
    %v1650 = vmul.f32 %v697, %v1648
    %s1651 = sld [smem:[#allocation2 + $0x9]]
    %v1652 = vstv %s1651
    %v1653 = vmul.f32 %v1007, %v1652
    %v1654 = vmul.f32 %v1008, %v1652
    %v1655 = vadd.f32 %v1649, %v1653
    %v1656 = vadd.f32 %v1650, %v1654
    %s1657 = sld [smem:[#allocation2 + $0xf]]
    %v1658 = vstv %s1657
    %v1659 = vmul.f32 %v1373, %v1658
    %v1660 = vmul.f32 %v1374, %v1658
    %v1661 = vadd.f32 %v1655, %v1659
    %v1662 = vadd.f32 %v1656, %v1660
    %s1663 = sld [smem:[#allocation2 + $0x15]]
    %v1664 = vstv %s1663
    %v1665 = vmul.f32 %v355, %v1664
    %v1666 = vmul.f32 %v356, %v1664
    %v1667 = vadd.f32 %v1661, %v1665
    %v1668 = vadd.f32 %v1662, %v1666
    %s1669 = sld [smem:[#allocation2 + $0x1b]]
    %v1670 = vstv %s1669
    %v1671 = vmul.f32 %v704, %v1670
    %v1672 = vmul.f32 %v705, %v1670
    %v1673 = vadd.f32 %v1667, %v1671
    %v1674 = vadd.f32 %v1668, %v1672
    %s1675 = sld [smem:[#allocation2 + $0x21]]
    %v1676 = vstv %s1675
    %v1677 = vmul.f32 %v1070, %v1676
    %v1678 = vmul.f32 %v1071, %v1676
    %v1679 = vadd.f32 %v1673, %v1677
    %v1680 = vadd.f32 %v1674, %v1678
    %s1681 = sld [smem:[#allocation2 + $0x27]]
    %v1682 = vstv %s1681
    %v1683 = vadd.f32 %v1679, %v1682
    %v1684 = vadd.f32 %v1680, %v1682
    %vm1685 = vcmp.gt.f32.partialorder %v1683, 0.0
    %vm1686 = vcmp.gt.f32.partialorder %v1684, 0.0
    %v1687 = vmin.f32 %v1683, 0.0
    %v1688 = vmin.f32 %v1684, 0.0
    %v1689 = vmul.f32 %v1687, 1.442695
    %v1690 = vpow.pop %v1689
    %v1691 = vmul.f32 %v1688, 1.442695
    %v1692 = vpow.pop %v1691
    %v1693 = vsub.f32 %v1690, 1.0
    %v1694 = vsub.f32 %v1692, 1.0
    %v1695 = vsel %vm1685, %v1683, %v1693
    %v1696 = vsel %vm1686, %v1684, %v1694
    %s1697 = sld [smem:[#allocation2 + $0x30]]
    %v1698 = vstv %s1697
    %v1699 = vmul.f32 %v1695, %v1698
    %v1700 = vmul.f32 %v1696, %v1698
    %v1701 = vadd.f32 %v1639, %v1699
    %v1702 = vadd.f32 %v1640, %v1700
    %s1703 = sld [smem:[#allocation2 + $0x31]]
    %v1704 = vstv %s1703
    %v1705 = vmul.f32 %v1695, %v1704
    %v1706 = vmul.f32 %v1696, %v1704
    %v1707 = vadd.f32 %v1645, %v1705
    %v1708 = vadd.f32 %v1646, %v1706
    %s1709 = sld [smem:[#allocation2 + $0x4]]
    %v1710 = vstv %s1709
    %v1711 = vmul.f32 %v696, %v1710
    %v1712 = vmul.f32 %v697, %v1710
    %s1713 = sld [smem:[#allocation2 + $0xa]]
    %v1714 = vstv %s1713
    %v1715 = vmul.f32 %v1007, %v1714
    %v1716 = vmul.f32 %v1008, %v1714
    %v1717 = vadd.f32 %v1711, %v1715
    %v1718 = vadd.f32 %v1712, %v1716
    %s1719 = sld [smem:[#allocation2 + $0x10]]
    %v1720 = vstv %s1719
    %v1721 = vmul.f32 %v1373, %v1720
    %v1722 = vmul.f32 %v1374, %v1720
    %v1723 = vadd.f32 %v1717, %v1721
    %v1724 = vadd.f32 %v1718, %v1722
    %s1725 = sld [smem:[#allocation2 + $0x16]]
    %v1726 = vstv %s1725
    %v1727 = vmul.f32 %v355, %v1726
    %v1728 = vmul.f32 %v356, %v1726
    %v1729 = vadd.f32 %v1723, %v1727
    %v1730 = vadd.f32 %v1724, %v1728
    %s1731 = sld [smem:[#allocation2 + $0x1c]]
    %v1732 = vstv %s1731
    %v1733 = vmul.f32 %v704, %v1732
    %v1734 = vmul.f32 %v705, %v1732
    %v1735 = vadd.f32 %v1729, %v1733
    %v1736 = vadd.f32 %v1730, %v1734
    %s1737 = sld [smem:[#allocation2 + $0x22]]
    %v1738 = vstv %s1737
    %v1739 = vmul.f32 %v1070, %v1738
    %v1740 = vmul.f32 %v1071, %v1738
    %v1741 = vadd.f32 %v1735, %v1739
    %v1742 = vadd.f32 %v1736, %v1740
    %s1743 = sld [smem:[#allocation2 + $0x28]]
    %v1744 = vstv %s1743
    %v1745 = vadd.f32 %v1741, %v1744
    %v1746 = vadd.f32 %v1742, %v1744
    %vm1747 = vcmp.gt.f32.partialorder %v1745, 0.0
    %vm1748 = vcmp.gt.f32.partialorder %v1746, 0.0
    %v1749 = vmin.f32 %v1745, 0.0
    %v1750 = vmin.f32 %v1746, 0.0
    %v1751 = vmul.f32 %v1749, 1.442695
    %v1752 = vpow.pop %v1751
    %v1753 = vmul.f32 %v1750, 1.442695
    %v1754 = vpow.pop %v1753
    %v1755 = vsub.f32 %v1752, 1.0
    %v1756 = vsub.f32 %v1754, 1.0
    %v1757 = vsel %vm1747, %v1745, %v1755
    %v1758 = vsel %vm1748, %v1746, %v1756
    %s1759 = sld [smem:[#allocation2 + $0x32]]
    %v1760 = vstv %s1759
    %v1761 = vmul.f32 %v1757, %v1760
    %v1762 = vmul.f32 %v1758, %v1760
    %v1763 = vadd.f32 %v1701, %v1761
    %v1764 = vadd.f32 %v1702, %v1762
    %s1765 = sld [smem:[#allocation2 + $0x33]]
    %v1766 = vstv %s1765
    %v1767 = vmul.f32 %v1757, %v1766
    %v1768 = vmul.f32 %v1758, %v1766
    %v1769 = vadd.f32 %v1707, %v1767
    %v1770 = vadd.f32 %v1708, %v1768
    %s1771 = sld [smem:[#allocation2 + $0x5]]
    %v1772 = vstv %s1771
    %v1773 = vmul.f32 %v696, %v1772
    %v1774 = vmul.f32 %v697, %v1772
    %s1775 = sld [smem:[#allocation2 + $0xb]]
    %v1776 = vstv %s1775
    %v1777 = vmul.f32 %v1007, %v1776
    %v1778 = vmul.f32 %v1008, %v1776
    %v1779 = vadd.f32 %v1773, %v1777
    %v1780 = vadd.f32 %v1774, %v1778
    %s1781 = sld [smem:[#allocation2 + $0x11]]
    %v1782 = vstv %s1781
    %v1783 = vmul.f32 %v1373, %v1782
    %v1784 = vmul.f32 %v1374, %v1782
    %v1785 = vadd.f32 %v1779, %v1783
    %v1786 = vadd.f32 %v1780, %v1784
    %s1787 = sld [smem:[#allocation2 + $0x17]]
    %v1788 = vstv %s1787
    %v1789 = vmul.f32 %v355, %v1788
    %v1790 = vmul.f32 %v356, %v1788
    %v1791 = vadd.f32 %v1785, %v1789
    %v1792 = vadd.f32 %v1786, %v1790
    %s1793 = sld [smem:[#allocation2 + $0x1d]]
    %v1794 = vstv %s1793
    %v1795 = vmul.f32 %v704, %v1794
    %v1796 = vmul.f32 %v705, %v1794
    %v1797 = vadd.f32 %v1791, %v1795
    %v1798 = vadd.f32 %v1792, %v1796
    %s1799 = sld [smem:[#allocation2 + $0x23]]
    %v1800 = vstv %s1799
    %v1801 = vmul.f32 %v1070, %v1800
    %v1802 = vmul.f32 %v1071, %v1800
    %v1803 = vadd.f32 %v1797, %v1801
    %v1804 = vadd.f32 %v1798, %v1802
    %s1805 = sld [smem:[#allocation2 + $0x29]]
    %v1806 = vstv %s1805
    %v1807 = vadd.f32 %v1803, %v1806
    %v1808 = vadd.f32 %v1804, %v1806
    %vm1809 = vcmp.gt.f32.partialorder %v1807, 0.0
    %vm1810 = vcmp.gt.f32.partialorder %v1808, 0.0
    %v1811 = vmin.f32 %v1807, 0.0
    %v1812 = vmin.f32 %v1808, 0.0
    %v1813 = vmul.f32 %v1811, 1.442695
    %v1814 = vpow.pop %v1813
    %v1815 = vmul.f32 %v1812, 1.442695
    %v1816 = vpow.pop %v1815
    %v1817 = vsub.f32 %v1814, 1.0
    %v1818 = vsub.f32 %v1816, 1.0
    %v1819 = vsel %vm1809, %v1807, %v1817
    %v1820 = vsel %vm1810, %v1808, %v1818
    %s1821 = sld [smem:[#allocation2 + $0x34]]
    %v1822 = vstv %s1821
    %v1823 = vmul.f32 %v1819, %v1822
    %v1824 = vmul.f32 %v1820, %v1822
    %v1825 = vadd.f32 %v1763, %v1823
    %v1826 = vadd.f32 %v1764, %v1824
    %s1827 = sld [smem:[#allocation2 + $0x35]]
    %v1828 = vstv %s1827
    %v1829 = vmul.f32 %v1819, %v1828
    %v1830 = vmul.f32 %v1820, %v1828
    %v1831 = vadd.f32 %v1769, %v1829
    %v1832 = vadd.f32 %v1770, %v1830
    %v1833 = vmul.f32 %v349, %v342
    %v1834 = vmul.f32 %v352, %v342
    %s1835 = sld [smem:[#allocation2 + $0x36]]
    %v1836 = vstv %s1835
    %v1837 = vadd.f32 %v1825, %v1836
    %v1838 = vadd.f32 %v1826, %v1836
    %v1839 = vpack.c.bf16 %v1837, %v1837
    %v1840 = vpack.c.bf16 %v1838, %v1838
    %v1841 = vunpack.c.l.bf16 %v1839
    %v1842 = vunpack.c.l.bf16 %v1840
    %v1843 = vsub.f32 %v1837, %v1841
    %v1844 = vsub.f32 %v1838, %v1842
    %v1846 = vsel %vm346, %v1843, 0
    %v1849 = vsel %vm346, %v1844, 0
    %1851 = vmatpush.xpose.msra.mxu0 0.0
    %1852 = vmatpush.xpose.msra.mxu0 0.0
    %1853 = vmatpush.xpose.msra.mxu0 0.0
    %1854 = vmatpush.xpose.msra.mxu0 0.0
    %1855 = vmatpush.xpose.msra.mxu0 0.0
    %1856 = vmatpush.xpose.msra.mxu0 0.0
    %1857 = vmatpush.xpose.msra.mxu0 0.0
    %1858 = vmatpush.xpose.msra.mxu0 0.0
    %1859 = vmatpush.xpose.msra.mxu0 0.0
    %1860 = vmatpush.xpose.msra.mxu0 0.0
    %1861 = vmatpush.xpose.msra.mxu0 0.0
    %1862 = vmatpush.xpose.msra.mxu0 0.0
    %1863 = vmatpush.xpose.msra.mxu0 0.0
    %1864 = vmatpush.xpose.msra.mxu0 0.0
    %1865 = vmatpush.xpose.msra.mxu0 %v1849
    %1866 = vmatpush.xpose.msra.mxu0 %v1846
    %1867 = vmatmul.f32.gmra.mxu0 %v631
    %v1868 = vpop.f32.mrf.mxu0
    %v1869 = vadd.f32 0.0, %v1868
    %1870 = vmatmul.f32.gmra.mxu0 %v634
    %v1871 = vpop.f32.mrf.mxu0
    %v1872 = vadd.f32 0.0, %v1871
    %1873 = vdwg.mxu0
    %v1875 = vsel %vm346, %v1841, 0
    %v1878 = vsel %vm346, %v1842, 0
    %1880 = vmatpush.xpose.msra.mxu0 0.0
    %1881 = vmatpush.xpose.msra.mxu0 0.0
    %1882 = vmatpush.xpose.msra.mxu0 0.0
    %1883 = vmatpush.xpose.msra.mxu0 0.0
    %1884 = vmatpush.xpose.msra.mxu0 0.0
    %1885 = vmatpush.xpose.msra.mxu0 0.0
    %1886 = vmatpush.xpose.msra.mxu0 0.0
    %1887 = vmatpush.xpose.msra.mxu0 0.0
    %1888 = vmatpush.xpose.msra.mxu0 0.0
    %1889 = vmatpush.xpose.msra.mxu0 0.0
    %1890 = vmatpush.xpose.msra.mxu0 0.0
    %1891 = vmatpush.xpose.msra.mxu0 0.0
    %1892 = vmatpush.xpose.msra.mxu0 0.0
    %1893 = vmatpush.xpose.msra.mxu0 0.0
    %1894 = vmatpush.xpose.msra.mxu0 %v1878
    %1895 = vmatpush.xpose.msra.mxu0 %v1875
    %1896 = vmatmul.f32.gmra.mxu0 %v631
    %v1897 = vpop.f32.mrf.mxu0
    %v1898 = vadd.f32 %v1869, %v1897
    %1899 = vmatmul.f32.gmra.mxu0 %v634
    %v1900 = vpop.f32.mrf.mxu0
    %v1901 = vadd.f32 %v1872, %v1900
    %1902 = vdwg.mxu0
    %v1903 = vadd.f32 %v1837, %v1898
    %v1904 = vadd.f32 %v1838, %v1901
    %v1905 = vmul.f32 %v1903, %v1833
    %v1906 = vmul.f32 %v1904, %v1834
    %1907 = vst.msk [vmem:[#allocation5] sm:$0xff] %vm346, %v1905
    %1908 = vst.msk [vmem:[#allocation5 + $0x8] sm:$0xff] %vm346, %v1906
    %s1909 = sld [smem:[#allocation2 + $0x37]]
    %v1910 = vstv %s1909
    %v1911 = vadd.f32 %v1831, %v1910
    %v1912 = vadd.f32 %v1832, %v1910
    %v1913 = vpack.c.bf16 %v1911, %v1911
    %v1914 = vpack.c.bf16 %v1912, %v1912
    %v1915 = vunpack.c.l.bf16 %v1913
    %v1916 = vunpack.c.l.bf16 %v1914
    %v1917 = vsub.f32 %v1911, %v1915
    %v1918 = vsub.f32 %v1912, %v1916
    %v1920 = vsel %vm346, %v1917, 0
    %v1923 = vsel %vm346, %v1918, 0
    %1925 = vmatpush.xpose.msra.mxu0 0.0
    %1926 = vmatpush.xpose.msra.mxu0 0.0
    %1927 = vmatpush.xpose.msra.mxu0 0.0
    %1928 = vmatpush.xpose.msra.mxu0 0.0
    %1929 = vmatpush.xpose.msra.mxu0 0.0
    %1930 = vmatpush.xpose.msra.mxu0 0.0
    %1931 = vmatpush.xpose.msra.mxu0 0.0
    %1932 = vmatpush.xpose.msra.mxu0 0.0
    %1933 = vmatpush.xpose.msra.mxu0 0.0
    %1934 = vmatpush.xpose.msra.mxu0 0.0
    %1935 = vmatpush.xpose.msra.mxu0 0.0
    %1936 = vmatpush.xpose.msra.mxu0 0.0
    %1937 = vmatpush.xpose.msra.mxu0 0.0
    %1938 = vmatpush.xpose.msra.mxu0 0.0
    %1939 = vmatpush.xpose.msra.mxu0 %v1923
    %1940 = vmatpush.xpose.msra.mxu0 %v1920
    %1941 = vmatmul.f32.gmra.mxu0 %v631
    %v1942 = vpop.f32.mrf.mxu0
    %v1943 = vadd.f32 0.0, %v1942
    %1944 = vmatmul.f32.gmra.mxu0 %v634
    %v1945 = vpop.f32.mrf.mxu0
    %v1946 = vadd.f32 0.0, %v1945
    %1947 = vdwg.mxu0
    %v1949 = vsel %vm346, %v1915, 0
    %v1952 = vsel %vm346, %v1916, 0
    %1954 = vmatpush.xpose.msra.mxu0 0.0
    %1955 = vmatpush.xpose.msra.mxu0 0.0
    %1956 = vmatpush.xpose.msra.mxu0 0.0
    %1957 = vmatpush.xpose.msra.mxu0 0.0
    %1958 = vmatpush.xpose.msra.mxu0 0.0
    %1959 = vmatpush.xpose.msra.mxu0 0.0
    %1960 = vmatpush.xpose.msra.mxu0 0.0
    %1961 = vmatpush.xpose.msra.mxu0 0.0
    %1962 = vmatpush.xpose.msra.mxu0 0.0
    %1963 = vmatpush.xpose.msra.mxu0 0.0
    %1964 = vmatpush.xpose.msra.mxu0 0.0
    %1965 = vmatpush.xpose.msra.mxu0 0.0
    %1966 = vmatpush.xpose.msra.mxu0 0.0
    %1967 = vmatpush.xpose.msra.mxu0 0.0
    %1968 = vmatpush.xpose.msra.mxu0 %v1952
    %1969 = vmatpush.xpose.msra.mxu0 %v1949
    %1970 = vmatmul.f32.gmra.mxu0 %v631
    %v1971 = vpop.f32.mrf.mxu0
    %v1972 = vadd.f32 %v1943, %v1971
    %1973 = vmatmul.f32.gmra.mxu0 %v634
    %v1974 = vpop.f32.mrf.mxu0
    %v1975 = vadd.f32 %v1946, %v1974
    %1976 = vdwg.mxu0
    %v1977 = vadd.f32 %v1911, %v1972
    %v1978 = vadd.f32 %v1912, %v1975
    %v1979 = vmul.f32 %v1977, %v1833
    %v1980 = vmul.f32 %v1978, %v1834
    %s1981 = scalar_lea.vmem [#allocation5], 16
    %1982 = vst.msk [vmem:[%s1981] sm:$0xff] %vm346, %v1979
    %1983 = vst.msk [vmem:[%s1981 + $0x8] sm:$0xff] %vm346, %v1980
    %s1984 = scalar_lea.vmem %s2, 1
    %v1985 = vld [vmem:[%s1984] sm:$0x1]
    %v1987 = vperm.slane %v1985, 0
    %v1989 = vmul.f32 %v48, %v1987
    %v1990 = vmul.f32 %v49, %v1987
    %v1991 = vsel %vm346, %v1989, 0.0
    %1992 = vadd.xlane.f32.xlu0 %v1991
    %v1993 = vpop.xlane.xlu0 %1992
    %v1994 = vsel %vm346, %v1990, 0.0
    %1995 = vadd.xlane.f32.xlu0 %v1994
    %v1996 = vpop.xlane.xlu0 %1995
    %s1997 = scalar_lea.vmem %s0, 16
    %v1998 = vld [vmem:[%s1997] sm:$0xff]
    %v1999 = vld [vmem:[%s1997 + $0x8] sm:$0xff]
    %s2000 = scalar_lea.vmem %s1, 48
    %v2001 = vld [vmem:[%s2000] sm:$0xff]
    %v2002 = vld [vmem:[%s2000 + $0x8] sm:$0xff]
    %v2003 = vsel %vm44, 1.0, %v2001
    %v2004 = vsel %vm45, 1.0, %v2002
    %v2005 = vsel %vm346, %v2003, 0.0
    %2006 = vadd.xlane.f32.xlu0 %v2005
    %v2007 = vpop.xlane.xlu0 %2006
    %v2008 = vsel %vm346, %v2004, 0.0
    %2009 = vadd.xlane.f32.xlu0 %v2008
    %v2010 = vpop.xlane.xlu0 %2009
    %v2011 = vmax.f32 %v2007, 1.0
    %v2012 = vmax.f32 %v2010, 1.0
    %v2013 = vrsqrt.pop %v2011
    %v2014 = vmul.f32 %v2013, %v2011
    %v2015 = vmul.f32 %v2014, %v2013
    %v2016 = vmul.f32 0.5, %v2015
    %v2017 = vsub.f32 1.5, %v2016
    %v2018 = vmul.f32 %v2013, %v2017
    %vm2019 = vweird.f32 %v2011
    %vm2020 = vweird.f32 %v2013
    %vm2021 = vmor %vm2019, %vm2020
    %v2022 = vsel %vm2021, %v2013, %v2018
    %v2023 = vrsqrt.pop %v2012
    %v2024 = vmul.f32 %v2023, %v2012
    %v2025 = vmul.f32 %v2024, %v2023
    %v2026 = vmul.f32 0.5, %v2025
    %v2027 = vsub.f32 1.5, %v2026
    %v2028 = vmul.f32 %v2023, %v2027
    %vm2029 = vweird.f32 %v2012
    %vm2030 = vweird.f32 %v2023
    %vm2031 = vmor %vm2029, %vm2030
    %v2032 = vsel %vm2031, %v2023, %v2028
    %v2033 = vld [vmem:[%s3] sm:$0x1f]
    %v2035 = vsel %vm388, %v1998, 0
    %v2038 = vsel %vm388, %v1999, 0
    %v2041 = vsel %vm395, %v2033, 0
    %2043 = vmatpush.msra.mxu0 0.0
    %2044 = vmatpush.msra.mxu0 0.0
    %2045 = vmatpush.msra.mxu0 0.0
    %2046 = vmatpush.msra.mxu0 0.0
    %2047 = vmatpush.msra.mxu0 0.0
    %2048 = vmatpush.msra.mxu0 0.0
    %2049 = vmatpush.msra.mxu0 0.0
    %2050 = vmatpush.msra.mxu0 0.0
    %2051 = vmatpush.msra.mxu0 0.0
    %2052 = vmatpush.msra.mxu0 0.0
    %2053 = vmatpush.msra.mxu0 0.0
    %2054 = vmatpush.msra.mxu0 0.0
    %2055 = vmatpush.msra.mxu0 0.0
    %2056 = vmatpush.msra.mxu0 0.0
    %2057 = vmatpush.msra.mxu0 0.0
    %2058 = vmatpush.msra.mxu0 %v2041
    %2059 = vmatmul.f32.gmra.mxu0 %v2035
    %v2060 = vpop.f32.mrf.mxu0
    %v2061 = vadd.f32 0.0, %v2060
    %2062 = vmatmul.f32.gmra.mxu0 %v2038
    %v2063 = vpop.f32.mrf.mxu0
    %v2064 = vadd.f32 0.0, %v2063
    %2065 = vdwg.mxu0
    %v2066 = vmul.f32 %v2022, %v2061
    %v2067 = vmul.f32 %v2032, %v2064
    %v2069 = vsel %vm346, %v2003, 0
    %v2072 = vsel %vm346, %v2004, 0
    %2074 = vmatpush.msra.mxu0 0.0
    %2075 = vmatpush.msra.mxu0 0.0
    %2076 = vmatpush.msra.mxu0 0.0
    %2077 = vmatpush.msra.mxu0 0.0
    %2078 = vmatpush.msra.mxu0 0.0
    %2079 = vmatpush.msra.mxu0 0.0
    %2080 = vmatpush.msra.mxu0 0.0
    %2081 = vmatpush.msra.mxu0 0.0
    %2082 = vmatpush.msra.mxu0 0.0
    %2083 = vmatpush.msra.mxu0 0.0
    %2084 = vmatpush.msra.mxu0 0.0
    %2085 = vmatpush.msra.mxu0 0.0
    %2086 = vmatpush.msra.mxu0 0.0
    %2087 = vmatpush.msra.mxu0 0.0
    %2088 = vmatpush.msra.mxu0 %v2067
    %2089 = vmatpush.msra.mxu0 %v2066
    %2090 = vmatmul.f32.gmra.mxu0 %v2069
    %v2091 = vpop.f32.mrf.mxu0
    %v2092 = vadd.f32 0.0, %v2091
    %2093 = vmatmul.f32.gmra.mxu0 %v2072
    %v2094 = vpop.f32.mrf.mxu0
    %v2095 = vadd.f32 0.0, %v2094
    %2096 = vdwg.mxu0
    %v2097 = vmul.f32 %v2022, %v2092
    %v2098 = vmul.f32 %v2032, %v2095
    %v2099 = vperm.slane %v2033, 4
    %v2100 = vadd.f32 %v2097, %v2099
    %v2101 = vadd.f32 %v2098, %v2099
    %2104 = vrot.lane.b32.xlu0 %v2100, 112
    %v2105 = vpop.permute.xlu0 %2104
    %2106 = vrot.lane.b32.xlu0 %v2101, 112
    %v2107 = vpop.permute.xlu0 %2106
    %2110 = vmatpush.msra.mxu0 0.0
    %2111 = vmatpush.msra.mxu0 0.0
    %2112 = vmatpush.msra.mxu0 0.0
    %2113 = vmatpush.msra.mxu0 0.0
    %2114 = vmatpush.msra.mxu0 0.0
    %2115 = vmatpush.msra.mxu0 0.0
    %2116 = vmatpush.msra.mxu0 0.0
    %2117 = vmatpush.msra.mxu0 0.0
    %2118 = vmatpush.msra.mxu0 0.0
    %2119 = vmatpush.msra.mxu0 0.0
    %2120 = vmatpush.msra.mxu0 0.0
    %2121 = vmatpush.msra.mxu0 0.0
    %2122 = vmatpush.msra.mxu0 0.0
    %2123 = vmatpush.msra.mxu0 0.0
    %2124 = vmatpush.msra.mxu0 %v2107
    %2125 = vmatpush.msra.mxu0 %v2105
    %2126 = vmatmul.f32.gmra.mxu0 %v467
    %v2127 = vpop.f32.mrf.mxu0
    %v2128 = vadd.f32 0.0, %v2127
    %2129 = vmatmul.f32.gmra.mxu0 %v470
    %v2130 = vpop.f32.mrf.mxu0
    %v2131 = vadd.f32 0.0, %v2130
    %2132 = vmatmul.f32.gmra.mxu0 %v473
    %v2133 = vpop.f32.mrf.mxu0
    %v2134 = vadd.f32 0.0, %v2133
    %2135 = vmatmul.f32.gmra.mxu0 %v476
    %v2136 = vpop.f32.mrf.mxu0
    %v2137 = vadd.f32 0.0, %v2136
    %2138 = vmatmul.f32.gmra.mxu0 %v479
    %v2139 = vpop.f32.mrf.mxu0
    %v2140 = vadd.f32 0.0, %v2139
    %2141 = vmatmul.f32.gmra.mxu0 %v482
    %v2142 = vpop.f32.mrf.mxu0
    %v2143 = vadd.f32 0.0, %v2142
    %2144 = vmatmul.f32.gmra.mxu0 %v485
    %v2145 = vpop.f32.mrf.mxu0
    %v2146 = vadd.f32 0.0, %v2145
    %2147 = vmatmul.f32.gmra.mxu0 %v488
    %v2148 = vpop.f32.mrf.mxu0
    %v2149 = vadd.f32 0.0, %v2148
    %2150 = vdwg.mxu0
    %v2151 = vmul.f32 %v2128, %v329
    %v2152 = vmul.f32 %v2131, %v330
    %v2153 = vmul.f32 %v2134, %v331
    %v2154 = vmul.f32 %v2137, %v332
    %v2155 = vmul.f32 %v2140, %v333
    %v2156 = vmul.f32 %v2143, %v334
    %v2157 = vmul.f32 %v2146, %v335
    %v2158 = vmul.f32 %v2149, %v336
    %v2159 = vsel %vm346, %v2100, 0
    %v2161 = vsel %vm346, %v2101, 0
    %v2164 = vsel %vm346, %v2151, 0
    %v2167 = vsel %vm346, %v2152, 0
    %v2170 = vsel %vm346, %v2153, 0
    %v2173 = vsel %vm346, %v2154, 0
    %v2176 = vsel %vm346, %v2155, 0
    %v2179 = vsel %vm346, %v2156, 0
    %v2182 = vsel %vm346, %v2157, 0
    %v2185 = vsel %vm346, %v2158, 0
    %2187 = vmatpush.xpose.msra.mxu0 0.0
    %2188 = vmatpush.xpose.msra.mxu0 0.0
    %2189 = vmatpush.xpose.msra.mxu0 0.0
    %2190 = vmatpush.xpose.msra.mxu0 0.0
    %2191 = vmatpush.xpose.msra.mxu0 0.0
    %2192 = vmatpush.xpose.msra.mxu0 0.0
    %2193 = vmatpush.xpose.msra.mxu0 0.0
    %2194 = vmatpush.xpose.msra.mxu0 0.0
    %2195 = vmatpush.xpose.msra.mxu0 %v2185
    %2196 = vmatpush.xpose.msra.mxu0 %v2182
    %2197 = vmatpush.xpose.msra.mxu0 %v2179
    %2198 = vmatpush.xpose.msra.mxu0 %v2176
    %2199 = vmatpush.xpose.msra.mxu0 %v2173
    %2200 = vmatpush.xpose.msra.mxu0 %v2170
    %2201 = vmatpush.xpose.msra.mxu0 %v2167
    %2202 = vmatpush.xpose.msra.mxu0 %v2164
    %2203 = vmatmul.f32.gmra.mxu0 %v2159
    %v2204 = vpop.f32.mrf.mxu0
    %v2205 = vadd.f32 0.0, %v2204
    %2206 = vmatmul.f32.gmra.mxu0 %v2161
    %v2207 = vpop.f32.mrf.mxu0
    %v2208 = vadd.f32 0.0, %v2207
    %2209 = vdwg.mxu0
    %v2210 = vmul.f32 %v2205, 0.35355338
    %v2211 = vmul.f32 %v2208, 0.35355338
    %v2212 = vtanh.pop %v2210
    %v2213 = vtanh.pop %v2211
    %v2215 = vsel %vm594, %v2212, 0
    %v2218 = vsel %vm594, %v2213, 0
    %2220 = vmatpush.msra.mxu0 0.0
    %2221 = vmatpush.msra.mxu0 0.0
    %2222 = vmatpush.msra.mxu0 0.0
    %2223 = vmatpush.msra.mxu0 0.0
    %2224 = vmatpush.msra.mxu0 0.0
    %2225 = vmatpush.msra.mxu0 0.0
    %2226 = vmatpush.msra.mxu0 0.0
    %2227 = vmatpush.msra.mxu0 0.0
    %2228 = vmatpush.msra.mxu0 %v128
    %2229 = vmatpush.msra.mxu0 %v127
    %2230 = vmatpush.msra.mxu0 %v126
    %2231 = vmatpush.msra.mxu0 %v125
    %2232 = vmatpush.msra.mxu0 %v124
    %2233 = vmatpush.msra.mxu0 %v123
    %2234 = vmatpush.msra.mxu0 %v122
    %2235 = vmatpush.msra.mxu0 %v121
    %2236 = vmatmul.f32.gmra.mxu0 %v2215
    %v2237 = vpop.f32.mrf.mxu0
    %v2238 = vadd.f32 0.0, %v2237
    %2239 = vmatmul.f32.gmra.mxu0 %v2218
    %v2240 = vpop.f32.mrf.mxu0
    %v2241 = vadd.f32 0.0, %v2240
    %2242 = vdwg.mxu0
    %v2243 = vpack.c.bf16 %v2238, %v2238
    %v2244 = vpack.c.bf16 %v2241, %v2241
    %v2245 = vunpack.c.l.bf16 %v2243
    %v2246 = vunpack.c.l.bf16 %v2244
    %v2247 = vsub.f32 %v2238, %v2245
    %v2248 = vsub.f32 %v2241, %v2246
    %v2250 = vsel %vm346, %v2247, 0
    %v2253 = vsel %vm346, %v2248, 0
    %2255 = vmatpush.xpose.msra.mxu0 0.0
    %2256 = vmatpush.xpose.msra.mxu0 0.0
    %2257 = vmatpush.xpose.msra.mxu0 0.0
    %2258 = vmatpush.xpose.msra.mxu0 0.0
    %2259 = vmatpush.xpose.msra.mxu0 0.0
    %2260 = vmatpush.xpose.msra.mxu0 0.0
    %2261 = vmatpush.xpose.msra.mxu0 0.0
    %2262 = vmatpush.xpose.msra.mxu0 0.0
    %2263 = vmatpush.xpose.msra.mxu0 0.0
    %2264 = vmatpush.xpose.msra.mxu0 0.0
    %2265 = vmatpush.xpose.msra.mxu0 0.0
    %2266 = vmatpush.xpose.msra.mxu0 0.0
    %2267 = vmatpush.xpose.msra.mxu0 0.0
    %2268 = vmatpush.xpose.msra.mxu0 0.0
    %2269 = vmatpush.xpose.msra.mxu0 %v2253
    %2270 = vmatpush.xpose.msra.mxu0 %v2250
    %2271 = vmatmul.f32.gmra.mxu0 %v631
    %v2272 = vpop.f32.mrf.mxu0
    %v2273 = vadd.f32 0.0, %v2272
    %2274 = vmatmul.f32.gmra.mxu0 %v634
    %v2275 = vpop.f32.mrf.mxu0
    %v2276 = vadd.f32 0.0, %v2275
    %2277 = vdwg.mxu0
    %v2279 = vsel %vm346, %v2245, 0
    %v2282 = vsel %vm346, %v2246, 0
    %2284 = vmatpush.xpose.msra.mxu0 0.0
    %2285 = vmatpush.xpose.msra.mxu0 0.0
    %2286 = vmatpush.xpose.msra.mxu0 0.0
    %2287 = vmatpush.xpose.msra.mxu0 0.0
    %2288 = vmatpush.xpose.msra.mxu0 0.0
    %2289 = vmatpush.xpose.msra.mxu0 0.0
    %2290 = vmatpush.xpose.msra.mxu0 0.0
    %2291 = vmatpush.xpose.msra.mxu0 0.0
    %2292 = vmatpush.xpose.msra.mxu0 0.0
    %2293 = vmatpush.xpose.msra.mxu0 0.0
    %2294 = vmatpush.xpose.msra.mxu0 0.0
    %2295 = vmatpush.xpose.msra.mxu0 0.0
    %2296 = vmatpush.xpose.msra.mxu0 0.0
    %2297 = vmatpush.xpose.msra.mxu0 0.0
    %2298 = vmatpush.xpose.msra.mxu0 %v2282
    %2299 = vmatpush.xpose.msra.mxu0 %v2279
    %2300 = vmatmul.f32.gmra.mxu0 %v631
    %v2301 = vpop.f32.mrf.mxu0
    %v2302 = vadd.f32 %v2273, %v2301
    %2303 = vmatmul.f32.gmra.mxu0 %v634
    %v2304 = vpop.f32.mrf.mxu0
    %v2305 = vadd.f32 %v2276, %v2304
    %2306 = vdwg.mxu0
    %v2307 = vadd.f32 %v2238, %v2302
    %v2308 = vadd.f32 %v2241, %v2305
    %v2309 = vmul.f32 %v2307, 0.125
    %v2310 = vmul.f32 %v2308, 0.125
    %v2311 = vld [vmem:[%s4] sm:$0xff]
    %v2312 = vld [vmem:[%s4 + $0x8] sm:$0xff]
    %v2313 = vld [vmem:[%s4 + $0x10] sm:$0xff]
    %v2314 = vld [vmem:[%s4 + $0x18] sm:$0xff]
    %v2315 = vld [vmem:[%s4 + $0x20] sm:$0xff]
    %s2316 = scalar_lea.vmem %s1, 64
    %v2317 = vld [vmem:[%s2316] sm:$0xff]
    %v2318 = vld [vmem:[%s2316 + $0x8] sm:$0xff]
    %v2319 = vsel %vm44, 1.0, %v2317
    %v2320 = vsel %vm45, 1.0, %v2318
    %v2321 = vsel %vm346, %v2319, 0.0
    %2322 = vadd.xlane.f32.xlu0 %v2321
    %v2323 = vpop.xlane.xlu0 %2322
    %v2324 = vsel %vm346, %v2320, 0.0
    %2325 = vadd.xlane.f32.xlu0 %v2324
    %v2326 = vpop.xlane.xlu0 %2325
    %v2327 = vmax.f32 %v2323, 1.0
    %v2328 = vmax.f32 %v2326, 1.0
    %v2329 = vrsqrt.pop %v2327
    %v2330 = vmul.f32 %v2329, %v2327
    %v2331 = vmul.f32 %v2330, %v2329
    %v2332 = vmul.f32 0.5, %v2331
    %v2333 = vsub.f32 1.5, %v2332
    %v2334 = vmul.f32 %v2329, %v2333
    %vm2335 = vweird.f32 %v2327
    %vm2336 = vweird.f32 %v2329
    %vm2337 = vmor %vm2335, %vm2336
    %v2338 = vsel %vm2337, %v2329, %v2334
    %v2339 = vrsqrt.pop %v2328
    %v2340 = vmul.f32 %v2339, %v2328
    %v2341 = vmul.f32 %v2340, %v2339
    %v2342 = vmul.f32 0.5, %v2341
    %v2343 = vsub.f32 1.5, %v2342
    %v2344 = vmul.f32 %v2339, %v2343
    %vm2345 = vweird.f32 %v2328
    %vm2346 = vweird.f32 %v2339
    %vm2347 = vmor %vm2345, %vm2346
    %v2348 = vsel %vm2347, %v2339, %v2344
    %v2349 = vld [vmem:[%s736] sm:$0x1f]
    %v2351 = vsel %vm395, %v2349, 0
    %2353 = vmatpush.msra.mxu0 0.0
    %2354 = vmatpush.msra.mxu0 0.0
    %2355 = vmatpush.msra.mxu0 0.0
    %2356 = vmatpush.msra.mxu0 0.0
    %2357 = vmatpush.msra.mxu0 0.0
    %2358 = vmatpush.msra.mxu0 0.0
    %2359 = vmatpush.msra.mxu0 0.0
    %2360 = vmatpush.msra.mxu0 0.0
    %2361 = vmatpush.msra.mxu0 0.0
    %2362 = vmatpush.msra.mxu0 0.0
    %2363 = vmatpush.msra.mxu0 0.0
    %2364 = vmatpush.msra.mxu0 0.0
    %2365 = vmatpush.msra.mxu0 0.0
    %2366 = vmatpush.msra.mxu0 0.0
    %2367 = vmatpush.msra.mxu0 0.0
    %2368 = vmatpush.msra.mxu0 %v2351
    %2369 = vmatmul.f32.gmra.mxu0 %v2035
    %v2370 = vpop.f32.mrf.mxu0
    %v2371 = vadd.f32 0.0, %v2370
    %2372 = vmatmul.f32.gmra.mxu0 %v2038
    %v2373 = vpop.f32.mrf.mxu0
    %v2374 = vadd.f32 0.0, %v2373
    %2375 = vdwg.mxu0
    %v2376 = vmul.f32 %v2338, %v2371
    %v2377 = vmul.f32 %v2348, %v2374
    %v2379 = vsel %vm346, %v2319, 0
    %v2382 = vsel %vm346, %v2320, 0
    %2384 = vmatpush.msra.mxu0 0.0
    %2385 = vmatpush.msra.mxu0 0.0
    %2386 = vmatpush.msra.mxu0 0.0
    %2387 = vmatpush.msra.mxu0 0.0
    %2388 = vmatpush.msra.mxu0 0.0
    %2389 = vmatpush.msra.mxu0 0.0
    %2390 = vmatpush.msra.mxu0 0.0
    %2391 = vmatpush.msra.mxu0 0.0
    %2392 = vmatpush.msra.mxu0 0.0
    %2393 = vmatpush.msra.mxu0 0.0
    %2394 = vmatpush.msra.mxu0 0.0
    %2395 = vmatpush.msra.mxu0 0.0
    %2396 = vmatpush.msra.mxu0 0.0
    %2397 = vmatpush.msra.mxu0 0.0
    %2398 = vmatpush.msra.mxu0 %v2377
    %2399 = vmatpush.msra.mxu0 %v2376
    %2400 = vmatmul.f32.gmra.mxu0 %v2379
    %v2401 = vpop.f32.mrf.mxu0
    %v2402 = vadd.f32 0.0, %v2401
    %2403 = vmatmul.f32.gmra.mxu0 %v2382
    %v2404 = vpop.f32.mrf.mxu0
    %v2405 = vadd.f32 0.0, %v2404
    %2406 = vdwg.mxu0
    %v2407 = vmul.f32 %v2338, %v2402
    %v2408 = vmul.f32 %v2348, %v2405
    %v2409 = vperm.slane %v2349, 4
    %v2410 = vadd.f32 %v2407, %v2409
    %v2411 = vadd.f32 %v2408, %v2409
    %2414 = vrot.lane.b32.xlu0 %v2410, 112
    %v2415 = vpop.permute.xlu0 %2414
    %2416 = vrot.lane.b32.xlu0 %v2411, 112
    %v2417 = vpop.permute.xlu0 %2416
    %2420 = vmatpush.msra.mxu0 0.0
    %2421 = vmatpush.msra.mxu0 0.0
    %2422 = vmatpush.msra.mxu0 0.0
    %2423 = vmatpush.msra.mxu0 0.0
    %2424 = vmatpush.msra.mxu0 0.0
    %2425 = vmatpush.msra.mxu0 0.0
    %2426 = vmatpush.msra.mxu0 0.0
    %2427 = vmatpush.msra.mxu0 0.0
    %2428 = vmatpush.msra.mxu0 0.0
    %2429 = vmatpush.msra.mxu0 0.0
    %2430 = vmatpush.msra.mxu0 0.0
    %2431 = vmatpush.msra.mxu0 0.0
    %2432 = vmatpush.msra.mxu0 0.0
    %2433 = vmatpush.msra.mxu0 0.0
    %2434 = vmatpush.msra.mxu0 %v2417
    %2435 = vmatpush.msra.mxu0 %v2415
    %2436 = vmatmul.f32.gmra.mxu0 %v467
    %v2437 = vpop.f32.mrf.mxu0
    %v2438 = vadd.f32 0.0, %v2437
    %2439 = vmatmul.f32.gmra.mxu0 %v470
    %v2440 = vpop.f32.mrf.mxu0
    %v2441 = vadd.f32 0.0, %v2440
    %2442 = vmatmul.f32.gmra.mxu0 %v473
    %v2443 = vpop.f32.mrf.mxu0
    %v2444 = vadd.f32 0.0, %v2443
    %2445 = vmatmul.f32.gmra.mxu0 %v476
    %v2446 = vpop.f32.mrf.mxu0
    %v2447 = vadd.f32 0.0, %v2446
    %2448 = vmatmul.f32.gmra.mxu0 %v479
    %v2449 = vpop.f32.mrf.mxu0
    %v2450 = vadd.f32 0.0, %v2449
    %2451 = vmatmul.f32.gmra.mxu0 %v482
    %v2452 = vpop.f32.mrf.mxu0
    %v2453 = vadd.f32 0.0, %v2452
    %2454 = vmatmul.f32.gmra.mxu0 %v485
    %v2455 = vpop.f32.mrf.mxu0
    %v2456 = vadd.f32 0.0, %v2455
    %2457 = vmatmul.f32.gmra.mxu0 %v488
    %v2458 = vpop.f32.mrf.mxu0
    %v2459 = vadd.f32 0.0, %v2458
    %2460 = vdwg.mxu0
    %v2461 = vmul.f32 %v2438, %v329
    %v2462 = vmul.f32 %v2441, %v330
    %v2463 = vmul.f32 %v2444, %v331
    %v2464 = vmul.f32 %v2447, %v332
    %v2465 = vmul.f32 %v2450, %v333
    %v2466 = vmul.f32 %v2453, %v334
    %v2467 = vmul.f32 %v2456, %v335
    %v2468 = vmul.f32 %v2459, %v336
    %v2469 = vsel %vm346, %v2410, 0
    %v2471 = vsel %vm346, %v2411, 0
    %v2474 = vsel %vm346, %v2461, 0
    %v2477 = vsel %vm346, %v2462, 0
    %v2480 = vsel %vm346, %v2463, 0
    %v2483 = vsel %vm346, %v2464, 0
    %v2486 = vsel %vm346, %v2465, 0
    %v2489 = vsel %vm346, %v2466, 0
    %v2492 = vsel %vm346, %v2467, 0
    %v2495 = vsel %vm346, %v2468, 0
    %2497 = vmatpush.xpose.msra.mxu0 0.0
    %2498 = vmatpush.xpose.msra.mxu0 0.0
    %2499 = vmatpush.xpose.msra.mxu0 0.0
    %2500 = vmatpush.xpose.msra.mxu0 0.0
    %2501 = vmatpush.xpose.msra.mxu0 0.0
    %2502 = vmatpush.xpose.msra.mxu0 0.0
    %2503 = vmatpush.xpose.msra.mxu0 0.0
    %2504 = vmatpush.xpose.msra.mxu0 0.0
    %2505 = vmatpush.xpose.msra.mxu0 %v2495
    %2506 = vmatpush.xpose.msra.mxu0 %v2492
    %2507 = vmatpush.xpose.msra.mxu0 %v2489
    %2508 = vmatpush.xpose.msra.mxu0 %v2486
    %2509 = vmatpush.xpose.msra.mxu0 %v2483
    %2510 = vmatpush.xpose.msra.mxu0 %v2480
    %2511 = vmatpush.xpose.msra.mxu0 %v2477
    %2512 = vmatpush.xpose.msra.mxu0 %v2474
    %2513 = vmatmul.f32.gmra.mxu0 %v2469
    %v2514 = vpop.f32.mrf.mxu0
    %v2515 = vadd.f32 0.0, %v2514
    %2516 = vmatmul.f32.gmra.mxu0 %v2471
    %v2517 = vpop.f32.mrf.mxu0
    %v2518 = vadd.f32 0.0, %v2517
    %2519 = vdwg.mxu0
    %v2520 = vmul.f32 %v2515, 0.35355338
    %v2521 = vmul.f32 %v2518, 0.35355338
    %v2522 = vtanh.pop %v2520
    %v2523 = vtanh.pop %v2521
    %v2525 = vsel %vm594, %v2522, 0
    %v2528 = vsel %vm594, %v2523, 0
    %2530 = vmatpush.msra.mxu0 0.0
    %2531 = vmatpush.msra.mxu0 0.0
    %2532 = vmatpush.msra.mxu0 0.0
    %2533 = vmatpush.msra.mxu0 0.0
    %2534 = vmatpush.msra.mxu0 0.0
    %2535 = vmatpush.msra.mxu0 0.0
    %2536 = vmatpush.msra.mxu0 0.0
    %2537 = vmatpush.msra.mxu0 0.0
    %2538 = vmatpush.msra.mxu0 %v128
    %2539 = vmatpush.msra.mxu0 %v127
    %2540 = vmatpush.msra.mxu0 %v126
    %2541 = vmatpush.msra.mxu0 %v125
    %2542 = vmatpush.msra.mxu0 %v124
    %2543 = vmatpush.msra.mxu0 %v123
    %2544 = vmatpush.msra.mxu0 %v122
    %2545 = vmatpush.msra.mxu0 %v121
    %2546 = vmatmul.f32.gmra.mxu0 %v2525
    %v2547 = vpop.f32.mrf.mxu0
    %v2548 = vadd.f32 0.0, %v2547
    %2549 = vmatmul.f32.gmra.mxu0 %v2528
    %v2550 = vpop.f32.mrf.mxu0
    %v2551 = vadd.f32 0.0, %v2550
    %2552 = vdwg.mxu0
    %v2553 = vpack.c.bf16 %v2548, %v2548
    %v2554 = vpack.c.bf16 %v2551, %v2551
    %v2555 = vunpack.c.l.bf16 %v2553
    %v2556 = vunpack.c.l.bf16 %v2554
    %v2557 = vsub.f32 %v2548, %v2555
    %v2558 = vsub.f32 %v2551, %v2556
    %v2560 = vsel %vm346, %v2557, 0
    %v2563 = vsel %vm346, %v2558, 0
    %2565 = vmatpush.xpose.msra.mxu0 0.0
    %2566 = vmatpush.xpose.msra.mxu0 0.0
    %2567 = vmatpush.xpose.msra.mxu0 0.0
    %2568 = vmatpush.xpose.msra.mxu0 0.0
    %2569 = vmatpush.xpose.msra.mxu0 0.0
    %2570 = vmatpush.xpose.msra.mxu0 0.0
    %2571 = vmatpush.xpose.msra.mxu0 0.0
    %2572 = vmatpush.xpose.msra.mxu0 0.0
    %2573 = vmatpush.xpose.msra.mxu0 0.0
    %2574 = vmatpush.xpose.msra.mxu0 0.0
    %2575 = vmatpush.xpose.msra.mxu0 0.0
    %2576 = vmatpush.xpose.msra.mxu0 0.0
    %2577 = vmatpush.xpose.msra.mxu0 0.0
    %2578 = vmatpush.xpose.msra.mxu0 0.0
    %2579 = vmatpush.xpose.msra.mxu0 %v2563
    %2580 = vmatpush.xpose.msra.mxu0 %v2560
    %2581 = vmatmul.f32.gmra.mxu0 %v631
    %v2582 = vpop.f32.mrf.mxu0
    %v2583 = vadd.f32 0.0, %v2582
    %2584 = vmatmul.f32.gmra.mxu0 %v634
    %v2585 = vpop.f32.mrf.mxu0
    %v2586 = vadd.f32 0.0, %v2585
    %2587 = vdwg.mxu0
    %v2589 = vsel %vm346, %v2555, 0
    %v2592 = vsel %vm346, %v2556, 0
    %2594 = vmatpush.xpose.msra.mxu0 0.0
    %2595 = vmatpush.xpose.msra.mxu0 0.0
    %2596 = vmatpush.xpose.msra.mxu0 0.0
    %2597 = vmatpush.xpose.msra.mxu0 0.0
    %2598 = vmatpush.xpose.msra.mxu0 0.0
    %2599 = vmatpush.xpose.msra.mxu0 0.0
    %2600 = vmatpush.xpose.msra.mxu0 0.0
    %2601 = vmatpush.xpose.msra.mxu0 0.0
    %2602 = vmatpush.xpose.msra.mxu0 0.0
    %2603 = vmatpush.xpose.msra.mxu0 0.0
    %2604 = vmatpush.xpose.msra.mxu0 0.0
    %2605 = vmatpush.xpose.msra.mxu0 0.0
    %2606 = vmatpush.xpose.msra.mxu0 0.0
    %2607 = vmatpush.xpose.msra.mxu0 0.0
    %2608 = vmatpush.xpose.msra.mxu0 %v2592
    %2609 = vmatpush.xpose.msra.mxu0 %v2589
    %2610 = vmatmul.f32.gmra.mxu0 %v631
    %v2611 = vpop.f32.mrf.mxu0
    %v2612 = vadd.f32 %v2583, %v2611
    %2613 = vmatmul.f32.gmra.mxu0 %v634
    %v2614 = vpop.f32.mrf.mxu0
    %v2615 = vadd.f32 %v2586, %v2614
    %2616 = vdwg.mxu0
    %v2617 = vadd.f32 %v2548, %v2612
    %v2618 = vadd.f32 %v2551, %v2615
    %v2619 = vmul.f32 %v2617, 0.125
    %v2620 = vmul.f32 %v2618, 0.125
    %v2621 = vld [vmem:[%s4 + $0x28] sm:$0xff]
    %v2622 = vld [vmem:[%s4 + $0x30] sm:$0xff]
    %v2623 = vld [vmem:[%s4 + $0x38] sm:$0xff]
    %v2624 = vld [vmem:[%s4 + $0x40] sm:$0xff]
    %v2625 = vld [vmem:[%s4 + $0x48] sm:$0xff]
    %v2626 = vsel %vm1014, %v2410, 0
    %v2628 = vsel %vm1014, %v2411, 0
    %2630 = vmatpush.msra.mxu0 0.0
    %2631 = vmatpush.msra.mxu0 0.0
    %2632 = vmatpush.msra.mxu0 0.0
    %2633 = vmatpush.msra.mxu0 0.0
    %2634 = vmatpush.msra.mxu0 0.0
    %2635 = vmatpush.msra.mxu0 0.0
    %2636 = vmatpush.msra.mxu0 0.0
    %2637 = vmatpush.msra.mxu0 0.0
    %2638 = vmatpush.msra.mxu0 0.0
    %2639 = vmatpush.msra.mxu0 0.0
    %2640 = vmatpush.msra.mxu0 0.0
    %2641 = vmatpush.msra.mxu0 %v2625
    %2642 = vmatpush.msra.mxu0 %v2624
    %2643 = vmatpush.msra.mxu0 %v2623
    %2644 = vmatpush.msra.mxu0 %v2622
    %2645 = vmatpush.msra.mxu0 %v2621
    %2646 = vmatmul.f32.gmra.mxu0 %v2626
    %v2647 = vpop.f32.mrf.mxu0
    %v2648 = vadd.f32 0.0, %v2647
    %2649 = vmatmul.f32.gmra.mxu0 %v2628
    %v2650 = vpop.f32.mrf.mxu0
    %v2651 = vadd.f32 0.0, %v2650
    %2652 = vdwg.mxu0
    %v2653 = vsel %vm1014, %v2100, 0
    %v2655 = vsel %vm1014, %v2101, 0
    %2657 = vmatpush.msra.mxu0 0.0
    %2658 = vmatpush.msra.mxu0 0.0
    %2659 = vmatpush.msra.mxu0 0.0
    %2660 = vmatpush.msra.mxu0 0.0
    %2661 = vmatpush.msra.mxu0 0.0
    %2662 = vmatpush.msra.mxu0 0.0
    %2663 = vmatpush.msra.mxu0 0.0
    %2664 = vmatpush.msra.mxu0 0.0
    %2665 = vmatpush.msra.mxu0 0.0
    %2666 = vmatpush.msra.mxu0 0.0
    %2667 = vmatpush.msra.mxu0 0.0
    %2668 = vmatpush.msra.mxu0 %v2315
    %2669 = vmatpush.msra.mxu0 %v2314
    %2670 = vmatpush.msra.mxu0 %v2313
    %2671 = vmatpush.msra.mxu0 %v2312
    %2672 = vmatpush.msra.mxu0 %v2311
    %2673 = vmatmul.f32.gmra.mxu0 %v2653
    %v2674 = vpop.f32.mrf.mxu0
    %v2675 = vadd.f32 %v2648, %v2674
    %2676 = vmatmul.f32.gmra.mxu0 %v2655
    %v2677 = vpop.f32.mrf.mxu0
    %v2678 = vadd.f32 %v2651, %v2677
    %2679 = vdwg.mxu0
    %s2680 = scalar_lea.vmem %s1, 80
    %v2681 = vld [vmem:[%s2680] sm:$0xff]
    %v2682 = vld [vmem:[%s2680 + $0x8] sm:$0xff]
    %v2683 = vsel %vm44, 1.0, %v2681
    %v2684 = vsel %vm45, 1.0, %v2682
    %v2685 = vsel %vm346, %v2683, 0.0
    %2686 = vadd.xlane.f32.xlu0 %v2685
    %v2687 = vpop.xlane.xlu0 %2686
    %v2688 = vsel %vm346, %v2684, 0.0
    %2689 = vadd.xlane.f32.xlu0 %v2688
    %v2690 = vpop.xlane.xlu0 %2689
    %v2691 = vmax.f32 %v2687, 1.0
    %v2692 = vmax.f32 %v2690, 1.0
    %v2693 = vrsqrt.pop %v2691
    %v2694 = vmul.f32 %v2693, %v2691
    %v2695 = vmul.f32 %v2694, %v2693
    %v2696 = vmul.f32 0.5, %v2695
    %v2697 = vsub.f32 1.5, %v2696
    %v2698 = vmul.f32 %v2693, %v2697
    %vm2699 = vweird.f32 %v2691
    %vm2700 = vweird.f32 %v2693
    %vm2701 = vmor %vm2699, %vm2700
    %v2702 = vsel %vm2701, %v2693, %v2698
    %v2703 = vrsqrt.pop %v2692
    %v2704 = vmul.f32 %v2703, %v2692
    %v2705 = vmul.f32 %v2704, %v2703
    %v2706 = vmul.f32 0.5, %v2705
    %v2707 = vsub.f32 1.5, %v2706
    %v2708 = vmul.f32 %v2703, %v2707
    %vm2709 = vweird.f32 %v2692
    %vm2710 = vweird.f32 %v2703
    %vm2711 = vmor %vm2709, %vm2710
    %v2712 = vsel %vm2711, %v2703, %v2708
    %v2713 = vld [vmem:[%s1102] sm:$0x1f]
    %v2715 = vsel %vm395, %v2713, 0
    %2717 = vmatpush.msra.mxu0 0.0
    %2718 = vmatpush.msra.mxu0 0.0
    %2719 = vmatpush.msra.mxu0 0.0
    %2720 = vmatpush.msra.mxu0 0.0
    %2721 = vmatpush.msra.mxu0 0.0
    %2722 = vmatpush.msra.mxu0 0.0
    %2723 = vmatpush.msra.mxu0 0.0
    %2724 = vmatpush.msra.mxu0 0.0
    %2725 = vmatpush.msra.mxu0 0.0
    %2726 = vmatpush.msra.mxu0 0.0
    %2727 = vmatpush.msra.mxu0 0.0
    %2728 = vmatpush.msra.mxu0 0.0
    %2729 = vmatpush.msra.mxu0 0.0
    %2730 = vmatpush.msra.mxu0 0.0
    %2731 = vmatpush.msra.mxu0 0.0
    %2732 = vmatpush.msra.mxu0 %v2715
    %2733 = vmatmul.f32.gmra.mxu0 %v2035
    %v2734 = vpop.f32.mrf.mxu0
    %v2735 = vadd.f32 0.0, %v2734
    %2736 = vmatmul.f32.gmra.mxu0 %v2038
    %v2737 = vpop.f32.mrf.mxu0
    %v2738 = vadd.f32 0.0, %v2737
    %2739 = vdwg.mxu0
    %v2740 = vmul.f32 %v2702, %v2735
    %v2741 = vmul.f32 %v2712, %v2738
    %v2743 = vsel %vm346, %v2683, 0
    %v2746 = vsel %vm346, %v2684, 0
    %2748 = vmatpush.msra.mxu0 0.0
    %2749 = vmatpush.msra.mxu0 0.0
    %2750 = vmatpush.msra.mxu0 0.0
    %2751 = vmatpush.msra.mxu0 0.0
    %2752 = vmatpush.msra.mxu0 0.0
    %2753 = vmatpush.msra.mxu0 0.0
    %2754 = vmatpush.msra.mxu0 0.0
    %2755 = vmatpush.msra.mxu0 0.0
    %2756 = vmatpush.msra.mxu0 0.0
    %2757 = vmatpush.msra.mxu0 0.0
    %2758 = vmatpush.msra.mxu0 0.0
    %2759 = vmatpush.msra.mxu0 0.0
    %2760 = vmatpush.msra.mxu0 0.0
    %2761 = vmatpush.msra.mxu0 0.0
    %2762 = vmatpush.msra.mxu0 %v2741
    %2763 = vmatpush.msra.mxu0 %v2740
    %2764 = vmatmul.f32.gmra.mxu0 %v2743
    %v2765 = vpop.f32.mrf.mxu0
    %v2766 = vadd.f32 0.0, %v2765
    %2767 = vmatmul.f32.gmra.mxu0 %v2746
    %v2768 = vpop.f32.mrf.mxu0
    %v2769 = vadd.f32 0.0, %v2768
    %2770 = vdwg.mxu0
    %v2771 = vmul.f32 %v2702, %v2766
    %v2772 = vmul.f32 %v2712, %v2769
    %v2773 = vperm.slane %v2713, 4
    %v2774 = vadd.f32 %v2771, %v2773
    %v2775 = vadd.f32 %v2772, %v2773
    %2778 = vrot.lane.b32.xlu0 %v2774, 112
    %v2779 = vpop.permute.xlu0 %2778
    %2780 = vrot.lane.b32.xlu0 %v2775, 112
    %v2781 = vpop.permute.xlu0 %2780
    %2784 = vmatpush.msra.mxu0 0.0
    %2785 = vmatpush.msra.mxu0 0.0
    %2786 = vmatpush.msra.mxu0 0.0
    %2787 = vmatpush.msra.mxu0 0.0
    %2788 = vmatpush.msra.mxu0 0.0
    %2789 = vmatpush.msra.mxu0 0.0
    %2790 = vmatpush.msra.mxu0 0.0
    %2791 = vmatpush.msra.mxu0 0.0
    %2792 = vmatpush.msra.mxu0 0.0
    %2793 = vmatpush.msra.mxu0 0.0
    %2794 = vmatpush.msra.mxu0 0.0
    %2795 = vmatpush.msra.mxu0 0.0
    %2796 = vmatpush.msra.mxu0 0.0
    %2797 = vmatpush.msra.mxu0 0.0
    %2798 = vmatpush.msra.mxu0 %v2781
    %2799 = vmatpush.msra.mxu0 %v2779
    %2800 = vmatmul.f32.gmra.mxu0 %v467
    %v2801 = vpop.f32.mrf.mxu0
    %v2802 = vadd.f32 0.0, %v2801
    %2803 = vmatmul.f32.gmra.mxu0 %v470
    %v2804 = vpop.f32.mrf.mxu0
    %v2805 = vadd.f32 0.0, %v2804
    %2806 = vmatmul.f32.gmra.mxu0 %v473
    %v2807 = vpop.f32.mrf.mxu0
    %v2808 = vadd.f32 0.0, %v2807
    %2809 = vmatmul.f32.gmra.mxu0 %v476
    %v2810 = vpop.f32.mrf.mxu0
    %v2811 = vadd.f32 0.0, %v2810
    %2812 = vmatmul.f32.gmra.mxu0 %v479
    %v2813 = vpop.f32.mrf.mxu0
    %v2814 = vadd.f32 0.0, %v2813
    %2815 = vmatmul.f32.gmra.mxu0 %v482
    %v2816 = vpop.f32.mrf.mxu0
    %v2817 = vadd.f32 0.0, %v2816
    %2818 = vmatmul.f32.gmra.mxu0 %v485
    %v2819 = vpop.f32.mrf.mxu0
    %v2820 = vadd.f32 0.0, %v2819
    %2821 = vmatmul.f32.gmra.mxu0 %v488
    %v2822 = vpop.f32.mrf.mxu0
    %v2823 = vadd.f32 0.0, %v2822
    %2824 = vdwg.mxu0
    %v2825 = vmul.f32 %v2802, %v329
    %v2826 = vmul.f32 %v2805, %v330
    %v2827 = vmul.f32 %v2808, %v331
    %v2828 = vmul.f32 %v2811, %v332
    %v2829 = vmul.f32 %v2814, %v333
    %v2830 = vmul.f32 %v2817, %v334
    %v2831 = vmul.f32 %v2820, %v335
    %v2832 = vmul.f32 %v2823, %v336
    %v2833 = vsel %vm346, %v2774, 0
    %v2835 = vsel %vm346, %v2775, 0
    %v2838 = vsel %vm346, %v2825, 0
    %v2841 = vsel %vm346, %v2826, 0
    %v2844 = vsel %vm346, %v2827, 0
    %v2847 = vsel %vm346, %v2828, 0
    %v2850 = vsel %vm346, %v2829, 0
    %v2853 = vsel %vm346, %v2830, 0
    %v2856 = vsel %vm346, %v2831, 0
    %v2859 = vsel %vm346, %v2832, 0
    %2861 = vmatpush.xpose.msra.mxu0 0.0
    %2862 = vmatpush.xpose.msra.mxu0 0.0
    %2863 = vmatpush.xpose.msra.mxu0 0.0
    %2864 = vmatpush.xpose.msra.mxu0 0.0
    %2865 = vmatpush.xpose.msra.mxu0 0.0
    %2866 = vmatpush.xpose.msra.mxu0 0.0
    %2867 = vmatpush.xpose.msra.mxu0 0.0
    %2868 = vmatpush.xpose.msra.mxu0 0.0
    %2869 = vmatpush.xpose.msra.mxu0 %v2859
    %2870 = vmatpush.xpose.msra.mxu0 %v2856
    %2871 = vmatpush.xpose.msra.mxu0 %v2853
    %2872 = vmatpush.xpose.msra.mxu0 %v2850
    %2873 = vmatpush.xpose.msra.mxu0 %v2847
    %2874 = vmatpush.xpose.msra.mxu0 %v2844
    %2875 = vmatpush.xpose.msra.mxu0 %v2841
    %2876 = vmatpush.xpose.msra.mxu0 %v2838
    %2877 = vmatmul.f32.gmra.mxu0 %v2833
    %v2878 = vpop.f32.mrf.mxu0
    %v2879 = vadd.f32 0.0, %v2878
    %2880 = vmatmul.f32.gmra.mxu0 %v2835
    %v2881 = vpop.f32.mrf.mxu0
    %v2882 = vadd.f32 0.0, %v2881
    %2883 = vdwg.mxu0
    %v2884 = vmul.f32 %v2879, 0.35355338
    %v2885 = vmul.f32 %v2882, 0.35355338
    %v2886 = vtanh.pop %v2884
    %v2887 = vtanh.pop %v2885
    %v2889 = vsel %vm594, %v2886, 0
    %v2892 = vsel %vm594, %v2887, 0
    %2894 = vmatpush.msra.mxu0 0.0
    %2895 = vmatpush.msra.mxu0 0.0
    %2896 = vmatpush.msra.mxu0 0.0
    %2897 = vmatpush.msra.mxu0 0.0
    %2898 = vmatpush.msra.mxu0 0.0
    %2899 = vmatpush.msra.mxu0 0.0
    %2900 = vmatpush.msra.mxu0 0.0
    %2901 = vmatpush.msra.mxu0 0.0
    %2902 = vmatpush.msra.mxu0 %v128
    %2903 = vmatpush.msra.mxu0 %v127
    %2904 = vmatpush.msra.mxu0 %v126
    %2905 = vmatpush.msra.mxu0 %v125
    %2906 = vmatpush.msra.mxu0 %v124
    %2907 = vmatpush.msra.mxu0 %v123
    %2908 = vmatpush.msra.mxu0 %v122
    %2909 = vmatpush.msra.mxu0 %v121
    %2910 = vmatmul.f32.gmra.mxu0 %v2889
    %v2911 = vpop.f32.mrf.mxu0
    %v2912 = vadd.f32 0.0, %v2911
    %2913 = vmatmul.f32.gmra.mxu0 %v2892
    %v2914 = vpop.f32.mrf.mxu0
    %v2915 = vadd.f32 0.0, %v2914
    %2916 = vdwg.mxu0
    %v2917 = vpack.c.bf16 %v2912, %v2912
    %v2918 = vpack.c.bf16 %v2915, %v2915
    %v2919 = vunpack.c.l.bf16 %v2917
    %v2920 = vunpack.c.l.bf16 %v2918
    %v2921 = vsub.f32 %v2912, %v2919
    %v2922 = vsub.f32 %v2915, %v2920
    %v2924 = vsel %vm346, %v2921, 0
    %v2927 = vsel %vm346, %v2922, 0
    %2929 = vmatpush.xpose.msra.mxu0 0.0
    %2930 = vmatpush.xpose.msra.mxu0 0.0
    %2931 = vmatpush.xpose.msra.mxu0 0.0
    %2932 = vmatpush.xpose.msra.mxu0 0.0
    %2933 = vmatpush.xpose.msra.mxu0 0.0
    %2934 = vmatpush.xpose.msra.mxu0 0.0
    %2935 = vmatpush.xpose.msra.mxu0 0.0
    %2936 = vmatpush.xpose.msra.mxu0 0.0
    %2937 = vmatpush.xpose.msra.mxu0 0.0
    %2938 = vmatpush.xpose.msra.mxu0 0.0
    %2939 = vmatpush.xpose.msra.mxu0 0.0
    %2940 = vmatpush.xpose.msra.mxu0 0.0
    %2941 = vmatpush.xpose.msra.mxu0 0.0
    %2942 = vmatpush.xpose.msra.mxu0 0.0
    %2943 = vmatpush.xpose.msra.mxu0 %v2927
    %2944 = vmatpush.xpose.msra.mxu0 %v2924
    %2945 = vmatmul.f32.gmra.mxu0 %v631
    %v2946 = vpop.f32.mrf.mxu0
    %v2947 = vadd.f32 0.0, %v2946
    %2948 = vmatmul.f32.gmra.mxu0 %v634
    %v2949 = vpop.f32.mrf.mxu0
    %v2950 = vadd.f32 0.0, %v2949
    %2951 = vdwg.mxu0
    %v2953 = vsel %vm346, %v2919, 0
    %v2956 = vsel %vm346, %v2920, 0
    %2958 = vmatpush.xpose.msra.mxu0 0.0
    %2959 = vmatpush.xpose.msra.mxu0 0.0
    %2960 = vmatpush.xpose.msra.mxu0 0.0
    %2961 = vmatpush.xpose.msra.mxu0 0.0
    %2962 = vmatpush.xpose.msra.mxu0 0.0
    %2963 = vmatpush.xpose.msra.mxu0 0.0
    %2964 = vmatpush.xpose.msra.mxu0 0.0
    %2965 = vmatpush.xpose.msra.mxu0 0.0
    %2966 = vmatpush.xpose.msra.mxu0 0.0
    %2967 = vmatpush.xpose.msra.mxu0 0.0
    %2968 = vmatpush.xpose.msra.mxu0 0.0
    %2969 = vmatpush.xpose.msra.mxu0 0.0
    %2970 = vmatpush.xpose.msra.mxu0 0.0
    %2971 = vmatpush.xpose.msra.mxu0 0.0
    %2972 = vmatpush.xpose.msra.mxu0 %v2956
    %2973 = vmatpush.xpose.msra.mxu0 %v2953
    %2974 = vmatmul.f32.gmra.mxu0 %v631
    %v2975 = vpop.f32.mrf.mxu0
    %v2976 = vadd.f32 %v2947, %v2975
    %2977 = vmatmul.f32.gmra.mxu0 %v634
    %v2978 = vpop.f32.mrf.mxu0
    %v2979 = vadd.f32 %v2950, %v2978
    %2980 = vdwg.mxu0
    %v2981 = vadd.f32 %v2912, %v2976
    %v2982 = vadd.f32 %v2915, %v2979
    %v2983 = vmul.f32 %v2981, 0.125
    %v2984 = vmul.f32 %v2982, 0.125
    %v2985 = vld [vmem:[%s4 + $0x50] sm:$0xff]
    %v2986 = vld [vmem:[%s4 + $0x58] sm:$0xff]
    %v2987 = vld [vmem:[%s4 + $0x60] sm:$0xff]
    %v2988 = vld [vmem:[%s4 + $0x68] sm:$0xff]
    %v2989 = vld [vmem:[%s4 + $0x70] sm:$0xff]
    %v2990 = vsel %vm1014, %v2774, 0
    %v2992 = vsel %vm1014, %v2775, 0
    %2994 = vmatpush.msra.mxu0 0.0
    %2995 = vmatpush.msra.mxu0 0.0
    %2996 = vmatpush.msra.mxu0 0.0
    %2997 = vmatpush.msra.mxu0 0.0
    %2998 = vmatpush.msra.mxu0 0.0
    %2999 = vmatpush.msra.mxu0 0.0
    %3000 = vmatpush.msra.mxu0 0.0
    %3001 = vmatpush.msra.mxu0 0.0
    %3002 = vmatpush.msra.mxu0 0.0
    %3003 = vmatpush.msra.mxu0 0.0
    %3004 = vmatpush.msra.mxu0 0.0
    %3005 = vmatpush.msra.mxu0 %v2989
    %3006 = vmatpush.msra.mxu0 %v2988
    %3007 = vmatpush.msra.mxu0 %v2987
    %3008 = vmatpush.msra.mxu0 %v2986
    %3009 = vmatpush.msra.mxu0 %v2985
    %3010 = vmatmul.f32.gmra.mxu0 %v2990
    %v3011 = vpop.f32.mrf.mxu0
    %v3012 = vadd.f32 0.0, %v3011
    %3013 = vmatmul.f32.gmra.mxu0 %v2992
    %v3014 = vpop.f32.mrf.mxu0
    %v3015 = vadd.f32 0.0, %v3014
    %3016 = vdwg.mxu0
    %v3017 = vadd.f32 %v2675, %v3012
    %v3018 = vadd.f32 %v2678, %v3015
    %v3019 = vadd.f32 %v3017, %v1409
    %v3020 = vadd.f32 %v3018, %v1409
    %vm3021 = vcmp.gt.f32.partialorder %v3019, 0.0
    %vm3022 = vcmp.gt.f32.partialorder %v3020, 0.0
    %v3023 = vmin.f32 %v3019, 0.0
    %v3024 = vmin.f32 %v3020, 0.0
    %v3025 = vmul.f32 %v3023, 1.442695
    %v3026 = vpow.pop %v3025
    %v3027 = vmul.f32 %v3024, 1.442695
    %v3028 = vpow.pop %v3027
    %v3029 = vsub.f32 %v3026, 1.0
    %v3030 = vsub.f32 %v3028, 1.0
    %v3031 = vsel %vm3021, %v3019, %v3029
    %v3032 = vsel %vm3022, %v3020, %v3030
    %v3034 = vsel %vm1425, %v3031, 0
    %v3037 = vsel %vm1425, %v3032, 0
    %3039 = vmatpush.msra.mxu0 0.0
    %3040 = vmatpush.msra.mxu0 0.0
    %3041 = vmatpush.msra.mxu0 0.0
    %3042 = vmatpush.msra.mxu0 0.0
    %3043 = vmatpush.msra.mxu0 0.0
    %3044 = vmatpush.msra.mxu0 0.0
    %3045 = vmatpush.msra.mxu0 0.0
    %3046 = vmatpush.msra.mxu0 0.0
    %3047 = vmatpush.msra.mxu0 0.0
    %3048 = vmatpush.msra.mxu0 0.0
    %3049 = vmatpush.msra.mxu0 0.0
    %3050 = vmatpush.msra.mxu0 0.0
    %3051 = vmatpush.msra.mxu0 0.0
    %3052 = vmatpush.msra.mxu0 0.0
    %3053 = vmatpush.msra.mxu0 0.0
    %3054 = vmatpush.msra.mxu0 %v338
    %3055 = vmatmul.f32.gmra.mxu0 %v3034
    %v3056 = vpop.f32.mrf.mxu0
    %v3057 = vadd.f32 %v1424, %v3056
    %3058 = vmatmul.f32.gmra.mxu0 %v3037
    %v3059 = vpop.f32.mrf.mxu0
    %v3060 = vadd.f32 %v1424, %v3059
    %3061 = vdwg.mxu0
    %v3062 = vmul.f32 %v3057, %v1993
    %v3063 = vmul.f32 %v3060, %v1996
    %v3064 = vtanh.pop %v3062
    %v3065 = vtanh.pop %v3063
    %s3066 = scalar_lea.vmem %s6, 16
    %3067 = vst.msk [vmem:[%s3066] sm:$0xff] %vm1425, %v3064
    %3068 = vst.msk [vmem:[%s3066 + $0x8] sm:$0xff] %vm1425, %v3065
    %s3069 = sld [smem:[#allocation2]]
    %v3070 = vstv %s3069
    %v3071 = vmul.f32 %v2309, %v3070
    %v3072 = vmul.f32 %v2310, %v3070
    %s3073 = sld [smem:[#allocation2 + $0x6]]
    %v3074 = vstv %s3073
    %v3075 = vmul.f32 %v2619, %v3074
    %v3076 = vmul.f32 %v2620, %v3074
    %v3077 = vadd.f32 %v3071, %v3075
    %v3078 = vadd.f32 %v3072, %v3076
    %s3079 = sld [smem:[#allocation2 + $0xc]]
    %v3080 = vstv %s3079
    %v3081 = vmul.f32 %v2983, %v3080
    %v3082 = vmul.f32 %v2984, %v3080
    %v3083 = vadd.f32 %v3077, %v3081
    %v3084 = vadd.f32 %v3078, %v3082
    %s3085 = sld [smem:[#allocation2 + $0x12]]
    %v3086 = vstv %s3085
    %v3087 = vmul.f32 %v2001, %v3086
    %v3088 = vmul.f32 %v2002, %v3086
    %v3089 = vadd.f32 %v3083, %v3087
    %v3090 = vadd.f32 %v3084, %v3088
    %s3091 = sld [smem:[#allocation2 + $0x18]]
    %v3092 = vstv %s3091
    %v3093 = vmul.f32 %v2317, %v3092
    %v3094 = vmul.f32 %v2318, %v3092
    %v3095 = vadd.f32 %v3089, %v3093
    %v3096 = vadd.f32 %v3090, %v3094
    %s3097 = sld [smem:[#allocation2 + $0x1e]]
    %v3098 = vstv %s3097
    %v3099 = vmul.f32 %v2681, %v3098
    %v3100 = vmul.f32 %v2682, %v3098
    %v3101 = vadd.f32 %v3095, %v3099
    %v3102 = vadd.f32 %v3096, %v3100
    %s3103 = sld [smem:[#allocation2 + $0x24]]
    %v3104 = vstv %s3103
    %v3105 = vadd.f32 %v3101, %v3104
    %v3106 = vadd.f32 %v3102, %v3104
    %vm3107 = vcmp.gt.f32.partialorder %v3105, 0.0
    %vm3108 = vcmp.gt.f32.partialorder %v3106, 0.0
    %v3109 = vmin.f32 %v3105, 0.0
    %v3110 = vmin.f32 %v3106, 0.0
    %v3111 = vmul.f32 %v3109, 1.442695
    %v3112 = vpow.pop %v3111
    %v3113 = vmul.f32 %v3110, 1.442695
    %v3114 = vpow.pop %v3113
    %v3115 = vsub.f32 %v3112, 1.0
    %v3116 = vsub.f32 %v3114, 1.0
    %v3117 = vsel %vm3107, %v3105, %v3115
    %v3118 = vsel %vm3108, %v3106, %v3116
    %s3119 = sld [smem:[#allocation2 + $0x2a]]
    %v3120 = vstv %s3119
    %v3121 = vmul.f32 %v3117, %v3120
    %v3122 = vmul.f32 %v3118, %v3120
    %v3123 = vadd.f32 %v3121, 0.0
    %v3124 = vadd.f32 %v3122, 0.0
    %s3125 = sld [smem:[#allocation2 + $0x2b]]
    %v3126 = vstv %s3125
    %v3127 = vmul.f32 %v3117, %v3126
    %v3128 = vmul.f32 %v3118, %v3126
    %v3129 = vadd.f32 %v3127, 0.0
    %v3130 = vadd.f32 %v3128, 0.0
    %s3131 = sld [smem:[#allocation2 + $0x1]]
    %v3132 = vstv %s3131
    %v3133 = vmul.f32 %v2309, %v3132
    %v3134 = vmul.f32 %v2310, %v3132
    %s3135 = sld [smem:[#allocation2 + $0x7]]
    %v3136 = vstv %s3135
    %v3137 = vmul.f32 %v2619, %v3136
    %v3138 = vmul.f32 %v2620, %v3136
    %v3139 = vadd.f32 %v3133, %v3137
    %v3140 = vadd.f32 %v3134, %v3138
    %s3141 = sld [smem:[#allocation2 + $0xd]]
    %v3142 = vstv %s3141
    %v3143 = vmul.f32 %v2983, %v3142
    %v3144 = vmul.f32 %v2984, %v3142
    %v3145 = vadd.f32 %v3139, %v3143
    %v3146 = vadd.f32 %v3140, %v3144
    %s3147 = sld [smem:[#allocation2 + $0x13]]
    %v3148 = vstv %s3147
    %v3149 = vmul.f32 %v2001, %v3148
    %v3150 = vmul.f32 %v2002, %v3148
    %v3151 = vadd.f32 %v3145, %v3149
    %v3152 = vadd.f32 %v3146, %v3150
    %s3153 = sld [smem:[#allocation2 + $0x19]]
    %v3154 = vstv %s3153
    %v3155 = vmul.f32 %v2317, %v3154
    %v3156 = vmul.f32 %v2318, %v3154
    %v3157 = vadd.f32 %v3151, %v3155
    %v3158 = vadd.f32 %v3152, %v3156
    %s3159 = sld [smem:[#allocation2 + $0x1f]]
    %v3160 = vstv %s3159
    %v3161 = vmul.f32 %v2681, %v3160
    %v3162 = vmul.f32 %v2682, %v3160
    %v3163 = vadd.f32 %v3157, %v3161
    %v3164 = vadd.f32 %v3158, %v3162
    %s3165 = sld [smem:[#allocation2 + $0x25]]
    %v3166 = vstv %s3165
    %v3167 = vadd.f32 %v3163, %v3166
    %v3168 = vadd.f32 %v3164, %v3166
    %vm3169 = vcmp.gt.f32.partialorder %v3167, 0.0
    %vm3170 = vcmp.gt.f32.partialorder %v3168, 0.0
    %v3171 = vmin.f32 %v3167, 0.0
    %v3172 = vmin.f32 %v3168, 0.0
    %v3173 = vmul.f32 %v3171, 1.442695
    %v3174 = vpow.pop %v3173
    %v3175 = vmul.f32 %v3172, 1.442695
    %v3176 = vpow.pop %v3175
    %v3177 = vsub.f32 %v3174, 1.0
    %v3178 = vsub.f32 %v3176, 1.0
    %v3179 = vsel %vm3169, %v3167, %v3177
    %v3180 = vsel %vm3170, %v3168, %v3178
    %s3181 = sld [smem:[#allocation2 + $0x2c]]
    %v3182 = vstv %s3181
    %v3183 = vmul.f32 %v3179, %v3182
    %v3184 = vmul.f32 %v3180, %v3182
    %v3185 = vadd.f32 %v3123, %v3183
    %v3186 = vadd.f32 %v3124, %v3184
    %s3187 = sld [smem:[#allocation2 + $0x2d]]
    %v3188 = vstv %s3187
    %v3189 = vmul.f32 %v3179, %v3188
    %v3190 = vmul.f32 %v3180, %v3188
    %v3191 = vadd.f32 %v3129, %v3189
    %v3192 = vadd.f32 %v3130, %v3190
    %s3193 = sld [smem:[#allocation2 + $0x2]]
    %v3194 = vstv %s3193
    %v3195 = vmul.f32 %v2309, %v3194
    %v3196 = vmul.f32 %v2310, %v3194
    %s3197 = sld [smem:[#allocation2 + $0x8]]
    %v3198 = vstv %s3197
    %v3199 = vmul.f32 %v2619, %v3198
    %v3200 = vmul.f32 %v2620, %v3198
    %v3201 = vadd.f32 %v3195, %v3199
    %v3202 = vadd.f32 %v3196, %v3200
    %s3203 = sld [smem:[#allocation2 + $0xe]]
    %v3204 = vstv %s3203
    %v3205 = vmul.f32 %v2983, %v3204
    %v3206 = vmul.f32 %v2984, %v3204
    %v3207 = vadd.f32 %v3201, %v3205
    %v3208 = vadd.f32 %v3202, %v3206
    %s3209 = sld [smem:[#allocation2 + $0x14]]
    %v3210 = vstv %s3209
    %v3211 = vmul.f32 %v2001, %v3210
    %v3212 = vmul.f32 %v2002, %v3210
    %v3213 = vadd.f32 %v3207, %v3211
    %v3214 = vadd.f32 %v3208, %v3212
    %s3215 = sld [smem:[#allocation2 + $0x1a]]
    %v3216 = vstv %s3215
    %v3217 = vmul.f32 %v2317, %v3216
    %v3218 = vmul.f32 %v2318, %v3216
    %v3219 = vadd.f32 %v3213, %v3217
    %v3220 = vadd.f32 %v3214, %v3218
    %s3221 = sld [smem:[#allocation2 + $0x20]]
    %v3222 = vstv %s3221
    %v3223 = vmul.f32 %v2681, %v3222
    %v3224 = vmul.f32 %v2682, %v3222
    %v3225 = vadd.f32 %v3219, %v3223
    %v3226 = vadd.f32 %v3220, %v3224
    %s3227 = sld [smem:[#allocation2 + $0x26]]
    %v3228 = vstv %s3227
    %v3229 = vadd.f32 %v3225, %v3228
    %v3230 = vadd.f32 %v3226, %v3228
    %vm3231 = vcmp.gt.f32.partialorder %v3229, 0.0
    %vm3232 = vcmp.gt.f32.partialorder %v3230, 0.0
    %v3233 = vmin.f32 %v3229, 0.0
    %v3234 = vmin.f32 %v3230, 0.0
    %v3235 = vmul.f32 %v3233, 1.442695
    %v3236 = vpow.pop %v3235
    %v3237 = vmul.f32 %v3234, 1.442695
    %v3238 = vpow.pop %v3237
    %v3239 = vsub.f32 %v3236, 1.0
    %v3240 = vsub.f32 %v3238, 1.0
    %v3241 = vsel %vm3231, %v3229, %v3239
    %v3242 = vsel %vm3232, %v3230, %v3240
    %s3243 = sld [smem:[#allocation2 + $0x2e]]
    %v3244 = vstv %s3243
    %v3245 = vmul.f32 %v3241, %v3244
    %v3246 = vmul.f32 %v3242, %v3244
    %v3247 = vadd.f32 %v3185, %v3245
    %v3248 = vadd.f32 %v3186, %v3246
    %s3249 = sld [smem:[#allocation2 + $0x2f]]
    %v3250 = vstv %s3249
    %v3251 = vmul.f32 %v3241, %v3250
    %v3252 = vmul.f32 %v3242, %v3250
    %v3253 = vadd.f32 %v3191, %v3251
    %v3254 = vadd.f32 %v3192, %v3252
    %s3255 = sld [smem:[#allocation2 + $0x3]]
    %v3256 = vstv %s3255
    %v3257 = vmul.f32 %v2309, %v3256
    %v3258 = vmul.f32 %v2310, %v3256
    %s3259 = sld [smem:[#allocation2 + $0x9]]
    %v3260 = vstv %s3259
    %v3261 = vmul.f32 %v2619, %v3260
    %v3262 = vmul.f32 %v2620, %v3260
    %v3263 = vadd.f32 %v3257, %v3261
    %v3264 = vadd.f32 %v3258, %v3262
    %s3265 = sld [smem:[#allocation2 + $0xf]]
    %v3266 = vstv %s3265
    %v3267 = vmul.f32 %v2983, %v3266
    %v3268 = vmul.f32 %v2984, %v3266
    %v3269 = vadd.f32 %v3263, %v3267
    %v3270 = vadd.f32 %v3264, %v3268
    %s3271 = sld [smem:[#allocation2 + $0x15]]
    %v3272 = vstv %s3271
    %v3273 = vmul.f32 %v2001, %v3272
    %v3274 = vmul.f32 %v2002, %v3272
    %v3275 = vadd.f32 %v3269, %v3273
    %v3276 = vadd.f32 %v3270, %v3274
    %s3277 = sld [smem:[#allocation2 + $0x1b]]
    %v3278 = vstv %s3277
    %v3279 = vmul.f32 %v2317, %v3278
    %v3280 = vmul.f32 %v2318, %v3278
    %v3281 = vadd.f32 %v3275, %v3279
    %v3282 = vadd.f32 %v3276, %v3280
    %s3283 = sld [smem:[#allocation2 + $0x21]]
    %v3284 = vstv %s3283
    %v3285 = vmul.f32 %v2681, %v3284
    %v3286 = vmul.f32 %v2682, %v3284
    %v3287 = vadd.f32 %v3281, %v3285
    %v3288 = vadd.f32 %v3282, %v3286
    %s3289 = sld [smem:[#allocation2 + $0x27]]
    %v3290 = vstv %s3289
    %v3291 = vadd.f32 %v3287, %v3290
    %v3292 = vadd.f32 %v3288, %v3290
    %vm3293 = vcmp.gt.f32.partialorder %v3291, 0.0
    %vm3294 = vcmp.gt.f32.partialorder %v3292, 0.0
    %v3295 = vmin.f32 %v3291, 0.0
    %v3296 = vmin.f32 %v3292, 0.0
    %v3297 = vmul.f32 %v3295, 1.442695
    %v3298 = vpow.pop %v3297
    %v3299 = vmul.f32 %v3296, 1.442695
    %v3300 = vpow.pop %v3299
    %v3301 = vsub.f32 %v3298, 1.0
    %v3302 = vsub.f32 %v3300, 1.0
    %v3303 = vsel %vm3293, %v3291, %v3301
    %v3304 = vsel %vm3294, %v3292, %v3302
    %s3305 = sld [smem:[#allocation2 + $0x30]]
    %v3306 = vstv %s3305
    %v3307 = vmul.f32 %v3303, %v3306
    %v3308 = vmul.f32 %v3304, %v3306
    %v3309 = vadd.f32 %v3247, %v3307
    %v3310 = vadd.f32 %v3248, %v3308
    %s3311 = sld [smem:[#allocation2 + $0x31]]
    %v3312 = vstv %s3311
    %v3313 = vmul.f32 %v3303, %v3312
    %v3314 = vmul.f32 %v3304, %v3312
    %v3315 = vadd.f32 %v3253, %v3313
    %v3316 = vadd.f32 %v3254, %v3314
    %s3317 = sld [smem:[#allocation2 + $0x4]]
    %v3318 = vstv %s3317
    %v3319 = vmul.f32 %v2309, %v3318
    %v3320 = vmul.f32 %v2310, %v3318
    %s3321 = sld [smem:[#allocation2 + $0xa]]
    %v3322 = vstv %s3321
    %v3323 = vmul.f32 %v2619, %v3322
    %v3324 = vmul.f32 %v2620, %v3322
    %v3325 = vadd.f32 %v3319, %v3323
    %v3326 = vadd.f32 %v3320, %v3324
    %s3327 = sld [smem:[#allocation2 + $0x10]]
    %v3328 = vstv %s3327
    %v3329 = vmul.f32 %v2983, %v3328
    %v3330 = vmul.f32 %v2984, %v3328
    %v3331 = vadd.f32 %v3325, %v3329
    %v3332 = vadd.f32 %v3326, %v3330
    %s3333 = sld [smem:[#allocation2 + $0x16]]
    %v3334 = vstv %s3333
    %v3335 = vmul.f32 %v2001, %v3334
    %v3336 = vmul.f32 %v2002, %v3334
    %v3337 = vadd.f32 %v3331, %v3335
    %v3338 = vadd.f32 %v3332, %v3336
    %s3339 = sld [smem:[#allocation2 + $0x1c]]
    %v3340 = vstv %s3339
    %v3341 = vmul.f32 %v2317, %v3340
    %v3342 = vmul.f32 %v2318, %v3340
    %v3343 = vadd.f32 %v3337, %v3341
    %v3344 = vadd.f32 %v3338, %v3342
    %s3345 = sld [smem:[#allocation2 + $0x22]]
    %v3346 = vstv %s3345
    %v3347 = vmul.f32 %v2681, %v3346
    %v3348 = vmul.f32 %v2682, %v3346
    %v3349 = vadd.f32 %v3343, %v3347
    %v3350 = vadd.f32 %v3344, %v3348
    %s3351 = sld [smem:[#allocation2 + $0x28]]
    %v3352 = vstv %s3351
    %v3353 = vadd.f32 %v3349, %v3352
    %v3354 = vadd.f32 %v3350, %v3352
    %vm3355 = vcmp.gt.f32.partialorder %v3353, 0.0
    %vm3356 = vcmp.gt.f32.partialorder %v3354, 0.0
    %v3357 = vmin.f32 %v3353, 0.0
    %v3358 = vmin.f32 %v3354, 0.0
    %v3359 = vmul.f32 %v3357, 1.442695
    %v3360 = vpow.pop %v3359
    %v3361 = vmul.f32 %v3358, 1.442695
    %v3362 = vpow.pop %v3361
    %v3363 = vsub.f32 %v3360, 1.0
    %v3364 = vsub.f32 %v3362, 1.0
    %v3365 = vsel %vm3355, %v3353, %v3363
    %v3366 = vsel %vm3356, %v3354, %v3364
    %s3367 = sld [smem:[#allocation2 + $0x32]]
    %v3368 = vstv %s3367
    %v3369 = vmul.f32 %v3365, %v3368
    %v3370 = vmul.f32 %v3366, %v3368
    %v3371 = vadd.f32 %v3309, %v3369
    %v3372 = vadd.f32 %v3310, %v3370
    %s3373 = sld [smem:[#allocation2 + $0x33]]
    %v3374 = vstv %s3373
    %v3375 = vmul.f32 %v3365, %v3374
    %v3376 = vmul.f32 %v3366, %v3374
    %v3377 = vadd.f32 %v3315, %v3375
    %v3378 = vadd.f32 %v3316, %v3376
    %s3379 = sld [smem:[#allocation2 + $0x5]]
    %v3380 = vstv %s3379
    %v3381 = vmul.f32 %v2309, %v3380
    %v3382 = vmul.f32 %v2310, %v3380
    %s3383 = sld [smem:[#allocation2 + $0xb]]
    %v3384 = vstv %s3383
    %v3385 = vmul.f32 %v2619, %v3384
    %v3386 = vmul.f32 %v2620, %v3384
    %v3387 = vadd.f32 %v3381, %v3385
    %v3388 = vadd.f32 %v3382, %v3386
    %s3389 = sld [smem:[#allocation2 + $0x11]]
    %v3390 = vstv %s3389
    %v3391 = vmul.f32 %v2983, %v3390
    %v3392 = vmul.f32 %v2984, %v3390
    %v3393 = vadd.f32 %v3387, %v3391
    %v3394 = vadd.f32 %v3388, %v3392
    %s3395 = sld [smem:[#allocation2 + $0x17]]
    %v3396 = vstv %s3395
    %v3397 = vmul.f32 %v2001, %v3396
    %v3398 = vmul.f32 %v2002, %v3396
    %v3399 = vadd.f32 %v3393, %v3397
    %v3400 = vadd.f32 %v3394, %v3398
    %s3401 = sld [smem:[#allocation2 + $0x1d]]
    %v3402 = vstv %s3401
    %v3403 = vmul.f32 %v2317, %v3402
    %v3404 = vmul.f32 %v2318, %v3402
    %v3405 = vadd.f32 %v3399, %v3403
    %v3406 = vadd.f32 %v3400, %v3404
    %s3407 = sld [smem:[#allocation2 + $0x23]]
    %v3408 = vstv %s3407
    %v3409 = vmul.f32 %v2681, %v3408
    %v3410 = vmul.f32 %v2682, %v3408
    %v3411 = vadd.f32 %v3405, %v3409
    %v3412 = vadd.f32 %v3406, %v3410
    %s3413 = sld [smem:[#allocation2 + $0x29]]
    %v3414 = vstv %s3413
    %v3415 = vadd.f32 %v3411, %v3414
    %v3416 = vadd.f32 %v3412, %v3414
    %vm3417 = vcmp.gt.f32.partialorder %v3415, 0.0
    %vm3418 = vcmp.gt.f32.partialorder %v3416, 0.0
    %v3419 = vmin.f32 %v3415, 0.0
    %v3420 = vmin.f32 %v3416, 0.0
    %v3421 = vmul.f32 %v3419, 1.442695
    %v3422 = vpow.pop %v3421
    %v3423 = vmul.f32 %v3420, 1.442695
    %v3424 = vpow.pop %v3423
    %v3425 = vsub.f32 %v3422, 1.0
    %v3426 = vsub.f32 %v3424, 1.0
    %v3427 = vsel %vm3417, %v3415, %v3425
    %v3428 = vsel %vm3418, %v3416, %v3426
    %s3429 = sld [smem:[#allocation2 + $0x34]]
    %v3430 = vstv %s3429
    %v3431 = vmul.f32 %v3427, %v3430
    %v3432 = vmul.f32 %v3428, %v3430
    %v3433 = vadd.f32 %v3371, %v3431
    %v3434 = vadd.f32 %v3372, %v3432
    %s3435 = sld [smem:[#allocation2 + $0x35]]
    %v3436 = vstv %s3435
    %v3437 = vmul.f32 %v3427, %v3436
    %v3438 = vmul.f32 %v3428, %v3436
    %v3439 = vadd.f32 %v3377, %v3437
    %v3440 = vadd.f32 %v3378, %v3438
    %v3441 = vmul.f32 %v1993, %v1987
    %v3442 = vmul.f32 %v1996, %v1987
    %s3443 = sld [smem:[#allocation2 + $0x36]]
    %v3444 = vstv %s3443
    %v3445 = vadd.f32 %v3433, %v3444
    %v3446 = vadd.f32 %v3434, %v3444
    %v3447 = vpack.c.bf16 %v3445, %v3445
    %v3448 = vpack.c.bf16 %v3446, %v3446
    %v3449 = vunpack.c.l.bf16 %v3447
    %v3450 = vunpack.c.l.bf16 %v3448
    %v3451 = vsub.f32 %v3445, %v3449
    %v3452 = vsub.f32 %v3446, %v3450
    %v3454 = vsel %vm346, %v3451, 0
    %v3457 = vsel %vm346, %v3452, 0
    %3459 = vmatpush.xpose.msra.mxu0 0.0
    %3460 = vmatpush.xpose.msra.mxu0 0.0
    %3461 = vmatpush.xpose.msra.mxu0 0.0
    %3462 = vmatpush.xpose.msra.mxu0 0.0
    %3463 = vmatpush.xpose.msra.mxu0 0.0
    %3464 = vmatpush.xpose.msra.mxu0 0.0
    %3465 = vmatpush.xpose.msra.mxu0 0.0
    %3466 = vmatpush.xpose.msra.mxu0 0.0
    %3467 = vmatpush.xpose.msra.mxu0 0.0
    %3468 = vmatpush.xpose.msra.mxu0 0.0
    %3469 = vmatpush.xpose.msra.mxu0 0.0
    %3470 = vmatpush.xpose.msra.mxu0 0.0
    %3471 = vmatpush.xpose.msra.mxu0 0.0
    %3472 = vmatpush.xpose.msra.mxu0 0.0
    %3473 = vmatpush.xpose.msra.mxu0 %v3457
    %3474 = vmatpush.xpose.msra.mxu0 %v3454
    %3475 = vmatmul.f32.gmra.mxu0 %v631
    %v3476 = vpop.f32.mrf.mxu0
    %v3477 = vadd.f32 0.0, %v3476
    %3478 = vmatmul.f32.gmra.mxu0 %v634
    %v3479 = vpop.f32.mrf.mxu0
    %v3480 = vadd.f32 0.0, %v3479
    %3481 = vdwg.mxu0
    %v3483 = vsel %vm346, %v3449, 0
    %v3486 = vsel %vm346, %v3450, 0
    %3488 = vmatpush.xpose.msra.mxu0 0.0
    %3489 = vmatpush.xpose.msra.mxu0 0.0
    %3490 = vmatpush.xpose.msra.mxu0 0.0
    %3491 = vmatpush.xpose.msra.mxu0 0.0
    %3492 = vmatpush.xpose.msra.mxu0 0.0
    %3493 = vmatpush.xpose.msra.mxu0 0.0
    %3494 = vmatpush.xpose.msra.mxu0 0.0
    %3495 = vmatpush.xpose.msra.mxu0 0.0
    %3496 = vmatpush.xpose.msra.mxu0 0.0
    %3497 = vmatpush.xpose.msra.mxu0 0.0
    %3498 = vmatpush.xpose.msra.mxu0 0.0
    %3499 = vmatpush.xpose.msra.mxu0 0.0
    %3500 = vmatpush.xpose.msra.mxu0 0.0
    %3501 = vmatpush.xpose.msra.mxu0 0.0
    %3502 = vmatpush.xpose.msra.mxu0 %v3486
    %3503 = vmatpush.xpose.msra.mxu0 %v3483
    %3504 = vmatmul.f32.gmra.mxu0 %v631
    %v3505 = vpop.f32.mrf.mxu0
    %v3506 = vadd.f32 %v3477, %v3505
    %3507 = vmatmul.f32.gmra.mxu0 %v634
    %v3508 = vpop.f32.mrf.mxu0
    %v3509 = vadd.f32 %v3480, %v3508
    %3510 = vdwg.mxu0
    %v3511 = vadd.f32 %v3445, %v3506
    %v3512 = vadd.f32 %v3446, %v3509
    %v3513 = vmul.f32 %v3511, %v3441
    %v3514 = vmul.f32 %v3512, %v3442
    %s3515 = scalar_lea.vmem [#allocation5], 32
    %3516 = vst.msk [vmem:[%s3515] sm:$0xff] %vm346, %v3513
    %3517 = vst.msk [vmem:[%s3515 + $0x8] sm:$0xff] %vm346, %v3514
    %s3518 = sld [smem:[#allocation2 + $0x37]]
    %v3519 = vstv %s3518
    %v3520 = vadd.f32 %v3439, %v3519
    %v3521 = vadd.f32 %v3440, %v3519
    %v3522 = vpack.c.bf16 %v3520, %v3520
    %v3523 = vpack.c.bf16 %v3521, %v3521
    %v3524 = vunpack.c.l.bf16 %v3522
    %v3525 = vunpack.c.l.bf16 %v3523
    %v3526 = vsub.f32 %v3520, %v3524
    %v3527 = vsub.f32 %v3521, %v3525
    %v3529 = vsel %vm346, %v3526, 0
    %v3532 = vsel %vm346, %v3527, 0
    %3534 = vmatpush.xpose.msra.mxu0 0.0
    %3535 = vmatpush.xpose.msra.mxu0 0.0
    %3536 = vmatpush.xpose.msra.mxu0 0.0
    %3537 = vmatpush.xpose.msra.mxu0 0.0
    %3538 = vmatpush.xpose.msra.mxu0 0.0
    %3539 = vmatpush.xpose.msra.mxu0 0.0
    %3540 = vmatpush.xpose.msra.mxu0 0.0
    %3541 = vmatpush.xpose.msra.mxu0 0.0
    %3542 = vmatpush.xpose.msra.mxu0 0.0
    %3543 = vmatpush.xpose.msra.mxu0 0.0
    %3544 = vmatpush.xpose.msra.mxu0 0.0
    %3545 = vmatpush.xpose.msra.mxu0 0.0
    %3546 = vmatpush.xpose.msra.mxu0 0.0
    %3547 = vmatpush.xpose.msra.mxu0 0.0
    %3548 = vmatpush.xpose.msra.mxu0 %v3532
    %3549 = vmatpush.xpose.msra.mxu0 %v3529
    %3550 = vmatmul.f32.gmra.mxu0 %v631
    %v3551 = vpop.f32.mrf.mxu0
    %v3552 = vadd.f32 0.0, %v3551
    %3553 = vmatmul.f32.gmra.mxu0 %v634
    %v3554 = vpop.f32.mrf.mxu0
    %v3555 = vadd.f32 0.0, %v3554
    %3556 = vdwg.mxu0
    %v3558 = vsel %vm346, %v3524, 0
    %v3561 = vsel %vm346, %v3525, 0
    %3563 = vmatpush.xpose.msra.mxu0 0.0
    %3564 = vmatpush.xpose.msra.mxu0 0.0
    %3565 = vmatpush.xpose.msra.mxu0 0.0
    %3566 = vmatpush.xpose.msra.mxu0 0.0
    %3567 = vmatpush.xpose.msra.mxu0 0.0
    %3568 = vmatpush.xpose.msra.mxu0 0.0
    %3569 = vmatpush.xpose.msra.mxu0 0.0
    %3570 = vmatpush.xpose.msra.mxu0 0.0
    %3571 = vmatpush.xpose.msra.mxu0 0.0
    %3572 = vmatpush.xpose.msra.mxu0 0.0
    %3573 = vmatpush.xpose.msra.mxu0 0.0
    %3574 = vmatpush.xpose.msra.mxu0 0.0
    %3575 = vmatpush.xpose.msra.mxu0 0.0
    %3576 = vmatpush.xpose.msra.mxu0 0.0
    %3577 = vmatpush.xpose.msra.mxu0 %v3561
    %3578 = vmatpush.xpose.msra.mxu0 %v3558
    %3579 = vmatmul.f32.gmra.mxu0 %v631
    %v3580 = vpop.f32.mrf.mxu0
    %v3581 = vadd.f32 %v3552, %v3580
    %3582 = vmatmul.f32.gmra.mxu0 %v634
    %v3583 = vpop.f32.mrf.mxu0
    %v3584 = vadd.f32 %v3555, %v3583
    %3585 = vdwg.mxu0
    %v3586 = vadd.f32 %v3520, %v3581
    %v3587 = vadd.f32 %v3521, %v3584
    %v3588 = vmul.f32 %v3586, %v3441
    %v3589 = vmul.f32 %v3587, %v3442
    %s3590 = scalar_lea.vmem [#allocation5], 48
    %3591 = vst.msk [vmem:[%s3590] sm:$0xff] %vm346, %v3588
    %3592 = vst.msk [vmem:[%s3590 + $0x8] sm:$0xff] %vm346, %v3589
    // Predicated region
    $region30: #{tpu_custom_call.1} parent=1 // pred_check
      _
    $region31: #{tpu_custom_call.1} parent=1 // pred_check_branch
      %3594 = sbr.rel (0) target = $region33
    $region32: #{tpu_custom_call.1} parent=1 // pred_region
      _
    $region33: #{tpu_custom_call.1} parent=1 // pred_fallthru
      _
    // Predicated region
    $region34: #{tpu_custom_call.1} parent=1 // pred_check
      _
    $region35: #{tpu_custom_call.1} parent=1 // pred_check_branch
      %3596 = sbr.rel (0) target = $region37
    $region36: #{tpu_custom_call.1} parent=1 // pred_region
      %3598 = vsyncadd [#allocation3], 0
      %s3599 = sshll.u32 [#allocation5], 4
      %s3600 = int_to_ptr.vmem [resolvable:$true] %s3599
      %s3601 = sshll.u32 %s7, 4
      %s3602 = int_to_ptr.hbm [resolvable:$true] %s3601
      %3607 = dma.vmem_to_hbm [thread:$0]  %s3600, 1024, %s3602, [#allocation3], 128, 128, 8
    $region37: #{tpu_custom_call.1} parent=1 // pred_fallthru
      _
    // Predicated region
    $region38: #{tpu_custom_call.1} parent=1 // pred_check
      _
    $region39: #{tpu_custom_call.1} parent=1 // pred_check_branch
      %3609 = sbr.rel (0) target = $region41
    $region40: #{tpu_custom_call.1} parent=1 // pred_region
      _
    $region41: #{tpu_custom_call.1} parent=1 // pred_fallthru
      _
    // Predicated region
    $region42: #{tpu_custom_call.1} parent=1 // pred_check
      _
    $region43: #{tpu_custom_call.1} parent=1 // pred_check_branch
      %3611 = sbr.rel (0) target = $region45
    $region44: #{tpu_custom_call.1} parent=1 // pred_region
      %3613 = dma.done [#allocation3], 1024
    $region45: #{tpu_custom_call.1} parent=1 // pred_fallthru
      _
    %3614 = vsyncpa [#allocation3], 1
    %3615 = vsyncpa [#allocation4], 1

</llo_original>
